<compile_context>
chip_gen: v7x
topology: tpu7x:2x2x1
jax: 0.10.0
libtpu: 0.0.40
codegen_flags: <defaults>
</compile_context>

<pallas_src>
import functools

import jax
import jax.numpy as jnp
from jax.experimental import pallas as pl
from jax.experimental.pallas import tpu as pltpu


def _round_up(n, m):
    return ((n + m - 1) // m) * m


# ----------------------------------------------------------------------------
# Fused kernel: Bblk batch elements end-to-end, activations as [Bblk, L, C].
# ----------------------------------------------------------------------------
def _fcn_fused_kernel(ks, pads, cdt,
                      x_ref, w1_ref, b1_ref, w2_ref, b2_ref, w3_ref, b3_ref,
                      wp_ref, bp_ref, wc_ref, bc_ref,
                      feat_ref, out_ref):
    # x_ref   : [Bblk, L, Cin]            (compute dtype)
    # wN_ref  : [Kn, Cin_n, Cout_n]       (tap layout, BN folded, lane-padded)
    # bN_ref  : [1, Cout_n]  f32
    # wp_ref  : [C3p, Hp]   bp_ref: [1, Hp]   (projector, BN folded)
    # wc_ref  : [Hp, Op]    bc_ref: [1, Op]   (classifier, lane-padded)
    # feat_ref: [Bblk, Hp]  out_ref: [Bblk, Op]   f32

    def conv_bn_relu(x, w_ref, b_ref, K, pad):
        # x: [Bblk, Lin, Cin]; returns [Bblk, Lout, Cout] in compute dtype.
        Bblk, Lin, Cin = x.shape
        Cout = w_ref.shape[-1]
        Lout = Lin + 2 * pad - K + 1
        if pad > 0:
            z = jnp.zeros((Bblk, pad, Cin), x.dtype)   # one zeros value/layer
            xp = jnp.concatenate([z, x, z], axis=1)    # zero "same" padding
        else:
            xp = x
        # Tap-sum conv: K shifted-view matmuls accumulated in f32 (no im2col
        # scratch, no masked stores).  M = Bblk*Lout keeps the MXU filled.
        acc = jnp.zeros((Bblk * Lout, Cout), jnp.float32)
        for k in range(K):  # static, small K -> unrolled
            win = xp[:, k:k + Lout, :].reshape(Bblk * Lout, Cin)
            acc = acc + jnp.dot(win, w_ref[k],
                                preferred_element_type=jnp.float32)
        h = jnp.maximum(acc + b_ref[...], 0.0)         # folded BN shift + ReLU
        return h.reshape(Bblk, Lout, Cout).astype(cdt)

    h = conv_bn_relu(x_ref[...], w1_ref, b1_ref, ks[0], pads[0])
    h = conv_bn_relu(h, w2_ref, b2_ref, ks[1], pads[1])
    h = conv_bn_relu(h, w3_ref, b3_ref, ks[2], pads[2])

    # AdaptiveMaxPool1d(1): max over length -> [Bblk, C3p]
    pooled = jnp.max(h, axis=1)

    # Projector: Linear + (folded) BN + ReLU (dropout = identity in eval).
    z = jnp.dot(pooled, wp_ref[...], preferred_element_type=jnp.float32)
    z = jnp.maximum(z + bp_ref[...], 0.0)
    feat_ref[...] = z

    # Classifier: Linear(H -> 1), lane-padded output slab.
    out_ref[...] = (
        jnp.dot(z.astype(cdt), wc_ref[...],
                preferred_element_type=jnp.float32) + bc_ref[...]
    )


def fcn_fused(x_blc, w1, b1, w2, b2, w3, b3, wp, bp, wc, bc, *, ks, pads, bblk):
    """x_blc: [Bpad, L, Cin] (compute dtype), Bpad % bblk == 0.

    Returns (features [Bpad, Hp] f32, logits [Bpad, Op] f32).
    """
    Bpad, L, Cin = x_blc.shape
    Hp = wp.shape[1]
    Op = wc.shape[1]
    assert Bpad % bblk == 0

    def full(a):  # whole array resident in VMEM (same block every step)
        nd = a.ndim
        return pl.BlockSpec(a.shape, lambda i: (0,) * nd)

    kernel = functools.partial(_fcn_fused_kernel, ks, pads, x_blc.dtype)

    feats, logits = pl.pallas_call(
        kernel,
        out_shape=(
            jax.ShapeDtypeStruct((Bpad, Hp), jnp.float32),
            jax.ShapeDtypeStruct((Bpad, Op), jnp.float32),
        ),
        grid=(Bpad // bblk,),
        in_specs=[
            pl.BlockSpec((bblk, L, Cin), lambda i: (i, 0, 0)),
            full(w1), full(b1), full(w2), full(b2), full(w3), full(b3),
            full(wp), full(bp), full(wc), full(bc),
        ],
        out_specs=(
            pl.BlockSpec((bblk, Hp), lambda i: (i, 0)),
            pl.BlockSpec((bblk, Op), lambda i: (i, 0)),
        ),
        compiler_params=pltpu.CompilerParams(
            dimension_semantics=("parallel",)),
    )(x_blc, w1, b1, w2, b2, w3, b3, wp, bp, wc, bc)
    return feats, logits


# ----------------------------------------------------------------------------
# Parameter construction + BN folding + tap/lane-padded weight layout (JAX glue)
# ----------------------------------------------------------------------------
def _fold_bn(w, b, gamma, beta, mean, var, eps=1e-5):
    scale = gamma / jnp.sqrt(var + eps)
    shift = beta - mean * scale
    if w.ndim == 3:  # conv weight [Cout, Cin, K]
        w_f = w * scale[:, None, None]
    else:            # linear weight [Cout, Cin]
        w_f = w * scale[:, None]
    return w_f, b * scale + shift


def init_params(key, channels, chan_1, chan_2, chan_3, ks1, ks2, ks3):
    ks = jax.random.split(key, 16)

    def conv_p(k, cout, cin, kk):
        kw, kb, kg, kbe, km, kv = jax.random.split(k, 6)
        return dict(
            w=0.1 * jax.random.normal(kw, (cout, cin, kk), jnp.float32),
            b=0.05 * jax.random.normal(kb, (cout,), jnp.float32),
            gamma=1.0 + 0.1 * jax.random.normal(kg, (cout,), jnp.float32),
            beta=0.05 * jax.random.normal(kbe, (cout,), jnp.float32),
            mean=0.05 * jax.random.normal(km, (cout,), jnp.float32),
            var=1.0 + 0.1 * jax.random.uniform(kv, (cout,), jnp.float32),
        )

    def lin_p(k, cout, cin, with_bn):
        kw, kb, kg, kbe, km, kv = jax.random.split(k, 6)
        p = dict(
            w=0.1 * jax.random.normal(kw, (cout, cin), jnp.float32),
            b=0.05 * jax.random.normal(kb, (cout,), jnp.float32),
        )
        if with_bn:
            p.update(
                gamma=1.0 + 0.1 * jax.random.normal(kg, (cout,), jnp.float32),
                beta=0.05 * jax.random.normal(kbe, (cout,), jnp.float32),
                mean=0.05 * jax.random.normal(km, (cout,), jnp.float32),
                var=1.0 + 0.1 * jax.random.uniform(kv, (cout,), jnp.float32),
            )
        return p

    return dict(
        conv1=conv_p(ks[0], chan_1, channels, ks1),
        conv2=conv_p(ks[1], chan_2, chan_1, ks2),
        conv3=conv_p(ks[2], chan_3, chan_2, ks3),
        proj=lin_p(ks[3], 64, chan_3, True),
        cls=lin_p(ks[4], 1, 64, False),
    )


def fcn_forward(params, signal, ks1, ks2, ks3, random_s=None,
                compute_dtype=jnp.bfloat16, bblk=8):
    """signal: [B, channels, L] (NCW, matching PyTorch Conv1d input).

    compute_dtype: matmul operand dtype (bf16 recommended on v6e/v7x;
    jnp.float32 gives exact parity).  bblk: batch elements per grid step
    (pick so the grid length is >= 2 at real batch sizes for megacore).
    """
    ks = (ks1, ks2, ks3)
    pads = tuple((k - 1) // 2 for k in ks)  # matches the PyTorch module

    cin0 = params["conv1"]["w"].shape[1]
    chan_1 = params["conv1"]["w"].shape[0]
    chan_2 = params["conv2"]["w"].shape[0]
    chan_3 = params["conv3"]["w"].shape[0]
    H = params["proj"]["w"].shape[0]
    C1p, C2p, C3p = (_round_up(c, 128) for c in (chan_1, chan_2, chan_3))
    Hp = _round_up(H, 128)
    Op = 128  # single logit, lane-padded output slab

    def prep_conv(p, cin_p, cout_p):
        w, b = _fold_bn(p["w"], p["b"], p["gamma"], p["beta"], p["mean"], p["var"])
        w = jnp.transpose(w, (2, 1, 0))                 # [K, Cin, Cout] tap layout
        K, cin, cout = w.shape
        w = jnp.pad(w, ((0, 0), (0, cin_p - cin), (0, cout_p - cout)))
        b = jnp.pad(b, (0, cout_p - cout)).reshape(1, cout_p)
        return w.astype(compute_dtype), b.astype(jnp.float32)

    w1, b1 = prep_conv(params["conv1"], cin0, C1p)
    w2, b2 = prep_conv(params["conv2"], C1p, C2p)
    w3, b3 = prep_conv(params["conv3"], C2p, C3p)

    pp = params["proj"]
    wp, bp = _fold_bn(pp["w"], pp["b"], pp["gamma"], pp["beta"], pp["mean"], pp["var"])
    wp = jnp.pad(wp.T, ((0, C3p - chan_3), (0, Hp - H))).astype(compute_dtype)
    bp = jnp.pad(bp, (0, Hp - H)).reshape(1, Hp).astype(jnp.float32)

    wc = jnp.pad(params["cls"]["w"].T, ((0, Hp - H), (0, Op - 1))).astype(compute_dtype)
    bc = jnp.pad(params["cls"]["b"], (0, Op - 1)).reshape(1, Op).astype(jnp.float32)

    # Batch both branches into one fused kernel launch; pad batch to a
    # multiple of the per-step block so every block is full.
    x_all = signal if random_s is None else jnp.concatenate([signal, random_s], 0)
    x_blc = jnp.transpose(x_all, (0, 2, 1)).astype(compute_dtype)  # NCW -> [B, L, C]
    Btot = x_blc.shape[0]
    Bpad = _round_up(Btot, bblk)
    if Bpad != Btot:
        x_blc = jnp.pad(x_blc, ((0, Bpad - Btot), (0, 0), (0, 0)))

    feats, logits = fcn_fused(x_blc, w1, b1, w2, b2, w3, b3, wp, bp, wc, bc,
                              ks=ks, pads=pads, bblk=bblk)
    feats = feats[:Btot, :H]
    logits = logits[:Btot, :1]

    B = signal.shape[0]
    if random_s is not None:
        return logits[:B], feats[:B], feats[B:]
    return logits


if __name__ == "__main__":
    # Small shapes consistent with the module: batch=2, channels=4, seq=16.
    B, channels, L = 2, 4, 16
    chan_1, chan_2, chan_3 = 8, 16, 32
    ks1, ks2, ks3 = 7, 5, 3

    key = jax.random.PRNGKey(0)
    kp, kx, kr = jax.random.split(key, 3)
    params = init_params(kp, channels, chan_1, chan_2, chan_3, ks1, ks2, ks3)
    signal = jax.random.normal(kx, (B, channels, L), jnp.float32)
    random_s = jax.random.normal(kr, (B, channels, L), jnp.float32)

    fwd = jax.jit(functools.partial(fcn_forward, ks1=ks1, ks2=ks2, ks3=ks3))

    # forward(signal) -> classifier output [B, 1]
    out = jax.block_until_ready(fwd(params, signal))
    assert out.shape == (B, 1), out.shape

    # forward(signal, random_s) -> (logits, s_f, r_f)
    logits, s_f, r_f = jax.block_until_ready(fwd(params, signal, random_s=random_s))
    assert logits.shape == (B, 1) and s_f.shape == (B, 64) and r_f.shape == (B, 64)

    print("KERNEL_OK")
</pallas_src>

<mosaic_0001>
module attributes {stable_mosaic.version = 11 : i64} {
  func.func @_fcn_fused_kernel(%arg0: i32, %arg1: memref<8x16x4xbf16, #tpu.memory_space<vmem>>, %arg2: memref<7x4x128xbf16, #tpu.memory_space<vmem>>, %arg3: memref<1x128xf32, #tpu.memory_space<vmem>>, %arg4: memref<5x128x128xbf16, #tpu.memory_space<vmem>>, %arg5: memref<1x128xf32, #tpu.memory_space<vmem>>, %arg6: memref<3x128x128xbf16, #tpu.memory_space<vmem>>, %arg7: memref<1x128xf32, #tpu.memory_space<vmem>>, %arg8: memref<128x128xbf16, #tpu.memory_space<vmem>>, %arg9: memref<1x128xf32, #tpu.memory_space<vmem>>, %arg10: memref<128x128xbf16, #tpu.memory_space<vmem>>, %arg11: memref<1x128xf32, #tpu.memory_space<vmem>>, %arg12: memref<8x128xf32, #tpu.memory_space<vmem>>, %arg13: memref<8x128xf32, #tpu.memory_space<vmem>>) attributes {dimension_semantics = [#tpu.dimension_semantics<parallel>], iteration_bounds = array<i64: 1>, scalar_prefetch = 0 : i64, scratch_operands = 0 : i64, tpu.core_type = #tpu.core_type<tc>, window_params = [{transform_indices = @transform_0, window_bounds = array<i64: 8, 16, 4>}, {pipeline_mode = #tpu.pipeline_mode<synchronous>, transform_indices = @transform_1, window_bounds = array<i64: 7, 4, 128>}, {pipeline_mode = #tpu.pipeline_mode<synchronous>, transform_indices = @transform_2, window_bounds = array<i64: 1, 128>}, {pipeline_mode = #tpu.pipeline_mode<synchronous>, transform_indices = @transform_3, window_bounds = array<i64: 5, 128, 128>}, {pipeline_mode = #tpu.pipeline_mode<synchronous>, transform_indices = @transform_4, window_bounds = array<i64: 1, 128>}, {pipeline_mode = #tpu.pipeline_mode<synchronous>, transform_indices = @transform_5, window_bounds = array<i64: 3, 128, 128>}, {pipeline_mode = #tpu.pipeline_mode<synchronous>, transform_indices = @transform_6, window_bounds = array<i64: 1, 128>}, {pipeline_mode = #tpu.pipeline_mode<synchronous>, transform_indices = @transform_7, window_bounds = array<i64: 128, 128>}, {pipeline_mode = #tpu.pipeline_mode<synchronous>, transform_indices = @transform_8, window_bounds = array<i64: 1, 128>}, {pipeline_mode = #tpu.pipeline_mode<synchronous>, transform_indices = @transform_9, window_bounds = array<i64: 128, 128>}, {pipeline_mode = #tpu.pipeline_mode<synchronous>, transform_indices = @transform_10, window_bounds = array<i64: 1, 128>}, {transform_indices = @transform_11, window_bounds = array<i64: 8, 128>}, {transform_indices = @transform_12, window_bounds = array<i64: 8, 128>}]} {
    %c0 = arith.constant 0 : index
    %c0_0 = arith.constant 0 : index
    %c0_1 = arith.constant 0 : index
    %0 = vector.load %arg1[%c0, %c0_0, %c0_1] : memref<8x16x4xbf16, #tpu.memory_space<vmem>>, vector<8x16x4xbf16>
    %cst = arith.constant 0.000000e+00 : bf16
    %1 = vector.broadcast %cst : bf16 to vector<8x3x4xbf16>
    %2 = tpu.concatenate %1, %0, %1 in 1 : vector<8x3x4xbf16>, vector<8x16x4xbf16>, vector<8x3x4xbf16> -> vector<8x22x4xbf16>
    %cst_2 = arith.constant 0.000000e+00 : f32
    %3 = vector.broadcast %cst_2 : f32 to vector<128x128xf32>
    %4 = vector.extract_strided_slice %2 {offsets = [0, 0, 0], sizes = [8, 16, 4], strides = [1, 1, 1]} : vector<8x22x4xbf16> to vector<8x16x4xbf16>
    %5 = vector.shape_cast %4 : vector<8x16x4xbf16> to vector<128x4xbf16>
    %c0_3 = arith.constant 0 : index
    %c0_4 = arith.constant 0 : index
    %c0_5 = arith.constant 0 : index
    %6 = vector.load %arg2[%c0_3, %c0_4, %c0_5] : memref<7x4x128xbf16, #tpu.memory_space<vmem>>, vector<1x4x128xbf16>
    %7 = vector.shape_cast %6 : vector<1x4x128xbf16> to vector<4x128xbf16>
    %cst_6 = arith.constant dense<0.000000e+00> : vector<128x128xf32>
    %8 = tpu.matmul %5, %7, %cst_6 {dimension_numbers = #tpu.dot_dimension_numbers<[1], [0], [0], [1], [0, 0, 1, 1], [], []>} : vector<128x4xbf16>, vector<4x128xbf16>, vector<128x128xf32> -> vector<128x128xf32>
    %9 = arith.addf %3, %8 : vector<128x128xf32>
    %10 = vector.extract_strided_slice %2 {offsets = [0, 1, 0], sizes = [8, 16, 4], strides = [1, 1, 1]} : vector<8x22x4xbf16> to vector<8x16x4xbf16>
    %11 = vector.shape_cast %10 : vector<8x16x4xbf16> to vector<128x4xbf16>
    %c1 = arith.constant 1 : index
    %c0_7 = arith.constant 0 : index
    %c0_8 = arith.constant 0 : index
    %12 = vector.load %arg2[%c1, %c0_7, %c0_8] : memref<7x4x128xbf16, #tpu.memory_space<vmem>>, vector<1x4x128xbf16>
    %13 = vector.shape_cast %12 : vector<1x4x128xbf16> to vector<4x128xbf16>
    %cst_9 = arith.constant dense<0.000000e+00> : vector<128x128xf32>
    %14 = tpu.matmul %11, %13, %cst_9 {dimension_numbers = #tpu.dot_dimension_numbers<[1], [0], [0], [1], [0, 0, 1, 1], [], []>} : vector<128x4xbf16>, vector<4x128xbf16>, vector<128x128xf32> -> vector<128x128xf32>
    %15 = arith.addf %9, %14 : vector<128x128xf32>
    %16 = vector.extract_strided_slice %2 {offsets = [0, 2, 0], sizes = [8, 16, 4], strides = [1, 1, 1]} : vector<8x22x4xbf16> to vector<8x16x4xbf16>
    %17 = vector.shape_cast %16 : vector<8x16x4xbf16> to vector<128x4xbf16>
    %c2 = arith.constant 2 : index
    %c0_10 = arith.constant 0 : index
    %c0_11 = arith.constant 0 : index
    %18 = vector.load %arg2[%c2, %c0_10, %c0_11] : memref<7x4x128xbf16, #tpu.memory_space<vmem>>, vector<1x4x128xbf16>
    %19 = vector.shape_cast %18 : vector<1x4x128xbf16> to vector<4x128xbf16>
    %cst_12 = arith.constant dense<0.000000e+00> : vector<128x128xf32>
    %20 = tpu.matmul %17, %19, %cst_12 {dimension_numbers = #tpu.dot_dimension_numbers<[1], [0], [0], [1], [0, 0, 1, 1], [], []>} : vector<128x4xbf16>, vector<4x128xbf16>, vector<128x128xf32> -> vector<128x128xf32>
    %21 = arith.addf %15, %20 : vector<128x128xf32>
    %22 = vector.extract_strided_slice %2 {offsets = [0, 3, 0], sizes = [8, 16, 4], strides = [1, 1, 1]} : vector<8x22x4xbf16> to vector<8x16x4xbf16>
    %23 = vector.shape_cast %22 : vector<8x16x4xbf16> to vector<128x4xbf16>
    %c3 = arith.constant 3 : index
    %c0_13 = arith.constant 0 : index
    %c0_14 = arith.constant 0 : index
    %24 = vector.load %arg2[%c3, %c0_13, %c0_14] : memref<7x4x128xbf16, #tpu.memory_space<vmem>>, vector<1x4x128xbf16>
    %25 = vector.shape_cast %24 : vector<1x4x128xbf16> to vector<4x128xbf16>
    %cst_15 = arith.constant dense<0.000000e+00> : vector<128x128xf32>
    %26 = tpu.matmul %23, %25, %cst_15 {dimension_numbers = #tpu.dot_dimension_numbers<[1], [0], [0], [1], [0, 0, 1, 1], [], []>} : vector<128x4xbf16>, vector<4x128xbf16>, vector<128x128xf32> -> vector<128x128xf32>
    %27 = arith.addf %21, %26 : vector<128x128xf32>
    %28 = vector.extract_strided_slice %2 {offsets = [0, 4, 0], sizes = [8, 16, 4], strides = [1, 1, 1]} : vector<8x22x4xbf16> to vector<8x16x4xbf16>
    %29 = vector.shape_cast %28 : vector<8x16x4xbf16> to vector<128x4xbf16>
    %c4 = arith.constant 4 : index
    %c0_16 = arith.constant 0 : index
    %c0_17 = arith.constant 0 : index
    %30 = vector.load %arg2[%c4, %c0_16, %c0_17] : memref<7x4x128xbf16, #tpu.memory_space<vmem>>, vector<1x4x128xbf16>
    %31 = vector.shape_cast %30 : vector<1x4x128xbf16> to vector<4x128xbf16>
    %cst_18 = arith.constant dense<0.000000e+00> : vector<128x128xf32>
    %32 = tpu.matmul %29, %31, %cst_18 {dimension_numbers = #tpu.dot_dimension_numbers<[1], [0], [0], [1], [0, 0, 1, 1], [], []>} : vector<128x4xbf16>, vector<4x128xbf16>, vector<128x128xf32> -> vector<128x128xf32>
    %33 = arith.addf %27, %32 : vector<128x128xf32>
    %34 = vector.extract_strided_slice %2 {offsets = [0, 5, 0], sizes = [8, 16, 4], strides = [1, 1, 1]} : vector<8x22x4xbf16> to vector<8x16x4xbf16>
    %35 = vector.shape_cast %34 : vector<8x16x4xbf16> to vector<128x4xbf16>
    %c5 = arith.constant 5 : index
    %c0_19 = arith.constant 0 : index
    %c0_20 = arith.constant 0 : index
    %36 = vector.load %arg2[%c5, %c0_19, %c0_20] : memref<7x4x128xbf16, #tpu.memory_space<vmem>>, vector<1x4x128xbf16>
    %37 = vector.shape_cast %36 : vector<1x4x128xbf16> to vector<4x128xbf16>
    %cst_21 = arith.constant dense<0.000000e+00> : vector<128x128xf32>
    %38 = tpu.matmul %35, %37, %cst_21 {dimension_numbers = #tpu.dot_dimension_numbers<[1], [0], [0], [1], [0, 0, 1, 1], [], []>} : vector<128x4xbf16>, vector<4x128xbf16>, vector<128x128xf32> -> vector<128x128xf32>
    %39 = arith.addf %33, %38 : vector<128x128xf32>
    %40 = vector.extract_strided_slice %2 {offsets = [0, 6, 0], sizes = [8, 16, 4], strides = [1, 1, 1]} : vector<8x22x4xbf16> to vector<8x16x4xbf16>
    %41 = vector.shape_cast %40 : vector<8x16x4xbf16> to vector<128x4xbf16>
    %c6 = arith.constant 6 : index
    %c0_22 = arith.constant 0 : index
    %c0_23 = arith.constant 0 : index
    %42 = vector.load %arg2[%c6, %c0_22, %c0_23] : memref<7x4x128xbf16, #tpu.memory_space<vmem>>, vector<1x4x128xbf16>
    %43 = vector.shape_cast %42 : vector<1x4x128xbf16> to vector<4x128xbf16>
    %cst_24 = arith.constant dense<0.000000e+00> : vector<128x128xf32>
    %44 = tpu.matmul %41, %43, %cst_24 {dimension_numbers = #tpu.dot_dimension_numbers<[1], [0], [0], [1], [0, 0, 1, 1], [], []>} : vector<128x4xbf16>, vector<4x128xbf16>, vector<128x128xf32> -> vector<128x128xf32>
    %45 = arith.addf %39, %44 : vector<128x128xf32>
    %c0_25 = arith.constant 0 : index
    %c0_26 = arith.constant 0 : index
    %46 = vector.load %arg3[%c0_25, %c0_26] : memref<1x128xf32, #tpu.memory_space<vmem>>, vector<1x128xf32>
    %47 = vector.broadcast %46 : vector<1x128xf32> to vector<128x128xf32>
    %48 = arith.addf %45, %47 : vector<128x128xf32>
    %cst_27 = arith.constant 0.000000e+00 : f32
    %49 = vector.broadcast %cst_27 : f32 to vector<128x128xf32>
    %50 = arith.maximumf %48, %49 : vector<128x128xf32>
    %51 = vector.shape_cast %50 : vector<128x128xf32> to vector<8x16x128xf32>
    %52 = arith.truncf %51 : vector<8x16x128xf32> to vector<8x16x128xbf16>
    %cst_28 = arith.constant 0.000000e+00 : bf16
    %53 = vector.broadcast %cst_28 : bf16 to vector<8x2x128xbf16>
    %54 = tpu.concatenate %53, %52, %53 in 1 : vector<8x2x128xbf16>, vector<8x16x128xbf16>, vector<8x2x128xbf16> -> vector<8x20x128xbf16>
    %cst_29 = arith.constant 0.000000e+00 : f32
    %55 = vector.broadcast %cst_29 : f32 to vector<128x128xf32>
    %56 = vector.extract_strided_slice %54 {offsets = [0, 0, 0], sizes = [8, 16, 128], strides = [1, 1, 1]} : vector<8x20x128xbf16> to vector<8x16x128xbf16>
    %57 = vector.shape_cast %56 : vector<8x16x128xbf16> to vector<128x128xbf16>
    %c0_30 = arith.constant 0 : index
    %c0_31 = arith.constant 0 : index
    %c0_32 = arith.constant 0 : index
    %58 = vector.load %arg4[%c0_30, %c0_31, %c0_32] : memref<5x128x128xbf16, #tpu.memory_space<vmem>>, vector<1x128x128xbf16>
    %59 = vector.shape_cast %58 : vector<1x128x128xbf16> to vector<128x128xbf16>
    %cst_33 = arith.constant dense<0.000000e+00> : vector<128x128xf32>
    %60 = tpu.matmul %57, %59, %cst_33 {dimension_numbers = #tpu.dot_dimension_numbers<[1], [0], [0], [1], [0, 0, 1, 1], [], []>} : vector<128x128xbf16>, vector<128x128xbf16>, vector<128x128xf32> -> vector<128x128xf32>
    %61 = arith.addf %55, %60 : vector<128x128xf32>
    %62 = vector.extract_strided_slice %54 {offsets = [0, 1, 0], sizes = [8, 16, 128], strides = [1, 1, 1]} : vector<8x20x128xbf16> to vector<8x16x128xbf16>
    %63 = vector.shape_cast %62 : vector<8x16x128xbf16> to vector<128x128xbf16>
    %c1_34 = arith.constant 1 : index
    %c0_35 = arith.constant 0 : index
    %c0_36 = arith.constant 0 : index
    %64 = vector.load %arg4[%c1_34, %c0_35, %c0_36] : memref<5x128x128xbf16, #tpu.memory_space<vmem>>, vector<1x128x128xbf16>
    %65 = vector.shape_cast %64 : vector<1x128x128xbf16> to vector<128x128xbf16>
    %cst_37 = arith.constant dense<0.000000e+00> : vector<128x128xf32>
    %66 = tpu.matmul %63, %65, %cst_37 {dimension_numbers = #tpu.dot_dimension_numbers<[1], [0], [0], [1], [0, 0, 1, 1], [], []>} : vector<128x128xbf16>, vector<128x128xbf16>, vector<128x128xf32> -> vector<128x128xf32>
    %67 = arith.addf %61, %66 : vector<128x128xf32>
    %68 = vector.extract_strided_slice %54 {offsets = [0, 2, 0], sizes = [8, 16, 128], strides = [1, 1, 1]} : vector<8x20x128xbf16> to vector<8x16x128xbf16>
    %69 = vector.shape_cast %68 : vector<8x16x128xbf16> to vector<128x128xbf16>
    %c2_38 = arith.constant 2 : index
    %c0_39 = arith.constant 0 : index
    %c0_40 = arith.constant 0 : index
    %70 = vector.load %arg4[%c2_38, %c0_39, %c0_40] : memref<5x128x128xbf16, #tpu.memory_space<vmem>>, vector<1x128x128xbf16>
    %71 = vector.shape_cast %70 : vector<1x128x128xbf16> to vector<128x128xbf16>
    %cst_41 = arith.constant dense<0.000000e+00> : vector<128x128xf32>
    %72 = tpu.matmul %69, %71, %cst_41 {dimension_numbers = #tpu.dot_dimension_numbers<[1], [0], [0], [1], [0, 0, 1, 1], [], []>} : vector<128x128xbf16>, vector<128x128xbf16>, vector<128x128xf32> -> vector<128x128xf32>
    %73 = arith.addf %67, %72 : vector<128x128xf32>
    %74 = vector.extract_strided_slice %54 {offsets = [0, 3, 0], sizes = [8, 16, 128], strides = [1, 1, 1]} : vector<8x20x128xbf16> to vector<8x16x128xbf16>
    %75 = vector.shape_cast %74 : vector<8x16x128xbf16> to vector<128x128xbf16>
    %c3_42 = arith.constant 3 : index
    %c0_43 = arith.constant 0 : index
    %c0_44 = arith.constant 0 : index
    %76 = vector.load %arg4[%c3_42, %c0_43, %c0_44] : memref<5x128x128xbf16, #tpu.memory_space<vmem>>, vector<1x128x128xbf16>
    %77 = vector.shape_cast %76 : vector<1x128x128xbf16> to vector<128x128xbf16>
    %cst_45 = arith.constant dense<0.000000e+00> : vector<128x128xf32>
    %78 = tpu.matmul %75, %77, %cst_45 {dimension_numbers = #tpu.dot_dimension_numbers<[1], [0], [0], [1], [0, 0, 1, 1], [], []>} : vector<128x128xbf16>, vector<128x128xbf16>, vector<128x128xf32> -> vector<128x128xf32>
    %79 = arith.addf %73, %78 : vector<128x128xf32>
    %80 = vector.extract_strided_slice %54 {offsets = [0, 4, 0], sizes = [8, 16, 128], strides = [1, 1, 1]} : vector<8x20x128xbf16> to vector<8x16x128xbf16>
    %81 = vector.shape_cast %80 : vector<8x16x128xbf16> to vector<128x128xbf16>
    %c4_46 = arith.constant 4 : index
    %c0_47 = arith.constant 0 : index
    %c0_48 = arith.constant 0 : index
    %82 = vector.load %arg4[%c4_46, %c0_47, %c0_48] : memref<5x128x128xbf16, #tpu.memory_space<vmem>>, vector<1x128x128xbf16>
    %83 = vector.shape_cast %82 : vector<1x128x128xbf16> to vector<128x128xbf16>
    %cst_49 = arith.constant dense<0.000000e+00> : vector<128x128xf32>
    %84 = tpu.matmul %81, %83, %cst_49 {dimension_numbers = #tpu.dot_dimension_numbers<[1], [0], [0], [1], [0, 0, 1, 1], [], []>} : vector<128x128xbf16>, vector<128x128xbf16>, vector<128x128xf32> -> vector<128x128xf32>
    %85 = arith.addf %79, %84 : vector<128x128xf32>
    %c0_50 = arith.constant 0 : index
    %c0_51 = arith.constant 0 : index
    %86 = vector.load %arg5[%c0_50, %c0_51] : memref<1x128xf32, #tpu.memory_space<vmem>>, vector<1x128xf32>
    %87 = vector.broadcast %86 : vector<1x128xf32> to vector<128x128xf32>
    %88 = arith.addf %85, %87 : vector<128x128xf32>
    %cst_52 = arith.constant 0.000000e+00 : f32
    %89 = vector.broadcast %cst_52 : f32 to vector<128x128xf32>
    %90 = arith.maximumf %88, %89 : vector<128x128xf32>
    %91 = vector.shape_cast %90 : vector<128x128xf32> to vector<8x16x128xf32>
    %92 = arith.truncf %91 : vector<8x16x128xf32> to vector<8x16x128xbf16>
    %cst_53 = arith.constant 0.000000e+00 : bf16
    %93 = vector.broadcast %cst_53 : bf16 to vector<8x1x128xbf16>
    %94 = tpu.concatenate %93, %92, %93 in 1 : vector<8x1x128xbf16>, vector<8x16x128xbf16>, vector<8x1x128xbf16> -> vector<8x18x128xbf16>
    %cst_54 = arith.constant 0.000000e+00 : f32
    %95 = vector.broadcast %cst_54 : f32 to vector<128x128xf32>
    %96 = vector.extract_strided_slice %94 {offsets = [0, 0, 0], sizes = [8, 16, 128], strides = [1, 1, 1]} : vector<8x18x128xbf16> to vector<8x16x128xbf16>
    %97 = vector.shape_cast %96 : vector<8x16x128xbf16> to vector<128x128xbf16>
    %c0_55 = arith.constant 0 : index
    %c0_56 = arith.constant 0 : index
    %c0_57 = arith.constant 0 : index
    %98 = vector.load %arg6[%c0_55, %c0_56, %c0_57] : memref<3x128x128xbf16, #tpu.memory_space<vmem>>, vector<1x128x128xbf16>
    %99 = vector.shape_cast %98 : vector<1x128x128xbf16> to vector<128x128xbf16>
    %cst_58 = arith.constant dense<0.000000e+00> : vector<128x128xf32>
    %100 = tpu.matmul %97, %99, %cst_58 {dimension_numbers = #tpu.dot_dimension_numbers<[1], [0], [0], [1], [0, 0, 1, 1], [], []>} : vector<128x128xbf16>, vector<128x128xbf16>, vector<128x128xf32> -> vector<128x128xf32>
    %101 = arith.addf %95, %100 : vector<128x128xf32>
    %102 = vector.extract_strided_slice %94 {offsets = [0, 1, 0], sizes = [8, 16, 128], strides = [1, 1, 1]} : vector<8x18x128xbf16> to vector<8x16x128xbf16>
    %103 = vector.shape_cast %102 : vector<8x16x128xbf16> to vector<128x128xbf16>
    %c1_59 = arith.constant 1 : index
    %c0_60 = arith.constant 0 : index
    %c0_61 = arith.constant 0 : index
    %104 = vector.load %arg6[%c1_59, %c0_60, %c0_61] : memref<3x128x128xbf16, #tpu.memory_space<vmem>>, vector<1x128x128xbf16>
    %105 = vector.shape_cast %104 : vector<1x128x128xbf16> to vector<128x128xbf16>
    %cst_62 = arith.constant dense<0.000000e+00> : vector<128x128xf32>
    %106 = tpu.matmul %103, %105, %cst_62 {dimension_numbers = #tpu.dot_dimension_numbers<[1], [0], [0], [1], [0, 0, 1, 1], [], []>} : vector<128x128xbf16>, vector<128x128xbf16>, vector<128x128xf32> -> vector<128x128xf32>
    %107 = arith.addf %101, %106 : vector<128x128xf32>
    %108 = vector.extract_strided_slice %94 {offsets = [0, 2, 0], sizes = [8, 16, 128], strides = [1, 1, 1]} : vector<8x18x128xbf16> to vector<8x16x128xbf16>
    %109 = vector.shape_cast %108 : vector<8x16x128xbf16> to vector<128x128xbf16>
    %c2_63 = arith.constant 2 : index
    %c0_64 = arith.constant 0 : index
    %c0_65 = arith.constant 0 : index
    %110 = vector.load %arg6[%c2_63, %c0_64, %c0_65] : memref<3x128x128xbf16, #tpu.memory_space<vmem>>, vector<1x128x128xbf16>
    %111 = vector.shape_cast %110 : vector<1x128x128xbf16> to vector<128x128xbf16>
    %cst_66 = arith.constant dense<0.000000e+00> : vector<128x128xf32>
    %112 = tpu.matmul %109, %111, %cst_66 {dimension_numbers = #tpu.dot_dimension_numbers<[1], [0], [0], [1], [0, 0, 1, 1], [], []>} : vector<128x128xbf16>, vector<128x128xbf16>, vector<128x128xf32> -> vector<128x128xf32>
    %113 = arith.addf %107, %112 : vector<128x128xf32>
    %c0_67 = arith.constant 0 : index
    %c0_68 = arith.constant 0 : index
    %114 = vector.load %arg7[%c0_67, %c0_68] : memref<1x128xf32, #tpu.memory_space<vmem>>, vector<1x128xf32>
    %115 = vector.broadcast %114 : vector<1x128xf32> to vector<128x128xf32>
    %116 = arith.addf %113, %115 : vector<128x128xf32>
    %cst_69 = arith.constant 0.000000e+00 : f32
    %117 = vector.broadcast %cst_69 : f32 to vector<128x128xf32>
    %118 = arith.maximumf %116, %117 : vector<128x128xf32>
    %119 = vector.shape_cast %118 : vector<128x128xf32> to vector<8x16x128xf32>
    %120 = arith.truncf %119 : vector<8x16x128xf32> to vector<8x16x128xbf16>
    %cst_70 = arith.constant dense<0xFF80> : vector<8x128xbf16>
    %121 = vector.multi_reduction <maximumf>, %120, %cst_70 [1] : vector<8x16x128xbf16> to vector<8x128xbf16>
    %c0_71 = arith.constant 0 : index
    %c0_72 = arith.constant 0 : index
    %122 = vector.load %arg8[%c0_71, %c0_72] : memref<128x128xbf16, #tpu.memory_space<vmem>>, vector<128x128xbf16>
    %cst_73 = arith.constant dense<0.000000e+00> : vector<8x128xf32>
    %123 = tpu.matmul %121, %122, %cst_73 {dimension_numbers = #tpu.dot_dimension_numbers<[1], [0], [0], [1], [0, 0, 1, 1], [], []>} : vector<8x128xbf16>, vector<128x128xbf16>, vector<8x128xf32> -> vector<8x128xf32>
    %c0_74 = arith.constant 0 : index
    %c0_75 = arith.constant 0 : index
    %124 = vector.load %arg9[%c0_74, %c0_75] : memref<1x128xf32, #tpu.memory_space<vmem>>, vector<1x128xf32>
    %125 = vector.broadcast %124 : vector<1x128xf32> to vector<8x128xf32>
    %126 = arith.addf %123, %125 : vector<8x128xf32>
    %cst_76 = arith.constant 0.000000e+00 : f32
    %127 = vector.broadcast %cst_76 : f32 to vector<8x128xf32>
    %128 = arith.maximumf %126, %127 : vector<8x128xf32>
    %c0_77 = arith.constant 0 : index
    %c0_78 = arith.constant 0 : index
    %129 = vector.load %arg12[%c0_77, %c0_78] : memref<8x128xf32, #tpu.memory_space<vmem>>, vector<8x128xf32>
    tpu.vector_store %arg12[%c0_77, %c0_78], %128 {strides = array<i32>} : memref<8x128xf32, #tpu.memory_space<vmem>>, vector<8x128xf32>,
    %130 = arith.truncf %128 : vector<8x128xf32> to vector<8x128xbf16>
    %c0_79 = arith.constant 0 : index
    %c0_80 = arith.constant 0 : index
    %131 = vector.load %arg10[%c0_79, %c0_80] : memref<128x128xbf16, #tpu.memory_space<vmem>>, vector<128x128xbf16>
    %cst_81 = arith.constant dense<0.000000e+00> : vector<8x128xf32>
    %132 = tpu.matmul %130, %131, %cst_81 {dimension_numbers = #tpu.dot_dimension_numbers<[1], [0], [0], [1], [0, 0, 1, 1], [], []>} : vector<8x128xbf16>, vector<128x128xbf16>, vector<8x128xf32> -> vector<8x128xf32>
    %c0_82 = arith.constant 0 : index
    %c0_83 = arith.constant 0 : index
    %133 = vector.load %arg11[%c0_82, %c0_83] : memref<1x128xf32, #tpu.memory_space<vmem>>, vector<1x128xf32>
    %134 = vector.broadcast %133 : vector<1x128xf32> to vector<8x128xf32>
    %135 = arith.addf %132, %134 : vector<8x128xf32>
    %c0_84 = arith.constant 0 : index
    %c0_85 = arith.constant 0 : index
    %136 = vector.load %arg13[%c0_84, %c0_85] : memref<8x128xf32, #tpu.memory_space<vmem>>, vector<8x128xf32>
    tpu.vector_store %arg13[%c0_84, %c0_85], %135 {strides = array<i32>} : memref<8x128xf32, #tpu.memory_space<vmem>>, vector<8x128xf32>,
    return
  }
  func.func @transform_0(%arg0: i32) -> (i32, i32, i32) {
    %c0_i32 = arith.constant 0 : i32
    %c0_i32_0 = arith.constant 0 : i32
    %c0_i32_1 = arith.constant 0 : i32
    return %arg0, %c0_i32, %c0_i32_0 : i32, i32, i32
  }
  func.func @transform_1(%arg0: i32) -> (i32, i32, i32) {
    %c0_i32 = arith.constant 0 : i32
    %c0_i32_0 = arith.constant 0 : i32
    %c0_i32_1 = arith.constant 0 : i32
    %c0_i32_2 = arith.constant 0 : i32
    return %c0_i32, %c0_i32_0, %c0_i32_1 : i32, i32, i32
  }
  func.func @transform_2(%arg0: i32) -> (i32, i32) {
    %c0_i32 = arith.constant 0 : i32
    %c0_i32_0 = arith.constant 0 : i32
    %c0_i32_1 = arith.constant 0 : i32
    return %c0_i32, %c0_i32_0 : i32, i32
  }
  func.func @transform_3(%arg0: i32) -> (i32, i32, i32) {
    %c0_i32 = arith.constant 0 : i32
    %c0_i32_0 = arith.constant 0 : i32
    %c0_i32_1 = arith.constant 0 : i32
    %c0_i32_2 = arith.constant 0 : i32
    return %c0_i32, %c0_i32_0, %c0_i32_1 : i32, i32, i32
  }
  func.func @transform_4(%arg0: i32) -> (i32, i32) {
    %c0_i32 = arith.constant 0 : i32
    %c0_i32_0 = arith.constant 0 : i32
    %c0_i32_1 = arith.constant 0 : i32
    return %c0_i32, %c0_i32_0 : i32, i32
  }
  func.func @transform_5(%arg0: i32) -> (i32, i32, i32) {
    %c0_i32 = arith.constant 0 : i32
    %c0_i32_0 = arith.constant 0 : i32
    %c0_i32_1 = arith.constant 0 : i32
    %c0_i32_2 = arith.constant 0 : i32
    return %c0_i32, %c0_i32_0, %c0_i32_1 : i32, i32, i32
  }
  func.func @transform_6(%arg0: i32) -> (i32, i32) {
    %c0_i32 = arith.constant 0 : i32
    %c0_i32_0 = arith.constant 0 : i32
    %c0_i32_1 = arith.constant 0 : i32
    return %c0_i32, %c0_i32_0 : i32, i32
  }
  func.func @transform_7(%arg0: i32) -> (i32, i32) {
    %c0_i32 = arith.constant 0 : i32
    %c0_i32_0 = arith.constant 0 : i32
    %c0_i32_1 = arith.constant 0 : i32
    return %c0_i32, %c0_i32_0 : i32, i32
  }
  func.func @transform_8(%arg0: i32) -> (i32, i32) {
    %c0_i32 = arith.constant 0 : i32
    %c0_i32_0 = arith.constant 0 : i32
    %c0_i32_1 = arith.constant 0 : i32
    return %c0_i32, %c0_i32_0 : i32, i32
  }
  func.func @transform_9(%arg0: i32) -> (i32, i32) {
    %c0_i32 = arith.constant 0 : i32
    %c0_i32_0 = arith.constant 0 : i32
    %c0_i32_1 = arith.constant 0 : i32
    return %c0_i32, %c0_i32_0 : i32, i32
  }
  func.func @transform_10(%arg0: i32) -> (i32, i32) {
    %c0_i32 = arith.constant 0 : i32
    %c0_i32_0 = arith.constant 0 : i32
    %c0_i32_1 = arith.constant 0 : i32
    return %c0_i32, %c0_i32_0 : i32, i32
  }
  func.func @transform_11(%arg0: i32) -> (i32, i32) {
    %c0_i32 = arith.constant 0 : i32
    %c0_i32_0 = arith.constant 0 : i32
    return %arg0, %c0_i32 : i32, i32
  }
  func.func @transform_12(%arg0: i32) -> (i32, i32) {
    %c0_i32 = arith.constant 0 : i32
    %c0_i32_0 = arith.constant 0 : i32
    return %arg0, %c0_i32 : i32, i32
  }
}

</mosaic_0001>

<llo_original>
// kernel: fcn_forward.1
$region0: #{fcn_forward.1}
  #allocation0 [shape = 'u32[]', space=smem, size = 0x4, offset = 0x4, fixed_abs, tag = 'smem constant byte address 0x4 - core index']
  #allocation1 [shape = 'u32[144,128]{1,0:T(1,128)}', space=vmem, size = 0x12000, scoped, tag = 'internal scratch']
  %s0 = inlined_call_operand.vmem [shape: bf16[8,16,4], index: 0, kind: input, shape index: {}]
  %s1 = inlined_call_operand.vmem [shape: bf16[7,4,128], index: 1, kind: input, shape index: {}]
  %s2 = inlined_call_operand.vmem [shape: f32[1,128], index: 2, kind: input, shape index: {}]
  %s3 = inlined_call_operand.vmem [shape: bf16[5,128,128], index: 3, kind: input, shape index: {}]
  %s4 = inlined_call_operand.vmem [shape: f32[1,128], index: 4, kind: input, shape index: {}]
  %s5 = inlined_call_operand.vmem [shape: bf16[3,128,128], index: 5, kind: input, shape index: {}]
  %s6 = inlined_call_operand.vmem [shape: f32[1,128], index: 6, kind: input, shape index: {}]
  %s7 = inlined_call_operand.vmem [shape: bf16[128,128], index: 7, kind: input, shape index: {}]
  %s8 = inlined_call_operand.vmem [shape: f32[1,128], index: 8, kind: input, shape index: {}]
  %s9 = inlined_call_operand.vmem [shape: bf16[128,128], index: 9, kind: input, shape index: {}]
  %s10 = inlined_call_operand.vmem [shape: f32[1,128], index: 10, kind: input, shape index: {}]
  %s11 = inlined_call_operand.hbm [shape: f32[8,128], index: 11, kind: output, shape index: {0}]
  %s12 = inlined_call_operand.vmem [shape: f32[8,128], index: 12, kind: output, shape index: {1}]
  %13 = xla_tuple %s11, %s12
  %s14 = sld [smem:[#allocation0]]
  $region62: #{fcn_forward.1} parent=0
    _
  %s16 = ssub.s32 1, %s14
  %s17 = scalar_select 0, %s16, %s14
  $region1: #{fcn_forward.1} parent=0
    #allocation2 [shape = 'u8[4096]{0}', space=vmem, size = 0x1000, scoped, tag = 'output window, operand 0, single buffered']
    #allocation3 [shape = 's32[1]{0}', space=sflag, size = 0x4, scoped, tag = 'scoped memory for fcn_forward.1']
    %18 = vsyncpa [#allocation3], 0
    // Predicated region
    $region2: #{fcn_forward.1} parent=1 // pred_check
      _
    $region3: #{fcn_forward.1} parent=1 // pred_check_branch
      %20 = sbr.rel (0) target = $region5
    $region4: #{fcn_forward.1} parent=1 // pred_region
      _
    $region5: #{fcn_forward.1} parent=1 // pred_fallthru
      _
    // Predicated region
    $region6: #{fcn_forward.1} parent=1 // pred_check
      _
    $region7: #{fcn_forward.1} parent=1 // pred_check_branch
      %22 = sbr.rel (0) target = $region9
    $region8: #{fcn_forward.1} parent=1 // pred_region
      _
    $region9: #{fcn_forward.1} parent=1 // pred_fallthru
      _
    // Predicated region
    $region10: #{fcn_forward.1} parent=1 // pred_check
      _
    $region11: #{fcn_forward.1} parent=1 // pred_check_branch
      %24 = sbr.rel (0) target = $region13
    $region12: #{fcn_forward.1} parent=1 // pred_region
      _
    $region13: #{fcn_forward.1} parent=1 // pred_fallthru
      _
    // Predicated region
    $region14: #{fcn_forward.1} parent=1 // pred_check
      _
    $region15: #{fcn_forward.1} parent=1 // pred_check_branch
      %26 = sbr.rel (0) target = $region17
    $region16: #{fcn_forward.1} parent=1 // pred_region
      _
    $region17: #{fcn_forward.1} parent=1 // pred_fallthru
      _
    // Predicated region
    $region18: #{fcn_forward.1} parent=1 // pred_check
      _
    $region19: #{fcn_forward.1} parent=1 // pred_check_branch
      %28 = sbr.rel (0) target = $region21
    $region20: #{fcn_forward.1} parent=1 // pred_region
      _
    $region21: #{fcn_forward.1} parent=1 // pred_fallthru
      _
    // Predicated region
    $region22: #{fcn_forward.1} parent=1 // pred_check
      _
    $region23: #{fcn_forward.1} parent=1 // pred_check_branch
      %30 = sbr.rel (0) target = $region25
    $region24: #{fcn_forward.1} parent=1 // pred_region
      _
    $region25: #{fcn_forward.1} parent=1 // pred_fallthru
      _
    // Predicated region
    $region26: #{fcn_forward.1} parent=1 // pred_check
      _
    $region27: #{fcn_forward.1} parent=1 // pred_check_branch
      %32 = sbr.rel (0) target = $region29
    $region28: #{fcn_forward.1} parent=1 // pred_region
      _
    $region29: #{fcn_forward.1} parent=1 // pred_fallthru
      _
    // Predicated region
    $region30: #{fcn_forward.1} parent=1 // pred_check
      _
    $region31: #{fcn_forward.1} parent=1 // pred_check_branch
      %34 = sbr.rel (0) target = $region33
    $region32: #{fcn_forward.1} parent=1 // pred_region
      _
    $region33: #{fcn_forward.1} parent=1 // pred_fallthru
      _
    // Predicated region
    $region34: #{fcn_forward.1} parent=1 // pred_check
      _
    $region35: #{fcn_forward.1} parent=1 // pred_check_branch
      %36 = sbr.rel (0) target = $region37
    $region36: #{fcn_forward.1} parent=1 // pred_region
      _
    $region37: #{fcn_forward.1} parent=1 // pred_fallthru
      _
    // Predicated region
    $region38: #{fcn_forward.1} parent=1 // pred_check
      _
    $region39: #{fcn_forward.1} parent=1 // pred_check_branch
      %38 = sbr.rel (0) target = $region41
    $region40: #{fcn_forward.1} parent=1 // pred_region
      _
    $region41: #{fcn_forward.1} parent=1 // pred_fallthru
      _
    // Predicated region
    $region42: #{fcn_forward.1} parent=1 // pred_check
      _
    $region43: #{fcn_forward.1} parent=1 // pred_check_branch
      %40 = sbr.rel (0) target = $region45
    $region44: #{fcn_forward.1} parent=1 // pred_region
      _
    $region45: #{fcn_forward.1} parent=1 // pred_fallthru
      _
    %v42 = vld [vmem:[%s0] sm:$0xf]
    %v43 = vld [vmem:[%s0 + $0x4] sm:$0xf]
    %v44 = vld [vmem:[%s0 + $0x8] sm:$0xf]
    %v45 = vld [vmem:[%s0 + $0xc] sm:$0xf]
    %v46 = vld [vmem:[%s0 + $0x10] sm:$0xf]
    %v47 = vld [vmem:[%s0 + $0x14] sm:$0xf]
    %v48 = vld [vmem:[%s0 + $0x18] sm:$0xf]
    %v49 = vld [vmem:[%s0 + $0x1c] sm:$0xf]
    %v50 = vld [vmem:[%s0 + $0x20] sm:$0xf]
    %v51 = vld [vmem:[%s0 + $0x24] sm:$0xf]
    %v52 = vld [vmem:[%s0 + $0x28] sm:$0xf]
    %v53 = vld [vmem:[%s0 + $0x2c] sm:$0xf]
    %v54 = vld [vmem:[%s0 + $0x30] sm:$0xf]
    %v55 = vld [vmem:[%s0 + $0x34] sm:$0xf]
    %v56 = vld [vmem:[%s0 + $0x38] sm:$0xf]
    %v57 = vld [vmem:[%s0 + $0x3c] sm:$0xf]
    %v74 = vunpack.c.l.b16 %v42
    %v75 = vunpack.c.l.b16 %v43
    %v76 = vunpack.c.l.b16 %v44
    %v77 = vunpack.c.l.b16 %v45
    %v78 = vunpack.c.l.b16 %v46
    %v79 = vunpack.c.l.b16 %v47
    %v80 = vunpack.c.l.b16 %v48
    %v81 = vunpack.c.l.b16 %v49
    %v82 = vunpack.c.l.b16 %v50
    %v83 = vunpack.c.l.b16 %v51
    %v84 = vunpack.c.l.b16 %v52
    %v85 = vunpack.c.l.b16 %v53
    %v86 = vunpack.c.l.b16 %v54
    %v87 = vunpack.c.l.b16 %v55
    %v88 = vunpack.c.l.b16 %v56
    %v89 = vunpack.c.l.b16 %v57
    %v90 = vpack.c.b16 %v75, %v74
    %v91 = vpack.c.b16 %v77, %v76
    %v92 = vpack.c.b16 %v79, %v78
    %v93 = vpack.c.b16 %v81, %v80
    %v94 = vpack.c.b16 %v83, %v82
    %v95 = vpack.c.b16 %v85, %v84
    %v96 = vpack.c.b16 %v87, %v86
    %v97 = vpack.c.b16 %v89, %v88
    %v99 = vshrl.u32 %v90, 16
    %v101 = vrot.slane %v99, 6
    %v102 = vshll.u32 %v90, 16
    %v104 = vrot.slane %v102, 7
    %v105 = vor.u32 %v101, %v104
    %v107 = vshrl.u32 %v91, 16
    %v109 = vrot.slane %v107, 6
    %v110 = vshll.u32 %v91, 16
    %v112 = vrot.slane %v110, 7
    %v113 = vor.u32 %v109, %v112
    %v115 = vshrl.u32 %v92, 16
    %v117 = vrot.slane %v115, 6
    %v118 = vshll.u32 %v92, 16
    %v120 = vrot.slane %v118, 7
    %v121 = vor.u32 %v117, %v120
    %v123 = vshrl.u32 %v93, 16
    %v125 = vrot.slane %v123, 6
    %v126 = vshll.u32 %v93, 16
    %v128 = vrot.slane %v126, 7
    %v129 = vor.u32 %v125, %v128
    %v131 = vshrl.u32 %v94, 16
    %v133 = vrot.slane %v131, 6
    %v134 = vshll.u32 %v94, 16
    %v136 = vrot.slane %v134, 7
    %v137 = vor.u32 %v133, %v136
    %v139 = vshrl.u32 %v95, 16
    %v141 = vrot.slane %v139, 6
    %v142 = vshll.u32 %v95, 16
    %v144 = vrot.slane %v142, 7
    %v145 = vor.u32 %v141, %v144
    %v147 = vshrl.u32 %v96, 16
    %v149 = vrot.slane %v147, 6
    %v150 = vshll.u32 %v96, 16
    %v152 = vrot.slane %v150, 7
    %v153 = vor.u32 %v149, %v152
    %v155 = vshrl.u32 %v97, 16
    %v157 = vrot.slane %v155, 6
    %v158 = vshll.u32 %v97, 16
    %v160 = vrot.slane %v158, 7
    %v161 = vor.u32 %v157, %v160
    %vm170 = vcmask 1041408
    %vm171 = vsmask.f32 1280
    %vm172 = vmand %vm170, %vm171
    %v173 = vsel %vm172, 0, %v105
    %v174 = vsel %vm172, 0, %v113
    %v175 = vsel %vm172, 0, %v121
    %v176 = vsel %vm172, 0, %v129
    %v177 = vsel %vm172, 0, %v137
    %v178 = vsel %vm172, 0, %v145
    %v179 = vsel %vm172, 0, %v153
    %v180 = vsel %vm172, 0, %v161
    %v181 = vsel %vm172, %v105, 0
    %v182 = vsel %vm172, %v113, 0
    %v183 = vsel %vm172, %v121, 0
    %v184 = vsel %vm172, %v129, 0
    %v185 = vsel %vm172, %v137, 0
    %v186 = vsel %vm172, %v145, 0
    %v187 = vsel %vm172, %v153, 0
    %v188 = vsel %vm172, %v161, 0
    %v189 = vld [vmem:[%s1] sm:$0x3]
    %vm190 = vsmask.f32 7424
    %v192 = vshrl.u32 %v173, 16
    %v194 = vshll.u32 %v173, 16
    %v196 = vrot.slane %v194, 1
    %v197 = vor.u32 %v192, %v196
    %v199 = vshll.u32 %v181, 16
    %v201 = vrot.slane %v199, 1
    %v202 = vsel %vm190, %v197, %v201
    %v204 = vshrl.u32 %v174, 16
    %v206 = vshll.u32 %v174, 16
    %v208 = vrot.slane %v206, 1
    %v209 = vor.u32 %v204, %v208
    %v211 = vshll.u32 %v182, 16
    %v213 = vrot.slane %v211, 1
    %v214 = vsel %vm190, %v209, %v213
    %v216 = vshrl.u32 %v175, 16
    %v218 = vshll.u32 %v175, 16
    %v220 = vrot.slane %v218, 1
    %v221 = vor.u32 %v216, %v220
    %v223 = vshll.u32 %v183, 16
    %v225 = vrot.slane %v223, 1
    %v226 = vsel %vm190, %v221, %v225
    %v228 = vshrl.u32 %v176, 16
    %v230 = vshll.u32 %v176, 16
    %v232 = vrot.slane %v230, 1
    %v233 = vor.u32 %v228, %v232
    %v235 = vshll.u32 %v184, 16
    %v237 = vrot.slane %v235, 1
    %v238 = vsel %vm190, %v233, %v237
    %v240 = vshrl.u32 %v177, 16
    %v242 = vshll.u32 %v177, 16
    %v244 = vrot.slane %v242, 1
    %v245 = vor.u32 %v240, %v244
    %v247 = vshll.u32 %v185, 16
    %v249 = vrot.slane %v247, 1
    %v250 = vsel %vm190, %v245, %v249
    %v252 = vshrl.u32 %v178, 16
    %v254 = vshll.u32 %v178, 16
    %v256 = vrot.slane %v254, 1
    %v257 = vor.u32 %v252, %v256
    %v259 = vshll.u32 %v186, 16
    %v261 = vrot.slane %v259, 1
    %v262 = vsel %vm190, %v257, %v261
    %v264 = vshrl.u32 %v179, 16
    %v266 = vshll.u32 %v179, 16
    %v268 = vrot.slane %v266, 1
    %v269 = vor.u32 %v264, %v268
    %v271 = vshll.u32 %v187, 16
    %v273 = vrot.slane %v271, 1
    %v274 = vsel %vm190, %v269, %v273
    %v276 = vshrl.u32 %v180, 16
    %v278 = vshll.u32 %v180, 16
    %v280 = vrot.slane %v278, 1
    %v281 = vor.u32 %v276, %v280
    %v283 = vshll.u32 %v188, 16
    %v285 = vrot.slane %v283, 1
    %v286 = vsel %vm190, %v281, %v285
    %s287 = scalar_lea.vmem %s1, 2
    %v288 = vld [vmem:[%s287] sm:$0x3]
    %vm289 = vcmask 31744
    %v291 = vsel %vm289, %v202, 0
    %v294 = vsel %vm289, %v214, 0
    %v297 = vsel %vm289, %v226, 0
    %v300 = vsel %vm289, %v238, 0
    %v303 = vsel %vm289, %v250, 0
    %v306 = vsel %vm289, %v262, 0
    %v309 = vsel %vm289, %v274, 0
    %v312 = vsel %vm289, %v286, 0
    %vm314 = vcmask 1041408
    %v316 = vsel %vm314, %v288, 0
    %318 = vmatprep.subr.bf16.mxu0 0
    %319 = vmatpush1.bf16.msra.mxu0 %v316
    %320 = vmatprep.subr.bf16.mxu0 0
    %321 = vmatpush1.bf16.msra.mxu0 0
    %322 = vmatprep.subr.bf16.mxu0 0
    %323 = vmatpush1.bf16.msra.mxu0 0
    %324 = vmatprep.subr.bf16.mxu0 0
    %325 = vmatpush1.bf16.msra.mxu0 0
    %326 = vmatprep.subr.bf16.mxu0 0
    %327 = vmatpush1.bf16.msra.mxu0 0
    %328 = vmatprep.subr.bf16.mxu0 0
    %329 = vmatpush1.bf16.msra.mxu0 0
    %330 = vmatprep.subr.bf16.mxu0 0
    %331 = vmatpush1.bf16.msra.mxu0 0
    %332 = vmatprep.subr.bf16.mxu0 0
    %333 = vmatpush1.bf16.msra.mxu0 0
    %334 = vmatprep.subr.bf16.mxu0 0
    %335 = vmatpush1.bf16.msra.mxu0 0
    %336 = vmatprep.subr.bf16.mxu0 0
    %337 = vmatpush1.bf16.msra.mxu0 0
    %338 = vmatprep.subr.bf16.mxu0 0
    %339 = vmatpush1.bf16.msra.mxu0 0
    %340 = vmatprep.subr.bf16.mxu0 0
    %341 = vmatpush1.bf16.msra.mxu0 0
    %342 = vmatprep.subr.bf16.mxu0 0
    %343 = vmatpush1.bf16.msra.mxu0 0
    %344 = vmatprep.subr.bf16.mxu0 0
    %345 = vmatpush1.bf16.msra.mxu0 0
    %346 = vmatprep.subr.bf16.mxu0 0
    %347 = vmatpush1.bf16.msra.mxu0 0
    %348 = vmatprep.subr.bf16.mxu0 0
    %349 = vmatpush1.bf16.msra.mxu0 0
    %350 = vmatprep.mubr.bf16.mxu0 0
    %351 = vmatmul.mubr.bf16.gmra.mrb[0].mxu0 %v291
    %v352 = vpop.f32.mrb[0].mxu0
    %v353 = vadd.f32 0.0, %v352
    %v354 = vpop.f32.mrb[0].mxu0
    %v355 = vpop.f32.mrb[0].mxu0
    %v356 = vadd.f32 0.0, %v355
    %v357 = vpop.f32.mrb[0].mxu0
    %358 = vmatprep.mubr.bf16.mxu0 0
    %359 = vmatmul.mubr.bf16.gmra.mrb[0].mxu0 %v294
    %v360 = vpop.f32.mrb[0].mxu0
    %v361 = vadd.f32 0.0, %v360
    %v362 = vpop.f32.mrb[0].mxu0
    %v363 = vpop.f32.mrb[0].mxu0
    %v364 = vadd.f32 0.0, %v363
    %v365 = vpop.f32.mrb[0].mxu0
    %366 = vmatprep.mubr.bf16.mxu0 0
    %367 = vmatmul.mubr.bf16.gmra.mrb[0].mxu0 %v297
    %v368 = vpop.f32.mrb[0].mxu0
    %v369 = vadd.f32 0.0, %v368
    %v370 = vpop.f32.mrb[0].mxu0
    %v371 = vpop.f32.mrb[0].mxu0
    %v372 = vadd.f32 0.0, %v371
    %v373 = vpop.f32.mrb[0].mxu0
    %374 = vmatprep.mubr.bf16.mxu0 0
    %375 = vmatmul.mubr.bf16.gmra.mrb[0].mxu0 %v300
    %v376 = vpop.f32.mrb[0].mxu0
    %v377 = vadd.f32 0.0, %v376
    %v378 = vpop.f32.mrb[0].mxu0
    %v379 = vpop.f32.mrb[0].mxu0
    %v380 = vadd.f32 0.0, %v379
    %v381 = vpop.f32.mrb[0].mxu0
    %382 = vmatprep.mubr.bf16.mxu0 0
    %383 = vmatmul.mubr.bf16.gmra.mrb[0].mxu0 %v303
    %v384 = vpop.f32.mrb[0].mxu0
    %v385 = vadd.f32 0.0, %v384
    %v386 = vpop.f32.mrb[0].mxu0
    %v387 = vpop.f32.mrb[0].mxu0
    %v388 = vadd.f32 0.0, %v387
    %v389 = vpop.f32.mrb[0].mxu0
    %390 = vmatprep.mubr.bf16.mxu0 0
    %391 = vmatmul.mubr.bf16.gmra.mrb[0].mxu0 %v306
    %v392 = vpop.f32.mrb[0].mxu0
    %v393 = vadd.f32 0.0, %v392
    %v394 = vpop.f32.mrb[0].mxu0
    %v395 = vpop.f32.mrb[0].mxu0
    %v396 = vadd.f32 0.0, %v395
    %v397 = vpop.f32.mrb[0].mxu0
    %398 = vmatprep.mubr.bf16.mxu0 0
    %399 = vmatmul.mubr.bf16.gmra.mrb[0].mxu0 %v309
    %v400 = vpop.f32.mrb[0].mxu0
    %v401 = vadd.f32 0.0, %v400
    %v402 = vpop.f32.mrb[0].mxu0
    %v403 = vpop.f32.mrb[0].mxu0
    %v404 = vadd.f32 0.0, %v403
    %v405 = vpop.f32.mrb[0].mxu0
    %406 = vmatprep.mubr.bf16.mxu0 0
    %407 = vmatmul.mubr.bf16.gmra.mrb[0].mxu0 %v312
    %v408 = vpop.f32.mrb[0].mxu0
    %v409 = vadd.f32 0.0, %v408
    %v410 = vpop.f32.mrb[0].mxu0
    %v411 = vpop.f32.mrb[0].mxu0
    %v412 = vadd.f32 0.0, %v411
    %v413 = vpop.f32.mrb[0].mxu0
    %414 = vdwg.mxu0
    %v415 = vsel %vm289, %v173, 0
    %v417 = vsel %vm289, %v174, 0
    %v419 = vsel %vm289, %v175, 0
    %v421 = vsel %vm289, %v176, 0
    %v423 = vsel %vm289, %v177, 0
    %v425 = vsel %vm289, %v178, 0
    %v427 = vsel %vm289, %v179, 0
    %v429 = vsel %vm289, %v180, 0
    %v432 = vsel %vm314, %v189, 0
    %434 = vmatprep.subr.bf16.mxu0 0
    %435 = vmatpush1.bf16.msra.mxu0 %v432
    %436 = vmatprep.subr.bf16.mxu0 0
    %437 = vmatpush1.bf16.msra.mxu0 0
    %438 = vmatprep.subr.bf16.mxu0 0
    %439 = vmatpush1.bf16.msra.mxu0 0
    %440 = vmatprep.subr.bf16.mxu0 0
    %441 = vmatpush1.bf16.msra.mxu0 0
    %442 = vmatprep.subr.bf16.mxu0 0
    %443 = vmatpush1.bf16.msra.mxu0 0
    %444 = vmatprep.subr.bf16.mxu0 0
    %445 = vmatpush1.bf16.msra.mxu0 0
    %446 = vmatprep.subr.bf16.mxu0 0
    %447 = vmatpush1.bf16.msra.mxu0 0
    %448 = vmatprep.subr.bf16.mxu0 0
    %449 = vmatpush1.bf16.msra.mxu0 0
    %450 = vmatprep.subr.bf16.mxu0 0
    %451 = vmatpush1.bf16.msra.mxu0 0
    %452 = vmatprep.subr.bf16.mxu0 0
    %453 = vmatpush1.bf16.msra.mxu0 0
    %454 = vmatprep.subr.bf16.mxu0 0
    %455 = vmatpush1.bf16.msra.mxu0 0
    %456 = vmatprep.subr.bf16.mxu0 0
    %457 = vmatpush1.bf16.msra.mxu0 0
    %458 = vmatprep.subr.bf16.mxu0 0
    %459 = vmatpush1.bf16.msra.mxu0 0
    %460 = vmatprep.subr.bf16.mxu0 0
    %461 = vmatpush1.bf16.msra.mxu0 0
    %462 = vmatprep.subr.bf16.mxu0 0
    %463 = vmatpush1.bf16.msra.mxu0 0
    %464 = vmatprep.subr.bf16.mxu0 0
    %465 = vmatpush1.bf16.msra.mxu0 0
    %466 = vmatprep.mubr.bf16.mxu0 0
    %467 = vmatmul.mubr.bf16.gmra.mrb[0].mxu0 %v415
    %v468 = vpop.f32.mrb[0].mxu0
    %v469 = vadd.f32 %v353, %v468
    %v470 = vpop.f32.mrb[0].mxu0
    %v471 = vpop.f32.mrb[0].mxu0
    %v472 = vadd.f32 %v356, %v471
    %v473 = vpop.f32.mrb[0].mxu0
    %474 = vmatprep.mubr.bf16.mxu0 0
    %475 = vmatmul.mubr.bf16.gmra.mrb[0].mxu0 %v417
    %v476 = vpop.f32.mrb[0].mxu0
    %v477 = vadd.f32 %v361, %v476
    %v478 = vpop.f32.mrb[0].mxu0
    %v479 = vpop.f32.mrb[0].mxu0
    %v480 = vadd.f32 %v364, %v479
    %v481 = vpop.f32.mrb[0].mxu0
    %482 = vmatprep.mubr.bf16.mxu0 0
    %483 = vmatmul.mubr.bf16.gmra.mrb[0].mxu0 %v419
    %v484 = vpop.f32.mrb[0].mxu0
    %v485 = vadd.f32 %v369, %v484
    %v486 = vpop.f32.mrb[0].mxu0
    %v487 = vpop.f32.mrb[0].mxu0
    %v488 = vadd.f32 %v372, %v487
    %v489 = vpop.f32.mrb[0].mxu0
    %490 = vmatprep.mubr.bf16.mxu0 0
    %491 = vmatmul.mubr.bf16.gmra.mrb[0].mxu0 %v421
    %v492 = vpop.f32.mrb[0].mxu0
    %v493 = vadd.f32 %v377, %v492
    %v494 = vpop.f32.mrb[0].mxu0
    %v495 = vpop.f32.mrb[0].mxu0
    %v496 = vadd.f32 %v380, %v495
    %v497 = vpop.f32.mrb[0].mxu0
    %498 = vmatprep.mubr.bf16.mxu0 0
    %499 = vmatmul.mubr.bf16.gmra.mrb[0].mxu0 %v423
    %v500 = vpop.f32.mrb[0].mxu0
    %v501 = vadd.f32 %v385, %v500
    %v502 = vpop.f32.mrb[0].mxu0
    %v503 = vpop.f32.mrb[0].mxu0
    %v504 = vadd.f32 %v388, %v503
    %v505 = vpop.f32.mrb[0].mxu0
    %506 = vmatprep.mubr.bf16.mxu0 0
    %507 = vmatmul.mubr.bf16.gmra.mrb[0].mxu0 %v425
    %v508 = vpop.f32.mrb[0].mxu0
    %v509 = vadd.f32 %v393, %v508
    %v510 = vpop.f32.mrb[0].mxu0
    %v511 = vpop.f32.mrb[0].mxu0
    %v512 = vadd.f32 %v396, %v511
    %v513 = vpop.f32.mrb[0].mxu0
    %514 = vmatprep.mubr.bf16.mxu0 0
    %515 = vmatmul.mubr.bf16.gmra.mrb[0].mxu0 %v427
    %v516 = vpop.f32.mrb[0].mxu0
    %v517 = vadd.f32 %v401, %v516
    %v518 = vpop.f32.mrb[0].mxu0
    %v519 = vpop.f32.mrb[0].mxu0
    %v520 = vadd.f32 %v404, %v519
    %v521 = vpop.f32.mrb[0].mxu0
    %522 = vmatprep.mubr.bf16.mxu0 0
    %523 = vmatmul.mubr.bf16.gmra.mrb[0].mxu0 %v429
    %v524 = vpop.f32.mrb[0].mxu0
    %v525 = vadd.f32 %v409, %v524
    %v526 = vpop.f32.mrb[0].mxu0
    %v527 = vpop.f32.mrb[0].mxu0
    %v528 = vadd.f32 %v412, %v527
    %v529 = vpop.f32.mrb[0].mxu0
    %530 = vdwg.mxu0
    %vm547 = vcmask 1046528
    %v548 = vrot.slane %v173, 1
    %v549 = vrot.slane %v181, 1
    %v550 = vsel %vm547, %v548, %v549
    %v551 = vrot.slane %v174, 1
    %v552 = vrot.slane %v182, 1
    %v553 = vsel %vm547, %v551, %v552
    %v554 = vrot.slane %v175, 1
    %v555 = vrot.slane %v183, 1
    %v556 = vsel %vm547, %v554, %v555
    %v557 = vrot.slane %v176, 1
    %v558 = vrot.slane %v184, 1
    %v559 = vsel %vm547, %v557, %v558
    %v560 = vrot.slane %v177, 1
    %v561 = vrot.slane %v185, 1
    %v562 = vsel %vm547, %v560, %v561
    %v563 = vrot.slane %v178, 1
    %v564 = vrot.slane %v186, 1
    %v565 = vsel %vm547, %v563, %v564
    %v566 = vrot.slane %v179, 1
    %v567 = vrot.slane %v187, 1
    %v568 = vsel %vm547, %v566, %v567
    %v569 = vrot.slane %v180, 1
    %v570 = vrot.slane %v188, 1
    %v571 = vsel %vm547, %v569, %v570
    %s572 = scalar_lea.vmem %s1, 4
    %v573 = vld [vmem:[%s572] sm:$0x3]
    %v575 = vsel %vm289, %v550, 0
    %v578 = vsel %vm289, %v553, 0
    %v581 = vsel %vm289, %v556, 0
    %v584 = vsel %vm289, %v559, 0
    %v587 = vsel %vm289, %v562, 0
    %v590 = vsel %vm289, %v565, 0
    %v593 = vsel %vm289, %v568, 0
    %v596 = vsel %vm289, %v571, 0
    %v599 = vsel %vm314, %v573, 0
    %601 = vmatprep.subr.bf16.mxu0 0
    %602 = vmatpush1.bf16.msra.mxu0 %v599
    %603 = vmatprep.subr.bf16.mxu0 0
    %604 = vmatpush1.bf16.msra.mxu0 0
    %605 = vmatprep.subr.bf16.mxu0 0
    %606 = vmatpush1.bf16.msra.mxu0 0
    %607 = vmatprep.subr.bf16.mxu0 0
    %608 = vmatpush1.bf16.msra.mxu0 0
    %609 = vmatprep.subr.bf16.mxu0 0
    %610 = vmatpush1.bf16.msra.mxu0 0
    %611 = vmatprep.subr.bf16.mxu0 0
    %612 = vmatpush1.bf16.msra.mxu0 0
    %613 = vmatprep.subr.bf16.mxu0 0
    %614 = vmatpush1.bf16.msra.mxu0 0
    %615 = vmatprep.subr.bf16.mxu0 0
    %616 = vmatpush1.bf16.msra.mxu0 0
    %617 = vmatprep.subr.bf16.mxu0 0
    %618 = vmatpush1.bf16.msra.mxu0 0
    %619 = vmatprep.subr.bf16.mxu0 0
    %620 = vmatpush1.bf16.msra.mxu0 0
    %621 = vmatprep.subr.bf16.mxu0 0
    %622 = vmatpush1.bf16.msra.mxu0 0
    %623 = vmatprep.subr.bf16.mxu0 0
    %624 = vmatpush1.bf16.msra.mxu0 0
    %625 = vmatprep.subr.bf16.mxu0 0
    %626 = vmatpush1.bf16.msra.mxu0 0
    %627 = vmatprep.subr.bf16.mxu0 0
    %628 = vmatpush1.bf16.msra.mxu0 0
    %629 = vmatprep.subr.bf16.mxu0 0
    %630 = vmatpush1.bf16.msra.mxu0 0
    %631 = vmatprep.subr.bf16.mxu0 0
    %632 = vmatpush1.bf16.msra.mxu0 0
    %633 = vmatprep.mubr.bf16.mxu0 0
    %634 = vmatmul.mubr.bf16.gmra.mrb[0].mxu0 %v575
    %v635 = vpop.f32.mrb[0].mxu0
    %v636 = vadd.f32 0.0, %v635
    %v637 = vpop.f32.mrb[0].mxu0
    %v638 = vpop.f32.mrb[0].mxu0
    %v639 = vadd.f32 0.0, %v638
    %v640 = vpop.f32.mrb[0].mxu0
    %641 = vmatprep.mubr.bf16.mxu0 0
    %642 = vmatmul.mubr.bf16.gmra.mrb[0].mxu0 %v578
    %v643 = vpop.f32.mrb[0].mxu0
    %v644 = vadd.f32 0.0, %v643
    %v645 = vpop.f32.mrb[0].mxu0
    %v646 = vpop.f32.mrb[0].mxu0
    %v647 = vadd.f32 0.0, %v646
    %v648 = vpop.f32.mrb[0].mxu0
    %649 = vmatprep.mubr.bf16.mxu0 0
    %650 = vmatmul.mubr.bf16.gmra.mrb[0].mxu0 %v581
    %v651 = vpop.f32.mrb[0].mxu0
    %v652 = vadd.f32 0.0, %v651
    %v653 = vpop.f32.mrb[0].mxu0
    %v654 = vpop.f32.mrb[0].mxu0
    %v655 = vadd.f32 0.0, %v654
    %v656 = vpop.f32.mrb[0].mxu0
    %657 = vmatprep.mubr.bf16.mxu0 0
    %658 = vmatmul.mubr.bf16.gmra.mrb[0].mxu0 %v584
    %v659 = vpop.f32.mrb[0].mxu0
    %v660 = vadd.f32 0.0, %v659
    %v661 = vpop.f32.mrb[0].mxu0
    %v662 = vpop.f32.mrb[0].mxu0
    %v663 = vadd.f32 0.0, %v662
    %v664 = vpop.f32.mrb[0].mxu0
    %665 = vmatprep.mubr.bf16.mxu0 0
    %666 = vmatmul.mubr.bf16.gmra.mrb[0].mxu0 %v587
    %v667 = vpop.f32.mrb[0].mxu0
    %v668 = vadd.f32 0.0, %v667
    %v669 = vpop.f32.mrb[0].mxu0
    %v670 = vpop.f32.mrb[0].mxu0
    %v671 = vadd.f32 0.0, %v670
    %v672 = vpop.f32.mrb[0].mxu0
    %673 = vmatprep.mubr.bf16.mxu0 0
    %674 = vmatmul.mubr.bf16.gmra.mrb[0].mxu0 %v590
    %v675 = vpop.f32.mrb[0].mxu0
    %v676 = vadd.f32 0.0, %v675
    %v677 = vpop.f32.mrb[0].mxu0
    %v678 = vpop.f32.mrb[0].mxu0
    %v679 = vadd.f32 0.0, %v678
    %v680 = vpop.f32.mrb[0].mxu0
    %681 = vmatprep.mubr.bf16.mxu0 0
    %682 = vmatmul.mubr.bf16.gmra.mrb[0].mxu0 %v593
    %v683 = vpop.f32.mrb[0].mxu0
    %v684 = vadd.f32 0.0, %v683
    %v685 = vpop.f32.mrb[0].mxu0
    %v686 = vpop.f32.mrb[0].mxu0
    %v687 = vadd.f32 0.0, %v686
    %v688 = vpop.f32.mrb[0].mxu0
    %689 = vmatprep.mubr.bf16.mxu0 0
    %690 = vmatmul.mubr.bf16.gmra.mrb[0].mxu0 %v596
    %v691 = vpop.f32.mrb[0].mxu0
    %v692 = vadd.f32 0.0, %v691
    %v693 = vpop.f32.mrb[0].mxu0
    %v694 = vpop.f32.mrb[0].mxu0
    %v695 = vadd.f32 0.0, %v694
    %v696 = vpop.f32.mrb[0].mxu0
    %697 = vdwg.mxu0
    %v698 = vadd.f32 %v469, %v636
    %v699 = vadd.f32 %v472, %v639
    %v700 = vadd.f32 %v477, %v644
    %v701 = vadd.f32 %v480, %v647
    %v702 = vadd.f32 %v485, %v652
    %v703 = vadd.f32 %v488, %v655
    %v704 = vadd.f32 %v493, %v660
    %v705 = vadd.f32 %v496, %v663
    %v706 = vadd.f32 %v501, %v668
    %v707 = vadd.f32 %v504, %v671
    %v708 = vadd.f32 %v509, %v676
    %v709 = vadd.f32 %v512, %v679
    %v710 = vadd.f32 %v517, %v684
    %v711 = vadd.f32 %v520, %v687
    %v712 = vadd.f32 %v525, %v692
    %v713 = vadd.f32 %v528, %v695
    %vm714 = vsmask.f32 6400
    %v715 = vrot.slane %v192, 1
    %v716 = vrot.slane %v194, 2
    %v717 = vor.u32 %v715, %v716
    %v718 = vshrl.u32 %v181, 16
    %v720 = vrot.slane %v718, 1
    %v721 = vrot.slane %v199, 2
    %v722 = vor.u32 %v720, %v721
    %v723 = vsel %vm714, %v717, %v722
    %v724 = vrot.slane %v204, 1
    %v725 = vrot.slane %v206, 2
    %v726 = vor.u32 %v724, %v725
    %v727 = vshrl.u32 %v182, 16
    %v729 = vrot.slane %v727, 1
    %v730 = vrot.slane %v211, 2
    %v731 = vor.u32 %v729, %v730
    %v732 = vsel %vm714, %v726, %v731
    %v733 = vrot.slane %v216, 1
    %v734 = vrot.slane %v218, 2
    %v735 = vor.u32 %v733, %v734
    %v736 = vshrl.u32 %v183, 16
    %v738 = vrot.slane %v736, 1
    %v739 = vrot.slane %v223, 2
    %v740 = vor.u32 %v738, %v739
    %v741 = vsel %vm714, %v735, %v740
    %v742 = vrot.slane %v228, 1
    %v743 = vrot.slane %v230, 2
    %v744 = vor.u32 %v742, %v743
    %v745 = vshrl.u32 %v184, 16
    %v747 = vrot.slane %v745, 1
    %v748 = vrot.slane %v235, 2
    %v749 = vor.u32 %v747, %v748
    %v750 = vsel %vm714, %v744, %v749
    %v751 = vrot.slane %v240, 1
    %v752 = vrot.slane %v242, 2
    %v753 = vor.u32 %v751, %v752
    %v754 = vshrl.u32 %v185, 16
    %v756 = vrot.slane %v754, 1
    %v757 = vrot.slane %v247, 2
    %v758 = vor.u32 %v756, %v757
    %v759 = vsel %vm714, %v753, %v758
    %v760 = vrot.slane %v252, 1
    %v761 = vrot.slane %v254, 2
    %v762 = vor.u32 %v760, %v761
    %v763 = vshrl.u32 %v186, 16
    %v765 = vrot.slane %v763, 1
    %v766 = vrot.slane %v259, 2
    %v767 = vor.u32 %v765, %v766
    %v768 = vsel %vm714, %v762, %v767
    %v769 = vrot.slane %v264, 1
    %v770 = vrot.slane %v266, 2
    %v771 = vor.u32 %v769, %v770
    %v772 = vshrl.u32 %v187, 16
    %v774 = vrot.slane %v772, 1
    %v775 = vrot.slane %v271, 2
    %v776 = vor.u32 %v774, %v775
    %v777 = vsel %vm714, %v771, %v776
    %v778 = vrot.slane %v276, 1
    %v779 = vrot.slane %v278, 2
    %v780 = vor.u32 %v778, %v779
    %v781 = vshrl.u32 %v188, 16
    %v783 = vrot.slane %v781, 1
    %v784 = vrot.slane %v283, 2
    %v785 = vor.u32 %v783, %v784
    %v786 = vsel %vm714, %v780, %v785
    %s787 = scalar_lea.vmem %s1, 6
    %v788 = vld [vmem:[%s787] sm:$0x3]
    %v790 = vsel %vm289, %v723, 0
    %v793 = vsel %vm289, %v732, 0
    %v796 = vsel %vm289, %v741, 0
    %v799 = vsel %vm289, %v750, 0
    %v802 = vsel %vm289, %v759, 0
    %v805 = vsel %vm289, %v768, 0
    %v808 = vsel %vm289, %v777, 0
    %v811 = vsel %vm289, %v786, 0
    %v814 = vsel %vm314, %v788, 0
    %816 = vmatprep.subr.bf16.mxu0 0
    %817 = vmatpush1.bf16.msra.mxu0 %v814
    %818 = vmatprep.subr.bf16.mxu0 0
    %819 = vmatpush1.bf16.msra.mxu0 0
    %820 = vmatprep.subr.bf16.mxu0 0
    %821 = vmatpush1.bf16.msra.mxu0 0
    %822 = vmatprep.subr.bf16.mxu0 0
    %823 = vmatpush1.bf16.msra.mxu0 0
    %824 = vmatprep.subr.bf16.mxu0 0
    %825 = vmatpush1.bf16.msra.mxu0 0
    %826 = vmatprep.subr.bf16.mxu0 0
    %827 = vmatpush1.bf16.msra.mxu0 0
    %828 = vmatprep.subr.bf16.mxu0 0
    %829 = vmatpush1.bf16.msra.mxu0 0
    %830 = vmatprep.subr.bf16.mxu0 0
    %831 = vmatpush1.bf16.msra.mxu0 0
    %832 = vmatprep.subr.bf16.mxu0 0
    %833 = vmatpush1.bf16.msra.mxu0 0
    %834 = vmatprep.subr.bf16.mxu0 0
    %835 = vmatpush1.bf16.msra.mxu0 0
    %836 = vmatprep.subr.bf16.mxu0 0
    %837 = vmatpush1.bf16.msra.mxu0 0
    %838 = vmatprep.subr.bf16.mxu0 0
    %839 = vmatpush1.bf16.msra.mxu0 0
    %840 = vmatprep.subr.bf16.mxu0 0
    %841 = vmatpush1.bf16.msra.mxu0 0
    %842 = vmatprep.subr.bf16.mxu0 0
    %843 = vmatpush1.bf16.msra.mxu0 0
    %844 = vmatprep.subr.bf16.mxu0 0
    %845 = vmatpush1.bf16.msra.mxu0 0
    %846 = vmatprep.subr.bf16.mxu0 0
    %847 = vmatpush1.bf16.msra.mxu0 0
    %848 = vmatprep.mubr.bf16.mxu0 0
    %849 = vmatmul.mubr.bf16.gmra.mrb[0].mxu0 %v790
    %v850 = vpop.f32.mrb[0].mxu0
    %v851 = vadd.f32 0.0, %v850
    %v852 = vpop.f32.mrb[0].mxu0
    %v853 = vpop.f32.mrb[0].mxu0
    %v854 = vadd.f32 0.0, %v853
    %v855 = vpop.f32.mrb[0].mxu0
    %856 = vmatprep.mubr.bf16.mxu0 0
    %857 = vmatmul.mubr.bf16.gmra.mrb[0].mxu0 %v793
    %v858 = vpop.f32.mrb[0].mxu0
    %v859 = vadd.f32 0.0, %v858
    %v860 = vpop.f32.mrb[0].mxu0
    %v861 = vpop.f32.mrb[0].mxu0
    %v862 = vadd.f32 0.0, %v861
    %v863 = vpop.f32.mrb[0].mxu0
    %864 = vmatprep.mubr.bf16.mxu0 0
    %865 = vmatmul.mubr.bf16.gmra.mrb[0].mxu0 %v796
    %v866 = vpop.f32.mrb[0].mxu0
    %v867 = vadd.f32 0.0, %v866
    %v868 = vpop.f32.mrb[0].mxu0
    %v869 = vpop.f32.mrb[0].mxu0
    %v870 = vadd.f32 0.0, %v869
    %v871 = vpop.f32.mrb[0].mxu0
    %872 = vmatprep.mubr.bf16.mxu0 0
    %873 = vmatmul.mubr.bf16.gmra.mrb[0].mxu0 %v799
    %v874 = vpop.f32.mrb[0].mxu0
    %v875 = vadd.f32 0.0, %v874
    %v876 = vpop.f32.mrb[0].mxu0
    %v877 = vpop.f32.mrb[0].mxu0
    %v878 = vadd.f32 0.0, %v877
    %v879 = vpop.f32.mrb[0].mxu0
    %880 = vmatprep.mubr.bf16.mxu0 0
    %881 = vmatmul.mubr.bf16.gmra.mrb[0].mxu0 %v802
    %v882 = vpop.f32.mrb[0].mxu0
    %v883 = vadd.f32 0.0, %v882
    %v884 = vpop.f32.mrb[0].mxu0
    %v885 = vpop.f32.mrb[0].mxu0
    %v886 = vadd.f32 0.0, %v885
    %v887 = vpop.f32.mrb[0].mxu0
    %888 = vmatprep.mubr.bf16.mxu0 0
    %889 = vmatmul.mubr.bf16.gmra.mrb[0].mxu0 %v805
    %v890 = vpop.f32.mrb[0].mxu0
    %v891 = vadd.f32 0.0, %v890
    %v892 = vpop.f32.mrb[0].mxu0
    %v893 = vpop.f32.mrb[0].mxu0
    %v894 = vadd.f32 0.0, %v893
    %v895 = vpop.f32.mrb[0].mxu0
    %896 = vmatprep.mubr.bf16.mxu0 0
    %897 = vmatmul.mubr.bf16.gmra.mrb[0].mxu0 %v808
    %v898 = vpop.f32.mrb[0].mxu0
    %v899 = vadd.f32 0.0, %v898
    %v900 = vpop.f32.mrb[0].mxu0
    %v901 = vpop.f32.mrb[0].mxu0
    %v902 = vadd.f32 0.0, %v901
    %v903 = vpop.f32.mrb[0].mxu0
    %904 = vmatprep.mubr.bf16.mxu0 0
    %905 = vmatmul.mubr.bf16.gmra.mrb[0].mxu0 %v811
    %v906 = vpop.f32.mrb[0].mxu0
    %v907 = vadd.f32 0.0, %v906
    %v908 = vpop.f32.mrb[0].mxu0
    %v909 = vpop.f32.mrb[0].mxu0
    %v910 = vadd.f32 0.0, %v909
    %v911 = vpop.f32.mrb[0].mxu0
    %912 = vdwg.mxu0
    %v913 = vadd.f32 %v698, %v851
    %v914 = vadd.f32 %v699, %v854
    %v915 = vadd.f32 %v700, %v859
    %v916 = vadd.f32 %v701, %v862
    %v917 = vadd.f32 %v702, %v867
    %v918 = vadd.f32 %v703, %v870
    %v919 = vadd.f32 %v704, %v875
    %v920 = vadd.f32 %v705, %v878
    %v921 = vadd.f32 %v706, %v883
    %v922 = vadd.f32 %v707, %v886
    %v923 = vadd.f32 %v708, %v891
    %v924 = vadd.f32 %v709, %v894
    %v925 = vadd.f32 %v710, %v899
    %v926 = vadd.f32 %v711, %v902
    %v927 = vadd.f32 %v712, %v907
    %v928 = vadd.f32 %v713, %v910
    %vm929 = vcmask 1045504
    %v930 = vrot.slane %v173, 2
    %v931 = vrot.slane %v181, 2
    %v932 = vsel %vm929, %v930, %v931
    %v933 = vrot.slane %v174, 2
    %v934 = vrot.slane %v182, 2
    %v935 = vsel %vm929, %v933, %v934
    %v936 = vrot.slane %v175, 2
    %v937 = vrot.slane %v183, 2
    %v938 = vsel %vm929, %v936, %v937
    %v939 = vrot.slane %v176, 2
    %v940 = vrot.slane %v184, 2
    %v941 = vsel %vm929, %v939, %v940
    %v942 = vrot.slane %v177, 2
    %v943 = vrot.slane %v185, 2
    %v944 = vsel %vm929, %v942, %v943
    %v945 = vrot.slane %v178, 2
    %v946 = vrot.slane %v186, 2
    %v947 = vsel %vm929, %v945, %v946
    %v948 = vrot.slane %v179, 2
    %v949 = vrot.slane %v187, 2
    %v950 = vsel %vm929, %v948, %v949
    %v951 = vrot.slane %v180, 2
    %v952 = vrot.slane %v188, 2
    %v953 = vsel %vm929, %v951, %v952
    %s954 = scalar_lea.vmem %s1, 8
    %v955 = vld [vmem:[%s954] sm:$0x3]
    %v957 = vsel %vm289, %v932, 0
    %v960 = vsel %vm289, %v935, 0
    %v963 = vsel %vm289, %v938, 0
    %v966 = vsel %vm289, %v941, 0
    %v969 = vsel %vm289, %v944, 0
    %v972 = vsel %vm289, %v947, 0
    %v975 = vsel %vm289, %v950, 0
    %v978 = vsel %vm289, %v953, 0
    %v981 = vsel %vm314, %v955, 0
    %983 = vmatprep.subr.bf16.mxu0 0
    %984 = vmatpush1.bf16.msra.mxu0 %v981
    %985 = vmatprep.subr.bf16.mxu0 0
    %986 = vmatpush1.bf16.msra.mxu0 0
    %987 = vmatprep.subr.bf16.mxu0 0
    %988 = vmatpush1.bf16.msra.mxu0 0
    %989 = vmatprep.subr.bf16.mxu0 0
    %990 = vmatpush1.bf16.msra.mxu0 0
    %991 = vmatprep.subr.bf16.mxu0 0
    %992 = vmatpush1.bf16.msra.mxu0 0
    %993 = vmatprep.subr.bf16.mxu0 0
    %994 = vmatpush1.bf16.msra.mxu0 0
    %995 = vmatprep.subr.bf16.mxu0 0
    %996 = vmatpush1.bf16.msra.mxu0 0
    %997 = vmatprep.subr.bf16.mxu0 0
    %998 = vmatpush1.bf16.msra.mxu0 0
    %999 = vmatprep.subr.bf16.mxu0 0
    %1000 = vmatpush1.bf16.msra.mxu0 0
    %1001 = vmatprep.subr.bf16.mxu0 0
    %1002 = vmatpush1.bf16.msra.mxu0 0
    %1003 = vmatprep.subr.bf16.mxu0 0
    %1004 = vmatpush1.bf16.msra.mxu0 0
    %1005 = vmatprep.subr.bf16.mxu0 0
    %1006 = vmatpush1.bf16.msra.mxu0 0
    %1007 = vmatprep.subr.bf16.mxu0 0
    %1008 = vmatpush1.bf16.msra.mxu0 0
    %1009 = vmatprep.subr.bf16.mxu0 0
    %1010 = vmatpush1.bf16.msra.mxu0 0
    %1011 = vmatprep.subr.bf16.mxu0 0
    %1012 = vmatpush1.bf16.msra.mxu0 0
    %1013 = vmatprep.subr.bf16.mxu0 0
    %1014 = vmatpush1.bf16.msra.mxu0 0
    %1015 = vmatprep.mubr.bf16.mxu0 0
    %1016 = vmatmul.mubr.bf16.gmra.mrb[0].mxu0 %v957
    %v1017 = vpop.f32.mrb[0].mxu0
    %v1018 = vadd.f32 0.0, %v1017
    %v1019 = vpop.f32.mrb[0].mxu0
    %v1020 = vpop.f32.mrb[0].mxu0
    %v1021 = vadd.f32 0.0, %v1020
    %v1022 = vpop.f32.mrb[0].mxu0
    %1023 = vmatprep.mubr.bf16.mxu0 0
    %1024 = vmatmul.mubr.bf16.gmra.mrb[0].mxu0 %v960
    %v1025 = vpop.f32.mrb[0].mxu0
    %v1026 = vadd.f32 0.0, %v1025
    %v1027 = vpop.f32.mrb[0].mxu0
    %v1028 = vpop.f32.mrb[0].mxu0
    %v1029 = vadd.f32 0.0, %v1028
    %v1030 = vpop.f32.mrb[0].mxu0
    %1031 = vmatprep.mubr.bf16.mxu0 0
    %1032 = vmatmul.mubr.bf16.gmra.mrb[0].mxu0 %v963
    %v1033 = vpop.f32.mrb[0].mxu0
    %v1034 = vadd.f32 0.0, %v1033
    %v1035 = vpop.f32.mrb[0].mxu0
    %v1036 = vpop.f32.mrb[0].mxu0
    %v1037 = vadd.f32 0.0, %v1036
    %v1038 = vpop.f32.mrb[0].mxu0
    %1039 = vmatprep.mubr.bf16.mxu0 0
    %1040 = vmatmul.mubr.bf16.gmra.mrb[0].mxu0 %v966
    %v1041 = vpop.f32.mrb[0].mxu0
    %v1042 = vadd.f32 0.0, %v1041
    %v1043 = vpop.f32.mrb[0].mxu0
    %v1044 = vpop.f32.mrb[0].mxu0
    %v1045 = vadd.f32 0.0, %v1044
    %v1046 = vpop.f32.mrb[0].mxu0
    %1047 = vmatprep.mubr.bf16.mxu0 0
    %1048 = vmatmul.mubr.bf16.gmra.mrb[0].mxu0 %v969
    %v1049 = vpop.f32.mrb[0].mxu0
    %v1050 = vadd.f32 0.0, %v1049
    %v1051 = vpop.f32.mrb[0].mxu0
    %v1052 = vpop.f32.mrb[0].mxu0
    %v1053 = vadd.f32 0.0, %v1052
    %v1054 = vpop.f32.mrb[0].mxu0
    %1055 = vmatprep.mubr.bf16.mxu0 0
    %1056 = vmatmul.mubr.bf16.gmra.mrb[0].mxu0 %v972
    %v1057 = vpop.f32.mrb[0].mxu0
    %v1058 = vadd.f32 0.0, %v1057
    %v1059 = vpop.f32.mrb[0].mxu0
    %v1060 = vpop.f32.mrb[0].mxu0
    %v1061 = vadd.f32 0.0, %v1060
    %v1062 = vpop.f32.mrb[0].mxu0
    %1063 = vmatprep.mubr.bf16.mxu0 0
    %1064 = vmatmul.mubr.bf16.gmra.mrb[0].mxu0 %v975
    %v1065 = vpop.f32.mrb[0].mxu0
    %v1066 = vadd.f32 0.0, %v1065
    %v1067 = vpop.f32.mrb[0].mxu0
    %v1068 = vpop.f32.mrb[0].mxu0
    %v1069 = vadd.f32 0.0, %v1068
    %v1070 = vpop.f32.mrb[0].mxu0
    %1071 = vmatprep.mubr.bf16.mxu0 0
    %1072 = vmatmul.mubr.bf16.gmra.mrb[0].mxu0 %v978
    %v1073 = vpop.f32.mrb[0].mxu0
    %v1074 = vadd.f32 0.0, %v1073
    %v1075 = vpop.f32.mrb[0].mxu0
    %v1076 = vpop.f32.mrb[0].mxu0
    %v1077 = vadd.f32 0.0, %v1076
    %v1078 = vpop.f32.mrb[0].mxu0
    %1079 = vdwg.mxu0
    %v1080 = vadd.f32 %v913, %v1018
    %v1081 = vadd.f32 %v914, %v1021
    %v1082 = vadd.f32 %v915, %v1026
    %v1083 = vadd.f32 %v916, %v1029
    %v1084 = vadd.f32 %v917, %v1034
    %v1085 = vadd.f32 %v918, %v1037
    %v1086 = vadd.f32 %v919, %v1042
    %v1087 = vadd.f32 %v920, %v1045
    %v1088 = vadd.f32 %v921, %v1050
    %v1089 = vadd.f32 %v922, %v1053
    %v1090 = vadd.f32 %v923, %v1058
    %v1091 = vadd.f32 %v924, %v1061
    %v1092 = vadd.f32 %v925, %v1066
    %v1093 = vadd.f32 %v926, %v1069
    %v1094 = vadd.f32 %v927, %v1074
    %v1095 = vadd.f32 %v928, %v1077
    %vm1096 = vsmask.f32 5376
    %v1097 = vrot.slane %v192, 2
    %v1098 = vrot.slane %v194, 3
    %v1099 = vor.u32 %v1097, %v1098
    %v1100 = vrot.slane %v718, 2
    %v1101 = vrot.slane %v199, 3
    %v1102 = vor.u32 %v1100, %v1101
    %v1103 = vsel %vm1096, %v1099, %v1102
    %v1104 = vrot.slane %v204, 2
    %v1105 = vrot.slane %v206, 3
    %v1106 = vor.u32 %v1104, %v1105
    %v1107 = vrot.slane %v727, 2
    %v1108 = vrot.slane %v211, 3
    %v1109 = vor.u32 %v1107, %v1108
    %v1110 = vsel %vm1096, %v1106, %v1109
    %v1111 = vrot.slane %v216, 2
    %v1112 = vrot.slane %v218, 3
    %v1113 = vor.u32 %v1111, %v1112
    %v1114 = vrot.slane %v736, 2
    %v1115 = vrot.slane %v223, 3
    %v1116 = vor.u32 %v1114, %v1115
    %v1117 = vsel %vm1096, %v1113, %v1116
    %v1118 = vrot.slane %v228, 2
    %v1119 = vrot.slane %v230, 3
    %v1120 = vor.u32 %v1118, %v1119
    %v1121 = vrot.slane %v745, 2
    %v1122 = vrot.slane %v235, 3
    %v1123 = vor.u32 %v1121, %v1122
    %v1124 = vsel %vm1096, %v1120, %v1123
    %v1125 = vrot.slane %v240, 2
    %v1126 = vrot.slane %v242, 3
    %v1127 = vor.u32 %v1125, %v1126
    %v1128 = vrot.slane %v754, 2
    %v1129 = vrot.slane %v247, 3
    %v1130 = vor.u32 %v1128, %v1129
    %v1131 = vsel %vm1096, %v1127, %v1130
    %v1132 = vrot.slane %v252, 2
    %v1133 = vrot.slane %v254, 3
    %v1134 = vor.u32 %v1132, %v1133
    %v1135 = vrot.slane %v763, 2
    %v1136 = vrot.slane %v259, 3
    %v1137 = vor.u32 %v1135, %v1136
    %v1138 = vsel %vm1096, %v1134, %v1137
    %v1139 = vrot.slane %v264, 2
    %v1140 = vrot.slane %v266, 3
    %v1141 = vor.u32 %v1139, %v1140
    %v1142 = vrot.slane %v772, 2
    %v1143 = vrot.slane %v271, 3
    %v1144 = vor.u32 %v1142, %v1143
    %v1145 = vsel %vm1096, %v1141, %v1144
    %v1146 = vrot.slane %v276, 2
    %v1147 = vrot.slane %v278, 3
    %v1148 = vor.u32 %v1146, %v1147
    %v1149 = vrot.slane %v781, 2
    %v1150 = vrot.slane %v283, 3
    %v1151 = vor.u32 %v1149, %v1150
    %v1152 = vsel %vm1096, %v1148, %v1151
    %s1153 = scalar_lea.vmem %s1, 10
    %v1154 = vld [vmem:[%s1153] sm:$0x3]
    %v1156 = vsel %vm289, %v1103, 0
    %v1159 = vsel %vm289, %v1110, 0
    %v1162 = vsel %vm289, %v1117, 0
    %v1165 = vsel %vm289, %v1124, 0
    %v1168 = vsel %vm289, %v1131, 0
    %v1171 = vsel %vm289, %v1138, 0
    %v1174 = vsel %vm289, %v1145, 0
    %v1177 = vsel %vm289, %v1152, 0
    %v1180 = vsel %vm314, %v1154, 0
    %1182 = vmatprep.subr.bf16.mxu0 0
    %1183 = vmatpush1.bf16.msra.mxu0 %v1180
    %1184 = vmatprep.subr.bf16.mxu0 0
    %1185 = vmatpush1.bf16.msra.mxu0 0
    %1186 = vmatprep.subr.bf16.mxu0 0
    %1187 = vmatpush1.bf16.msra.mxu0 0
    %1188 = vmatprep.subr.bf16.mxu0 0
    %1189 = vmatpush1.bf16.msra.mxu0 0
    %1190 = vmatprep.subr.bf16.mxu0 0
    %1191 = vmatpush1.bf16.msra.mxu0 0
    %1192 = vmatprep.subr.bf16.mxu0 0
    %1193 = vmatpush1.bf16.msra.mxu0 0
    %1194 = vmatprep.subr.bf16.mxu0 0
    %1195 = vmatpush1.bf16.msra.mxu0 0
    %1196 = vmatprep.subr.bf16.mxu0 0
    %1197 = vmatpush1.bf16.msra.mxu0 0
    %1198 = vmatprep.subr.bf16.mxu0 0
    %1199 = vmatpush1.bf16.msra.mxu0 0
    %1200 = vmatprep.subr.bf16.mxu0 0
    %1201 = vmatpush1.bf16.msra.mxu0 0
    %1202 = vmatprep.subr.bf16.mxu0 0
    %1203 = vmatpush1.bf16.msra.mxu0 0
    %1204 = vmatprep.subr.bf16.mxu0 0
    %1205 = vmatpush1.bf16.msra.mxu0 0
    %1206 = vmatprep.subr.bf16.mxu0 0
    %1207 = vmatpush1.bf16.msra.mxu0 0
    %1208 = vmatprep.subr.bf16.mxu0 0
    %1209 = vmatpush1.bf16.msra.mxu0 0
    %1210 = vmatprep.subr.bf16.mxu0 0
    %1211 = vmatpush1.bf16.msra.mxu0 0
    %1212 = vmatprep.subr.bf16.mxu0 0
    %1213 = vmatpush1.bf16.msra.mxu0 0
    %1214 = vmatprep.mubr.bf16.mxu0 0
    %1215 = vmatmul.mubr.bf16.gmra.mrb[0].mxu0 %v1156
    %v1216 = vpop.f32.mrb[0].mxu0
    %v1217 = vadd.f32 0.0, %v1216
    %v1218 = vpop.f32.mrb[0].mxu0
    %v1219 = vpop.f32.mrb[0].mxu0
    %v1220 = vadd.f32 0.0, %v1219
    %v1221 = vpop.f32.mrb[0].mxu0
    %1222 = vmatprep.mubr.bf16.mxu0 0
    %1223 = vmatmul.mubr.bf16.gmra.mrb[0].mxu0 %v1159
    %v1224 = vpop.f32.mrb[0].mxu0
    %v1225 = vadd.f32 0.0, %v1224
    %v1226 = vpop.f32.mrb[0].mxu0
    %v1227 = vpop.f32.mrb[0].mxu0
    %v1228 = vadd.f32 0.0, %v1227
    %v1229 = vpop.f32.mrb[0].mxu0
    %1230 = vmatprep.mubr.bf16.mxu0 0
    %1231 = vmatmul.mubr.bf16.gmra.mrb[0].mxu0 %v1162
    %v1232 = vpop.f32.mrb[0].mxu0
    %v1233 = vadd.f32 0.0, %v1232
    %v1234 = vpop.f32.mrb[0].mxu0
    %v1235 = vpop.f32.mrb[0].mxu0
    %v1236 = vadd.f32 0.0, %v1235
    %v1237 = vpop.f32.mrb[0].mxu0
    %1238 = vmatprep.mubr.bf16.mxu0 0
    %1239 = vmatmul.mubr.bf16.gmra.mrb[0].mxu0 %v1165
    %v1240 = vpop.f32.mrb[0].mxu0
    %v1241 = vadd.f32 0.0, %v1240
    %v1242 = vpop.f32.mrb[0].mxu0
    %v1243 = vpop.f32.mrb[0].mxu0
    %v1244 = vadd.f32 0.0, %v1243
    %v1245 = vpop.f32.mrb[0].mxu0
    %1246 = vmatprep.mubr.bf16.mxu0 0
    %1247 = vmatmul.mubr.bf16.gmra.mrb[0].mxu0 %v1168
    %v1248 = vpop.f32.mrb[0].mxu0
    %v1249 = vadd.f32 0.0, %v1248
    %v1250 = vpop.f32.mrb[0].mxu0
    %v1251 = vpop.f32.mrb[0].mxu0
    %v1252 = vadd.f32 0.0, %v1251
    %v1253 = vpop.f32.mrb[0].mxu0
    %1254 = vmatprep.mubr.bf16.mxu0 0
    %1255 = vmatmul.mubr.bf16.gmra.mrb[0].mxu0 %v1171
    %v1256 = vpop.f32.mrb[0].mxu0
    %v1257 = vadd.f32 0.0, %v1256
    %v1258 = vpop.f32.mrb[0].mxu0
    %v1259 = vpop.f32.mrb[0].mxu0
    %v1260 = vadd.f32 0.0, %v1259
    %v1261 = vpop.f32.mrb[0].mxu0
    %1262 = vmatprep.mubr.bf16.mxu0 0
    %1263 = vmatmul.mubr.bf16.gmra.mrb[0].mxu0 %v1174
    %v1264 = vpop.f32.mrb[0].mxu0
    %v1265 = vadd.f32 0.0, %v1264
    %v1266 = vpop.f32.mrb[0].mxu0
    %v1267 = vpop.f32.mrb[0].mxu0
    %v1268 = vadd.f32 0.0, %v1267
    %v1269 = vpop.f32.mrb[0].mxu0
    %1270 = vmatprep.mubr.bf16.mxu0 0
    %1271 = vmatmul.mubr.bf16.gmra.mrb[0].mxu0 %v1177
    %v1272 = vpop.f32.mrb[0].mxu0
    %v1273 = vadd.f32 0.0, %v1272
    %v1274 = vpop.f32.mrb[0].mxu0
    %v1275 = vpop.f32.mrb[0].mxu0
    %v1276 = vadd.f32 0.0, %v1275
    %v1277 = vpop.f32.mrb[0].mxu0
    %1278 = vdwg.mxu0
    %v1279 = vadd.f32 %v1080, %v1217
    %v1280 = vadd.f32 %v1081, %v1220
    %v1281 = vadd.f32 %v1082, %v1225
    %v1282 = vadd.f32 %v1083, %v1228
    %v1283 = vadd.f32 %v1084, %v1233
    %v1284 = vadd.f32 %v1085, %v1236
    %v1285 = vadd.f32 %v1086, %v1241
    %v1286 = vadd.f32 %v1087, %v1244
    %v1287 = vadd.f32 %v1088, %v1249
    %v1288 = vadd.f32 %v1089, %v1252
    %v1289 = vadd.f32 %v1090, %v1257
    %v1290 = vadd.f32 %v1091, %v1260
    %v1291 = vadd.f32 %v1092, %v1265
    %v1292 = vadd.f32 %v1093, %v1268
    %v1293 = vadd.f32 %v1094, %v1273
    %v1294 = vadd.f32 %v1095, %v1276
    %vm1295 = vcmask 1044480
    %v1296 = vrot.slane %v173, 3
    %v1297 = vrot.slane %v181, 3
    %v1298 = vsel %vm1295, %v1296, %v1297
    %v1299 = vrot.slane %v174, 3
    %v1300 = vrot.slane %v182, 3
    %v1301 = vsel %vm1295, %v1299, %v1300
    %v1302 = vrot.slane %v175, 3
    %v1303 = vrot.slane %v183, 3
    %v1304 = vsel %vm1295, %v1302, %v1303
    %v1305 = vrot.slane %v176, 3
    %v1306 = vrot.slane %v184, 3
    %v1307 = vsel %vm1295, %v1305, %v1306
    %v1308 = vrot.slane %v177, 3
    %v1309 = vrot.slane %v185, 3
    %v1310 = vsel %vm1295, %v1308, %v1309
    %v1311 = vrot.slane %v178, 3
    %v1312 = vrot.slane %v186, 3
    %v1313 = vsel %vm1295, %v1311, %v1312
    %v1314 = vrot.slane %v179, 3
    %v1315 = vrot.slane %v187, 3
    %v1316 = vsel %vm1295, %v1314, %v1315
    %v1317 = vrot.slane %v180, 3
    %v1318 = vrot.slane %v188, 3
    %v1319 = vsel %vm1295, %v1317, %v1318
    %s1320 = scalar_lea.vmem %s1, 12
    %v1321 = vld [vmem:[%s1320] sm:$0x3]
    %v1323 = vsel %vm289, %v1298, 0
    %v1326 = vsel %vm289, %v1301, 0
    %v1329 = vsel %vm289, %v1304, 0
    %v1332 = vsel %vm289, %v1307, 0
    %v1335 = vsel %vm289, %v1310, 0
    %v1338 = vsel %vm289, %v1313, 0
    %v1341 = vsel %vm289, %v1316, 0
    %v1344 = vsel %vm289, %v1319, 0
    %v1347 = vsel %vm314, %v1321, 0
    %1349 = vmatprep.subr.bf16.mxu0 0
    %1350 = vmatpush1.bf16.msra.mxu0 %v1347
    %1351 = vmatprep.subr.bf16.mxu0 0
    %1352 = vmatpush1.bf16.msra.mxu0 0
    %1353 = vmatprep.subr.bf16.mxu0 0
    %1354 = vmatpush1.bf16.msra.mxu0 0
    %1355 = vmatprep.subr.bf16.mxu0 0
    %1356 = vmatpush1.bf16.msra.mxu0 0
    %1357 = vmatprep.subr.bf16.mxu0 0
    %1358 = vmatpush1.bf16.msra.mxu0 0
    %1359 = vmatprep.subr.bf16.mxu0 0
    %1360 = vmatpush1.bf16.msra.mxu0 0
    %1361 = vmatprep.subr.bf16.mxu0 0
    %1362 = vmatpush1.bf16.msra.mxu0 0
    %1363 = vmatprep.subr.bf16.mxu0 0
    %1364 = vmatpush1.bf16.msra.mxu0 0
    %1365 = vmatprep.subr.bf16.mxu0 0
    %1366 = vmatpush1.bf16.msra.mxu0 0
    %1367 = vmatprep.subr.bf16.mxu0 0
    %1368 = vmatpush1.bf16.msra.mxu0 0
    %1369 = vmatprep.subr.bf16.mxu0 0
    %1370 = vmatpush1.bf16.msra.mxu0 0
    %1371 = vmatprep.subr.bf16.mxu0 0
    %1372 = vmatpush1.bf16.msra.mxu0 0
    %1373 = vmatprep.subr.bf16.mxu0 0
    %1374 = vmatpush1.bf16.msra.mxu0 0
    %1375 = vmatprep.subr.bf16.mxu0 0
    %1376 = vmatpush1.bf16.msra.mxu0 0
    %1377 = vmatprep.subr.bf16.mxu0 0
    %1378 = vmatpush1.bf16.msra.mxu0 0
    %1379 = vmatprep.subr.bf16.mxu0 0
    %1380 = vmatpush1.bf16.msra.mxu0 0
    %1381 = vmatprep.mubr.bf16.mxu0 0
    %1382 = vmatmul.mubr.bf16.gmra.mrb[0].mxu0 %v1323
    %v1383 = vpop.f32.mrb[0].mxu0
    %v1384 = vadd.f32 0.0, %v1383
    %v1385 = vpop.f32.mrb[0].mxu0
    %v1386 = vpop.f32.mrb[0].mxu0
    %v1387 = vadd.f32 0.0, %v1386
    %v1388 = vpop.f32.mrb[0].mxu0
    %1389 = vmatprep.mubr.bf16.mxu0 0
    %1390 = vmatmul.mubr.bf16.gmra.mrb[0].mxu0 %v1326
    %v1391 = vpop.f32.mrb[0].mxu0
    %v1392 = vadd.f32 0.0, %v1391
    %v1393 = vpop.f32.mrb[0].mxu0
    %v1394 = vpop.f32.mrb[0].mxu0
    %v1395 = vadd.f32 0.0, %v1394
    %v1396 = vpop.f32.mrb[0].mxu0
    %1397 = vmatprep.mubr.bf16.mxu0 0
    %1398 = vmatmul.mubr.bf16.gmra.mrb[0].mxu0 %v1329
    %v1399 = vpop.f32.mrb[0].mxu0
    %v1400 = vadd.f32 0.0, %v1399
    %v1401 = vpop.f32.mrb[0].mxu0
    %v1402 = vpop.f32.mrb[0].mxu0
    %v1403 = vadd.f32 0.0, %v1402
    %v1404 = vpop.f32.mrb[0].mxu0
    %1405 = vmatprep.mubr.bf16.mxu0 0
    %1406 = vmatmul.mubr.bf16.gmra.mrb[0].mxu0 %v1332
    %v1407 = vpop.f32.mrb[0].mxu0
    %v1408 = vadd.f32 0.0, %v1407
    %v1409 = vpop.f32.mrb[0].mxu0
    %v1410 = vpop.f32.mrb[0].mxu0
    %v1411 = vadd.f32 0.0, %v1410
    %v1412 = vpop.f32.mrb[0].mxu0
    %1413 = vmatprep.mubr.bf16.mxu0 0
    %1414 = vmatmul.mubr.bf16.gmra.mrb[0].mxu0 %v1335
    %v1415 = vpop.f32.mrb[0].mxu0
    %v1416 = vadd.f32 0.0, %v1415
    %v1417 = vpop.f32.mrb[0].mxu0
    %v1418 = vpop.f32.mrb[0].mxu0
    %v1419 = vadd.f32 0.0, %v1418
    %v1420 = vpop.f32.mrb[0].mxu0
    %1421 = vmatprep.mubr.bf16.mxu0 0
    %1422 = vmatmul.mubr.bf16.gmra.mrb[0].mxu0 %v1338
    %v1423 = vpop.f32.mrb[0].mxu0
    %v1424 = vadd.f32 0.0, %v1423
    %v1425 = vpop.f32.mrb[0].mxu0
    %v1426 = vpop.f32.mrb[0].mxu0
    %v1427 = vadd.f32 0.0, %v1426
    %v1428 = vpop.f32.mrb[0].mxu0
    %1429 = vmatprep.mubr.bf16.mxu0 0
    %1430 = vmatmul.mubr.bf16.gmra.mrb[0].mxu0 %v1341
    %v1431 = vpop.f32.mrb[0].mxu0
    %v1432 = vadd.f32 0.0, %v1431
    %v1433 = vpop.f32.mrb[0].mxu0
    %v1434 = vpop.f32.mrb[0].mxu0
    %v1435 = vadd.f32 0.0, %v1434
    %v1436 = vpop.f32.mrb[0].mxu0
    %1437 = vmatprep.mubr.bf16.mxu0 0
    %1438 = vmatmul.mubr.bf16.gmra.mrb[0].mxu0 %v1344
    %v1439 = vpop.f32.mrb[0].mxu0
    %v1440 = vadd.f32 0.0, %v1439
    %v1441 = vpop.f32.mrb[0].mxu0
    %v1442 = vpop.f32.mrb[0].mxu0
    %v1443 = vadd.f32 0.0, %v1442
    %v1444 = vpop.f32.mrb[0].mxu0
    %1445 = vdwg.mxu0
    %v1446 = vadd.f32 %v1279, %v1384
    %v1447 = vadd.f32 %v1280, %v1387
    %v1448 = vadd.f32 %v1281, %v1392
    %v1449 = vadd.f32 %v1282, %v1395
    %v1450 = vadd.f32 %v1283, %v1400
    %v1451 = vadd.f32 %v1284, %v1403
    %v1452 = vadd.f32 %v1285, %v1408
    %v1453 = vadd.f32 %v1286, %v1411
    %v1454 = vadd.f32 %v1287, %v1416
    %v1455 = vadd.f32 %v1288, %v1419
    %v1456 = vadd.f32 %v1289, %v1424
    %v1457 = vadd.f32 %v1290, %v1427
    %v1458 = vadd.f32 %v1291, %v1432
    %v1459 = vadd.f32 %v1292, %v1435
    %v1460 = vadd.f32 %v1293, %v1440
    %v1461 = vadd.f32 %v1294, %v1443
    %v1462 = vld [vmem:[%s2] sm:$0x1]
    %v1464 = vlaneseq
    %v1465 = vshrl.u32 %v1464, 7
    %v1466 = vsub.s32 0, %v1465
    %v1467 = vrot.slane %v1462, %v1466
    %v1469 = vadd.f32 %v1446, %v1467
    %v1470 = vadd.f32 %v1447, %v1467
    %v1471 = vadd.f32 %v1448, %v1467
    %v1472 = vadd.f32 %v1449, %v1467
    %v1473 = vadd.f32 %v1450, %v1467
    %v1474 = vadd.f32 %v1451, %v1467
    %v1475 = vadd.f32 %v1452, %v1467
    %v1476 = vadd.f32 %v1453, %v1467
    %v1477 = vadd.f32 %v1454, %v1467
    %v1478 = vadd.f32 %v1455, %v1467
    %v1479 = vadd.f32 %v1456, %v1467
    %v1480 = vadd.f32 %v1457, %v1467
    %v1481 = vadd.f32 %v1458, %v1467
    %v1482 = vadd.f32 %v1459, %v1467
    %v1483 = vadd.f32 %v1460, %v1467
    %v1484 = vadd.f32 %v1461, %v1467
    %v1485 = vmax.f32 %v1469, 0.0
    %v1486 = vmax.f32 %v1470, 0.0
    %v1487 = vmax.f32 %v1471, 0.0
    %v1488 = vmax.f32 %v1472, 0.0
    %v1489 = vmax.f32 %v1473, 0.0
    %v1490 = vmax.f32 %v1474, 0.0
    %v1491 = vmax.f32 %v1475, 0.0
    %v1492 = vmax.f32 %v1476, 0.0
    %v1493 = vmax.f32 %v1477, 0.0
    %v1494 = vmax.f32 %v1478, 0.0
    %v1495 = vmax.f32 %v1479, 0.0
    %v1496 = vmax.f32 %v1480, 0.0
    %v1497 = vmax.f32 %v1481, 0.0
    %v1498 = vmax.f32 %v1482, 0.0
    %v1499 = vmax.f32 %v1483, 0.0
    %v1500 = vmax.f32 %v1484, 0.0
    %v1501 = vpack.c.bf16 %v1486, %v1485
    %v1502 = vpack.c.bf16 %v1488, %v1487
    %v1503 = vpack.c.bf16 %v1490, %v1489
    %v1504 = vpack.c.bf16 %v1492, %v1491
    %v1505 = vpack.c.bf16 %v1494, %v1493
    %v1506 = vpack.c.bf16 %v1496, %v1495
    %v1507 = vpack.c.bf16 %v1498, %v1497
    %v1508 = vpack.c.bf16 %v1500, %v1499
    %v1517 = vrot.slane %v1501, 7
    %v1518 = vrot.slane %v1502, 7
    %v1519 = vrot.slane %v1503, 7
    %v1520 = vrot.slane %v1504, 7
    %v1521 = vrot.slane %v1505, 7
    %v1522 = vrot.slane %v1506, 7
    %v1523 = vrot.slane %v1507, 7
    %v1524 = vrot.slane %v1508, 7
    %vm1525 = vcmask 1040384
    %v1528 = vsel %vm1525, 0, %v1517
    %v1531 = vsel %vm1525, 0, %v1518
    %v1534 = vsel %vm1525, 0, %v1519
    %v1537 = vsel %vm1525, 0, %v1520
    %v1540 = vsel %vm1525, 0, %v1521
    %v1543 = vsel %vm1525, 0, %v1522
    %v1546 = vsel %vm1525, 0, %v1523
    %v1549 = vsel %vm1525, 0, %v1524
    %v1551 = vsel %vm1525, %v1517, 0
    %v1552 = vsel %vm1525, %v1518, 0
    %v1553 = vsel %vm1525, %v1519, 0
    %v1554 = vsel %vm1525, %v1520, 0
    %v1555 = vsel %vm1525, %v1521, 0
    %v1556 = vsel %vm1525, %v1522, 0
    %v1557 = vsel %vm1525, %v1523, 0
    %v1558 = vsel %vm1525, %v1524, 0
    %v1559 = vld [vmem:[%s3] sm:$0xf]
    %v1560 = vld [vmem:[%s3 + $0x4] sm:$0xf]
    %v1561 = vld [vmem:[%s3 + $0x8] sm:$0xf]
    %v1562 = vld [vmem:[%s3 + $0xc] sm:$0xf]
    %v1563 = vld [vmem:[%s3 + $0x10] sm:$0xf]
    %v1564 = vld [vmem:[%s3 + $0x14] sm:$0xf]
    %v1565 = vld [vmem:[%s3 + $0x18] sm:$0xf]
    %v1566 = vld [vmem:[%s3 + $0x1c] sm:$0xf]
    %v1567 = vld [vmem:[%s3 + $0x20] sm:$0xf]
    %v1568 = vld [vmem:[%s3 + $0x24] sm:$0xf]
    %v1569 = vld [vmem:[%s3 + $0x28] sm:$0xf]
    %v1570 = vld [vmem:[%s3 + $0x2c] sm:$0xf]
    %v1571 = vld [vmem:[%s3 + $0x30] sm:$0xf]
    %v1572 = vld [vmem:[%s3 + $0x34] sm:$0xf]
    %v1573 = vld [vmem:[%s3 + $0x38] sm:$0xf]
    %v1574 = vld [vmem:[%s3 + $0x3c] sm:$0xf]
    %v1575 = vshrl.u32 %v1528, 16
    %v1577 = vshll.u32 %v1528, 16
    %v1579 = vrot.slane %v1577, 1
    %v1580 = vor.u32 %v1575, %v1579
    %v1581 = vshll.u32 %v1551, 16
    %v1583 = vrot.slane %v1581, 1
    %v1584 = vsel %vm190, %v1580, %v1583
    %v1585 = vshrl.u32 %v1531, 16
    %v1587 = vshll.u32 %v1531, 16
    %v1589 = vrot.slane %v1587, 1
    %v1590 = vor.u32 %v1585, %v1589
    %v1591 = vshll.u32 %v1552, 16
    %v1593 = vrot.slane %v1591, 1
    %v1594 = vsel %vm190, %v1590, %v1593
    %v1595 = vshrl.u32 %v1534, 16
    %v1597 = vshll.u32 %v1534, 16
    %v1599 = vrot.slane %v1597, 1
    %v1600 = vor.u32 %v1595, %v1599
    %v1601 = vshll.u32 %v1553, 16
    %v1603 = vrot.slane %v1601, 1
    %v1604 = vsel %vm190, %v1600, %v1603
    %v1605 = vshrl.u32 %v1537, 16
    %v1607 = vshll.u32 %v1537, 16
    %v1609 = vrot.slane %v1607, 1
    %v1610 = vor.u32 %v1605, %v1609
    %v1611 = vshll.u32 %v1554, 16
    %v1613 = vrot.slane %v1611, 1
    %v1614 = vsel %vm190, %v1610, %v1613
    %v1615 = vshrl.u32 %v1540, 16
    %v1617 = vshll.u32 %v1540, 16
    %v1619 = vrot.slane %v1617, 1
    %v1620 = vor.u32 %v1615, %v1619
    %v1621 = vshll.u32 %v1555, 16
    %v1623 = vrot.slane %v1621, 1
    %v1624 = vsel %vm190, %v1620, %v1623
    %v1625 = vshrl.u32 %v1543, 16
    %v1627 = vshll.u32 %v1543, 16
    %v1629 = vrot.slane %v1627, 1
    %v1630 = vor.u32 %v1625, %v1629
    %v1631 = vshll.u32 %v1556, 16
    %v1633 = vrot.slane %v1631, 1
    %v1634 = vsel %vm190, %v1630, %v1633
    %v1635 = vshrl.u32 %v1546, 16
    %v1637 = vshll.u32 %v1546, 16
    %v1639 = vrot.slane %v1637, 1
    %v1640 = vor.u32 %v1635, %v1639
    %v1641 = vshll.u32 %v1557, 16
    %v1643 = vrot.slane %v1641, 1
    %v1644 = vsel %vm190, %v1640, %v1643
    %v1645 = vshrl.u32 %v1549, 16
    %v1647 = vshll.u32 %v1549, 16
    %v1649 = vrot.slane %v1647, 1
    %v1650 = vor.u32 %v1645, %v1649
    %v1651 = vshll.u32 %v1558, 16
    %v1653 = vrot.slane %v1651, 1
    %v1654 = vsel %vm190, %v1650, %v1653
    %s1663 = scalar_lea.vmem %s3, 64
    %v1664 = vld [vmem:[%s1663] sm:$0xf]
    %v1665 = vld [vmem:[%s1663 + $0x4] sm:$0xf]
    %v1666 = vld [vmem:[%s1663 + $0x8] sm:$0xf]
    %v1667 = vld [vmem:[%s1663 + $0xc] sm:$0xf]
    %v1668 = vld [vmem:[%s1663 + $0x10] sm:$0xf]
    %v1669 = vld [vmem:[%s1663 + $0x14] sm:$0xf]
    %v1670 = vld [vmem:[%s1663 + $0x18] sm:$0xf]
    %v1671 = vld [vmem:[%s1663 + $0x1c] sm:$0xf]
    %v1672 = vld [vmem:[%s1663 + $0x20] sm:$0xf]
    %v1673 = vld [vmem:[%s1663 + $0x24] sm:$0xf]
    %v1674 = vld [vmem:[%s1663 + $0x28] sm:$0xf]
    %v1675 = vld [vmem:[%s1663 + $0x2c] sm:$0xf]
    %v1676 = vld [vmem:[%s1663 + $0x30] sm:$0xf]
    %v1677 = vld [vmem:[%s1663 + $0x34] sm:$0xf]
    %v1678 = vld [vmem:[%s1663 + $0x38] sm:$0xf]
    %v1679 = vld [vmem:[%s1663 + $0x3c] sm:$0xf]
    %v1696 = vunpack.c.l.b16 %v1664
    %v1697 = vunpack.c.l.b16 %v1665
    %v1698 = vunpack.c.l.b16 %v1666
    %v1699 = vunpack.c.l.b16 %v1667
    %v1700 = vunpack.c.l.b16 %v1668
    %v1701 = vunpack.c.l.b16 %v1669
    %v1702 = vunpack.c.l.b16 %v1670
    %v1703 = vunpack.c.l.b16 %v1671
    %v1704 = vunpack.c.l.b16 %v1672
    %v1705 = vunpack.c.l.b16 %v1673
    %v1706 = vunpack.c.l.b16 %v1674
    %v1707 = vunpack.c.l.b16 %v1675
    %v1708 = vunpack.c.l.b16 %v1676
    %v1709 = vunpack.c.l.b16 %v1677
    %v1710 = vunpack.c.l.b16 %v1678
    %v1711 = vunpack.c.l.b16 %v1679
    %v1712 = vpack.c.b16 %v1697, %v1696
    %v1713 = vpack.c.b16 %v1699, %v1698
    %v1714 = vpack.c.b16 %v1701, %v1700
    %v1715 = vpack.c.b16 %v1703, %v1702
    %v1716 = vpack.c.b16 %v1705, %v1704
    %v1717 = vpack.c.b16 %v1707, %v1706
    %v1718 = vpack.c.b16 %v1709, %v1708
    %v1719 = vpack.c.b16 %v1711, %v1710
    %1728 = vmatprep.subr.bf16.mxu0 0
    %1729 = vmatpush1.bf16.msra.mxu0 %v1712
    %1730 = vmatprep.subr.bf16.mxu0 0
    %1731 = vmatpush1.bf16.msra.mxu0 %v1713
    %1732 = vmatprep.subr.bf16.mxu0 0
    %1733 = vmatpush1.bf16.msra.mxu0 %v1714
    %1734 = vmatprep.subr.bf16.mxu0 0
    %1735 = vmatpush1.bf16.msra.mxu0 %v1715
    %1736 = vmatprep.subr.bf16.mxu0 0
    %1737 = vmatpush1.bf16.msra.mxu0 %v1716
    %1738 = vmatprep.subr.bf16.mxu0 0
    %1739 = vmatpush1.bf16.msra.mxu0 %v1717
    %1740 = vmatprep.subr.bf16.mxu0 0
    %1741 = vmatpush1.bf16.msra.mxu0 %v1718
    %1742 = vmatprep.subr.bf16.mxu0 0
    %1743 = vmatpush1.bf16.msra.mxu0 %v1719
    %1744 = vmatprep.subr.bf16.mxu0 0
    %1745 = vmatpush1.bf16.msra.mxu0 0
    %1746 = vmatprep.subr.bf16.mxu0 0
    %1747 = vmatpush1.bf16.msra.mxu0 0
    %1748 = vmatprep.subr.bf16.mxu0 0
    %1749 = vmatpush1.bf16.msra.mxu0 0
    %1750 = vmatprep.subr.bf16.mxu0 0
    %1751 = vmatpush1.bf16.msra.mxu0 0
    %1752 = vmatprep.subr.bf16.mxu0 0
    %1753 = vmatpush1.bf16.msra.mxu0 0
    %1754 = vmatprep.subr.bf16.mxu0 0
    %1755 = vmatpush1.bf16.msra.mxu0 0
    %1756 = vmatprep.subr.bf16.mxu0 0
    %1757 = vmatpush1.bf16.msra.mxu0 0
    %1758 = vmatprep.subr.bf16.mxu0 0
    %1759 = vmatpush1.bf16.msra.mxu0 0
    %1760 = vmatprep.mubr.bf16.mxu0 0
    %1761 = vmatmul.mubr.bf16.gmra.mrb[0].mxu0 %v1584
    %v1762 = vpop.f32.mrb[0].mxu0
    %v1763 = vadd.f32 0.0, %v1762
    %v1764 = vpop.f32.mrb[0].mxu0
    %v1765 = vpop.f32.mrb[0].mxu0
    %v1766 = vadd.f32 0.0, %v1765
    %v1767 = vpop.f32.mrb[0].mxu0
    %1768 = vmatprep.mubr.bf16.mxu0 0
    %1769 = vmatmul.mubr.bf16.gmra.mrb[0].mxu0 %v1594
    %v1770 = vpop.f32.mrb[0].mxu0
    %v1771 = vadd.f32 0.0, %v1770
    %v1772 = vpop.f32.mrb[0].mxu0
    %v1773 = vpop.f32.mrb[0].mxu0
    %v1774 = vadd.f32 0.0, %v1773
    %v1775 = vpop.f32.mrb[0].mxu0
    %1776 = vmatprep.mubr.bf16.mxu0 0
    %1777 = vmatmul.mubr.bf16.gmra.mrb[0].mxu0 %v1604
    %v1778 = vpop.f32.mrb[0].mxu0
    %v1779 = vadd.f32 0.0, %v1778
    %v1780 = vpop.f32.mrb[0].mxu0
    %v1781 = vpop.f32.mrb[0].mxu0
    %v1782 = vadd.f32 0.0, %v1781
    %v1783 = vpop.f32.mrb[0].mxu0
    %1784 = vmatprep.mubr.bf16.mxu0 0
    %1785 = vmatmul.mubr.bf16.gmra.mrb[0].mxu0 %v1614
    %v1786 = vpop.f32.mrb[0].mxu0
    %v1787 = vadd.f32 0.0, %v1786
    %v1788 = vpop.f32.mrb[0].mxu0
    %v1789 = vpop.f32.mrb[0].mxu0
    %v1790 = vadd.f32 0.0, %v1789
    %v1791 = vpop.f32.mrb[0].mxu0
    %1792 = vmatprep.mubr.bf16.mxu0 0
    %1793 = vmatmul.mubr.bf16.gmra.mrb[0].mxu0 %v1624
    %v1794 = vpop.f32.mrb[0].mxu0
    %v1795 = vadd.f32 0.0, %v1794
    %v1796 = vpop.f32.mrb[0].mxu0
    %v1797 = vpop.f32.mrb[0].mxu0
    %v1798 = vadd.f32 0.0, %v1797
    %v1799 = vpop.f32.mrb[0].mxu0
    %1800 = vmatprep.mubr.bf16.mxu0 0
    %1801 = vmatmul.mubr.bf16.gmra.mrb[0].mxu0 %v1634
    %v1802 = vpop.f32.mrb[0].mxu0
    %v1803 = vadd.f32 0.0, %v1802
    %v1804 = vpop.f32.mrb[0].mxu0
    %v1805 = vpop.f32.mrb[0].mxu0
    %v1806 = vadd.f32 0.0, %v1805
    %v1807 = vpop.f32.mrb[0].mxu0
    %1808 = vmatprep.mubr.bf16.mxu0 0
    %1809 = vmatmul.mubr.bf16.gmra.mrb[0].mxu0 %v1644
    %v1810 = vpop.f32.mrb[0].mxu0
    %v1811 = vadd.f32 0.0, %v1810
    %v1812 = vpop.f32.mrb[0].mxu0
    %v1813 = vpop.f32.mrb[0].mxu0
    %v1814 = vadd.f32 0.0, %v1813
    %v1815 = vpop.f32.mrb[0].mxu0
    %1816 = vmatprep.mubr.bf16.mxu0 0
    %1817 = vmatmul.mubr.bf16.gmra.mrb[0].mxu0 %v1654
    %v1818 = vpop.f32.mrb[0].mxu0
    %v1819 = vadd.f32 0.0, %v1818
    %v1820 = vpop.f32.mrb[0].mxu0
    %v1821 = vpop.f32.mrb[0].mxu0
    %v1822 = vadd.f32 0.0, %v1821
    %v1823 = vpop.f32.mrb[0].mxu0
    %1824 = vdwg.mxu0
    %v1841 = vunpack.c.l.b16 %v1559
    %v1842 = vunpack.c.l.b16 %v1560
    %v1843 = vunpack.c.l.b16 %v1561
    %v1844 = vunpack.c.l.b16 %v1562
    %v1845 = vunpack.c.l.b16 %v1563
    %v1846 = vunpack.c.l.b16 %v1564
    %v1847 = vunpack.c.l.b16 %v1565
    %v1848 = vunpack.c.l.b16 %v1566
    %v1849 = vunpack.c.l.b16 %v1567
    %v1850 = vunpack.c.l.b16 %v1568
    %v1851 = vunpack.c.l.b16 %v1569
    %v1852 = vunpack.c.l.b16 %v1570
    %v1853 = vunpack.c.l.b16 %v1571
    %v1854 = vunpack.c.l.b16 %v1572
    %v1855 = vunpack.c.l.b16 %v1573
    %v1856 = vunpack.c.l.b16 %v1574
    %v1857 = vpack.c.b16 %v1842, %v1841
    %v1858 = vpack.c.b16 %v1844, %v1843
    %v1859 = vpack.c.b16 %v1846, %v1845
    %v1860 = vpack.c.b16 %v1848, %v1847
    %v1861 = vpack.c.b16 %v1850, %v1849
    %v1862 = vpack.c.b16 %v1852, %v1851
    %v1863 = vpack.c.b16 %v1854, %v1853
    %v1864 = vpack.c.b16 %v1856, %v1855
    %1873 = vmatprep.subr.bf16.mxu0 0
    %1874 = vmatpush1.bf16.msra.mxu0 %v1857
    %1875 = vmatprep.subr.bf16.mxu0 0
    %1876 = vmatpush1.bf16.msra.mxu0 %v1858
    %1877 = vmatprep.subr.bf16.mxu0 0
    %1878 = vmatpush1.bf16.msra.mxu0 %v1859
    %1879 = vmatprep.subr.bf16.mxu0 0
    %1880 = vmatpush1.bf16.msra.mxu0 %v1860
    %1881 = vmatprep.subr.bf16.mxu0 0
    %1882 = vmatpush1.bf16.msra.mxu0 %v1861
    %1883 = vmatprep.subr.bf16.mxu0 0
    %1884 = vmatpush1.bf16.msra.mxu0 %v1862
    %1885 = vmatprep.subr.bf16.mxu0 0
    %1886 = vmatpush1.bf16.msra.mxu0 %v1863
    %1887 = vmatprep.subr.bf16.mxu0 0
    %1888 = vmatpush1.bf16.msra.mxu0 %v1864
    %1889 = vmatprep.subr.bf16.mxu0 0
    %1890 = vmatpush1.bf16.msra.mxu0 0
    %1891 = vmatprep.subr.bf16.mxu0 0
    %1892 = vmatpush1.bf16.msra.mxu0 0
    %1893 = vmatprep.subr.bf16.mxu0 0
    %1894 = vmatpush1.bf16.msra.mxu0 0
    %1895 = vmatprep.subr.bf16.mxu0 0
    %1896 = vmatpush1.bf16.msra.mxu0 0
    %1897 = vmatprep.subr.bf16.mxu0 0
    %1898 = vmatpush1.bf16.msra.mxu0 0
    %1899 = vmatprep.subr.bf16.mxu0 0
    %1900 = vmatpush1.bf16.msra.mxu0 0
    %1901 = vmatprep.subr.bf16.mxu0 0
    %1902 = vmatpush1.bf16.msra.mxu0 0
    %1903 = vmatprep.subr.bf16.mxu0 0
    %1904 = vmatpush1.bf16.msra.mxu0 0
    %1905 = vmatprep.mubr.bf16.mxu0 0
    %1906 = vmatmul.mubr.bf16.gmra.mrb[0].mxu0 %v1528
    %v1907 = vpop.f32.mrb[0].mxu0
    %v1908 = vadd.f32 %v1763, %v1907
    %v1909 = vpop.f32.mrb[0].mxu0
    %v1910 = vpop.f32.mrb[0].mxu0
    %v1911 = vadd.f32 %v1766, %v1910
    %v1912 = vpop.f32.mrb[0].mxu0
    %1913 = vmatprep.mubr.bf16.mxu0 0
    %1914 = vmatmul.mubr.bf16.gmra.mrb[0].mxu0 %v1531
    %v1915 = vpop.f32.mrb[0].mxu0
    %v1916 = vadd.f32 %v1771, %v1915
    %v1917 = vpop.f32.mrb[0].mxu0
    %v1918 = vpop.f32.mrb[0].mxu0
    %v1919 = vadd.f32 %v1774, %v1918
    %v1920 = vpop.f32.mrb[0].mxu0
    %1921 = vmatprep.mubr.bf16.mxu0 0
    %1922 = vmatmul.mubr.bf16.gmra.mrb[0].mxu0 %v1534
    %v1923 = vpop.f32.mrb[0].mxu0
    %v1924 = vadd.f32 %v1779, %v1923
    %v1925 = vpop.f32.mrb[0].mxu0
    %v1926 = vpop.f32.mrb[0].mxu0
    %v1927 = vadd.f32 %v1782, %v1926
    %v1928 = vpop.f32.mrb[0].mxu0
    %1929 = vmatprep.mubr.bf16.mxu0 0
    %1930 = vmatmul.mubr.bf16.gmra.mrb[0].mxu0 %v1537
    %v1931 = vpop.f32.mrb[0].mxu0
    %v1932 = vadd.f32 %v1787, %v1931
    %v1933 = vpop.f32.mrb[0].mxu0
    %v1934 = vpop.f32.mrb[0].mxu0
    %v1935 = vadd.f32 %v1790, %v1934
    %v1936 = vpop.f32.mrb[0].mxu0
    %1937 = vmatprep.mubr.bf16.mxu0 0
    %1938 = vmatmul.mubr.bf16.gmra.mrb[0].mxu0 %v1540
    %v1939 = vpop.f32.mrb[0].mxu0
    %v1940 = vadd.f32 %v1795, %v1939
    %v1941 = vpop.f32.mrb[0].mxu0
    %v1942 = vpop.f32.mrb[0].mxu0
    %v1943 = vadd.f32 %v1798, %v1942
    %v1944 = vpop.f32.mrb[0].mxu0
    %1945 = vmatprep.mubr.bf16.mxu0 0
    %1946 = vmatmul.mubr.bf16.gmra.mrb[0].mxu0 %v1543
    %v1947 = vpop.f32.mrb[0].mxu0
    %v1948 = vadd.f32 %v1803, %v1947
    %v1949 = vpop.f32.mrb[0].mxu0
    %v1950 = vpop.f32.mrb[0].mxu0
    %v1951 = vadd.f32 %v1806, %v1950
    %v1952 = vpop.f32.mrb[0].mxu0
    %1953 = vmatprep.mubr.bf16.mxu0 0
    %1954 = vmatmul.mubr.bf16.gmra.mrb[0].mxu0 %v1546
    %v1955 = vpop.f32.mrb[0].mxu0
    %v1956 = vadd.f32 %v1811, %v1955
    %v1957 = vpop.f32.mrb[0].mxu0
    %v1958 = vpop.f32.mrb[0].mxu0
    %v1959 = vadd.f32 %v1814, %v1958
    %v1960 = vpop.f32.mrb[0].mxu0
    %1961 = vmatprep.mubr.bf16.mxu0 0
    %1962 = vmatmul.mubr.bf16.gmra.mrb[0].mxu0 %v1549
    %v1963 = vpop.f32.mrb[0].mxu0
    %v1964 = vadd.f32 %v1819, %v1963
    %v1965 = vpop.f32.mrb[0].mxu0
    %v1966 = vpop.f32.mrb[0].mxu0
    %v1967 = vadd.f32 %v1822, %v1966
    %v1968 = vpop.f32.mrb[0].mxu0
    %1969 = vdwg.mxu0
    %v1986 = vrot.slane %v1528, 1
    %v1987 = vrot.slane %v1551, 1
    %v1988 = vsel %vm547, %v1986, %v1987
    %v1989 = vrot.slane %v1531, 1
    %v1990 = vrot.slane %v1552, 1
    %v1991 = vsel %vm547, %v1989, %v1990
    %v1992 = vrot.slane %v1534, 1
    %v1993 = vrot.slane %v1553, 1
    %v1994 = vsel %vm547, %v1992, %v1993
    %v1995 = vrot.slane %v1537, 1
    %v1996 = vrot.slane %v1554, 1
    %v1997 = vsel %vm547, %v1995, %v1996
    %v1998 = vrot.slane %v1540, 1
    %v1999 = vrot.slane %v1555, 1
    %v2000 = vsel %vm547, %v1998, %v1999
    %v2001 = vrot.slane %v1543, 1
    %v2002 = vrot.slane %v1556, 1
    %v2003 = vsel %vm547, %v2001, %v2002
    %v2004 = vrot.slane %v1546, 1
    %v2005 = vrot.slane %v1557, 1
    %v2006 = vsel %vm547, %v2004, %v2005
    %v2007 = vrot.slane %v1549, 1
    %v2008 = vrot.slane %v1558, 1
    %v2009 = vsel %vm547, %v2007, %v2008
    %s2018 = scalar_lea.vmem %s3, 128
    %v2019 = vld [vmem:[%s2018] sm:$0xf]
    %v2020 = vld [vmem:[%s2018 + $0x4] sm:$0xf]
    %v2021 = vld [vmem:[%s2018 + $0x8] sm:$0xf]
    %v2022 = vld [vmem:[%s2018 + $0xc] sm:$0xf]
    %v2023 = vld [vmem:[%s2018 + $0x10] sm:$0xf]
    %v2024 = vld [vmem:[%s2018 + $0x14] sm:$0xf]
    %v2025 = vld [vmem:[%s2018 + $0x18] sm:$0xf]
    %v2026 = vld [vmem:[%s2018 + $0x1c] sm:$0xf]
    %v2027 = vld [vmem:[%s2018 + $0x20] sm:$0xf]
    %v2028 = vld [vmem:[%s2018 + $0x24] sm:$0xf]
    %v2029 = vld [vmem:[%s2018 + $0x28] sm:$0xf]
    %v2030 = vld [vmem:[%s2018 + $0x2c] sm:$0xf]
    %v2031 = vld [vmem:[%s2018 + $0x30] sm:$0xf]
    %v2032 = vld [vmem:[%s2018 + $0x34] sm:$0xf]
    %v2033 = vld [vmem:[%s2018 + $0x38] sm:$0xf]
    %v2034 = vld [vmem:[%s2018 + $0x3c] sm:$0xf]
    %v2051 = vunpack.c.l.b16 %v2019
    %v2052 = vunpack.c.l.b16 %v2020
    %v2053 = vunpack.c.l.b16 %v2021
    %v2054 = vunpack.c.l.b16 %v2022
    %v2055 = vunpack.c.l.b16 %v2023
    %v2056 = vunpack.c.l.b16 %v2024
    %v2057 = vunpack.c.l.b16 %v2025
    %v2058 = vunpack.c.l.b16 %v2026
    %v2059 = vunpack.c.l.b16 %v2027
    %v2060 = vunpack.c.l.b16 %v2028
    %v2061 = vunpack.c.l.b16 %v2029
    %v2062 = vunpack.c.l.b16 %v2030
    %v2063 = vunpack.c.l.b16 %v2031
    %v2064 = vunpack.c.l.b16 %v2032
    %v2065 = vunpack.c.l.b16 %v2033
    %v2066 = vunpack.c.l.b16 %v2034
    %v2067 = vpack.c.b16 %v2052, %v2051
    %v2068 = vpack.c.b16 %v2054, %v2053
    %v2069 = vpack.c.b16 %v2056, %v2055
    %v2070 = vpack.c.b16 %v2058, %v2057
    %v2071 = vpack.c.b16 %v2060, %v2059
    %v2072 = vpack.c.b16 %v2062, %v2061
    %v2073 = vpack.c.b16 %v2064, %v2063
    %v2074 = vpack.c.b16 %v2066, %v2065
    %2083 = vmatprep.subr.bf16.mxu0 0
    %2084 = vmatpush1.bf16.msra.mxu0 %v2067
    %2085 = vmatprep.subr.bf16.mxu0 0
    %2086 = vmatpush1.bf16.msra.mxu0 %v2068
    %2087 = vmatprep.subr.bf16.mxu0 0
    %2088 = vmatpush1.bf16.msra.mxu0 %v2069
    %2089 = vmatprep.subr.bf16.mxu0 0
    %2090 = vmatpush1.bf16.msra.mxu0 %v2070
    %2091 = vmatprep.subr.bf16.mxu0 0
    %2092 = vmatpush1.bf16.msra.mxu0 %v2071
    %2093 = vmatprep.subr.bf16.mxu0 0
    %2094 = vmatpush1.bf16.msra.mxu0 %v2072
    %2095 = vmatprep.subr.bf16.mxu0 0
    %2096 = vmatpush1.bf16.msra.mxu0 %v2073
    %2097 = vmatprep.subr.bf16.mxu0 0
    %2098 = vmatpush1.bf16.msra.mxu0 %v2074
    %2099 = vmatprep.subr.bf16.mxu0 0
    %2100 = vmatpush1.bf16.msra.mxu0 0
    %2101 = vmatprep.subr.bf16.mxu0 0
    %2102 = vmatpush1.bf16.msra.mxu0 0
    %2103 = vmatprep.subr.bf16.mxu0 0
    %2104 = vmatpush1.bf16.msra.mxu0 0
    %2105 = vmatprep.subr.bf16.mxu0 0
    %2106 = vmatpush1.bf16.msra.mxu0 0
    %2107 = vmatprep.subr.bf16.mxu0 0
    %2108 = vmatpush1.bf16.msra.mxu0 0
    %2109 = vmatprep.subr.bf16.mxu0 0
    %2110 = vmatpush1.bf16.msra.mxu0 0
    %2111 = vmatprep.subr.bf16.mxu0 0
    %2112 = vmatpush1.bf16.msra.mxu0 0
    %2113 = vmatprep.subr.bf16.mxu0 0
    %2114 = vmatpush1.bf16.msra.mxu0 0
    %2115 = vmatprep.mubr.bf16.mxu0 0
    %2116 = vmatmul.mubr.bf16.gmra.mrb[0].mxu0 %v1988
    %v2117 = vpop.f32.mrb[0].mxu0
    %v2118 = vadd.f32 0.0, %v2117
    %v2119 = vpop.f32.mrb[0].mxu0
    %v2120 = vpop.f32.mrb[0].mxu0
    %v2121 = vadd.f32 0.0, %v2120
    %v2122 = vpop.f32.mrb[0].mxu0
    %2123 = vmatprep.mubr.bf16.mxu0 0
    %2124 = vmatmul.mubr.bf16.gmra.mrb[0].mxu0 %v1991
    %v2125 = vpop.f32.mrb[0].mxu0
    %v2126 = vadd.f32 0.0, %v2125
    %v2127 = vpop.f32.mrb[0].mxu0
    %v2128 = vpop.f32.mrb[0].mxu0
    %v2129 = vadd.f32 0.0, %v2128
    %v2130 = vpop.f32.mrb[0].mxu0
    %2131 = vmatprep.mubr.bf16.mxu0 0
    %2132 = vmatmul.mubr.bf16.gmra.mrb[0].mxu0 %v1994
    %v2133 = vpop.f32.mrb[0].mxu0
    %v2134 = vadd.f32 0.0, %v2133
    %v2135 = vpop.f32.mrb[0].mxu0
    %v2136 = vpop.f32.mrb[0].mxu0
    %v2137 = vadd.f32 0.0, %v2136
    %v2138 = vpop.f32.mrb[0].mxu0
    %2139 = vmatprep.mubr.bf16.mxu0 0
    %2140 = vmatmul.mubr.bf16.gmra.mrb[0].mxu0 %v1997
    %v2141 = vpop.f32.mrb[0].mxu0
    %v2142 = vadd.f32 0.0, %v2141
    %v2143 = vpop.f32.mrb[0].mxu0
    %v2144 = vpop.f32.mrb[0].mxu0
    %v2145 = vadd.f32 0.0, %v2144
    %v2146 = vpop.f32.mrb[0].mxu0
    %2147 = vmatprep.mubr.bf16.mxu0 0
    %2148 = vmatmul.mubr.bf16.gmra.mrb[0].mxu0 %v2000
    %v2149 = vpop.f32.mrb[0].mxu0
    %v2150 = vadd.f32 0.0, %v2149
    %v2151 = vpop.f32.mrb[0].mxu0
    %v2152 = vpop.f32.mrb[0].mxu0
    %v2153 = vadd.f32 0.0, %v2152
    %v2154 = vpop.f32.mrb[0].mxu0
    %2155 = vmatprep.mubr.bf16.mxu0 0
    %2156 = vmatmul.mubr.bf16.gmra.mrb[0].mxu0 %v2003
    %v2157 = vpop.f32.mrb[0].mxu0
    %v2158 = vadd.f32 0.0, %v2157
    %v2159 = vpop.f32.mrb[0].mxu0
    %v2160 = vpop.f32.mrb[0].mxu0
    %v2161 = vadd.f32 0.0, %v2160
    %v2162 = vpop.f32.mrb[0].mxu0
    %2163 = vmatprep.mubr.bf16.mxu0 0
    %2164 = vmatmul.mubr.bf16.gmra.mrb[0].mxu0 %v2006
    %v2165 = vpop.f32.mrb[0].mxu0
    %v2166 = vadd.f32 0.0, %v2165
    %v2167 = vpop.f32.mrb[0].mxu0
    %v2168 = vpop.f32.mrb[0].mxu0
    %v2169 = vadd.f32 0.0, %v2168
    %v2170 = vpop.f32.mrb[0].mxu0
    %2171 = vmatprep.mubr.bf16.mxu0 0
    %2172 = vmatmul.mubr.bf16.gmra.mrb[0].mxu0 %v2009
    %v2173 = vpop.f32.mrb[0].mxu0
    %v2174 = vadd.f32 0.0, %v2173
    %v2175 = vpop.f32.mrb[0].mxu0
    %v2176 = vpop.f32.mrb[0].mxu0
    %v2177 = vadd.f32 0.0, %v2176
    %v2178 = vpop.f32.mrb[0].mxu0
    %2179 = vdwg.mxu0
    %v2180 = vadd.f32 %v1908, %v2118
    %v2181 = vadd.f32 %v1911, %v2121
    %v2182 = vadd.f32 %v1916, %v2126
    %v2183 = vadd.f32 %v1919, %v2129
    %v2184 = vadd.f32 %v1924, %v2134
    %v2185 = vadd.f32 %v1927, %v2137
    %v2186 = vadd.f32 %v1932, %v2142
    %v2187 = vadd.f32 %v1935, %v2145
    %v2188 = vadd.f32 %v1940, %v2150
    %v2189 = vadd.f32 %v1943, %v2153
    %v2190 = vadd.f32 %v1948, %v2158
    %v2191 = vadd.f32 %v1951, %v2161
    %v2192 = vadd.f32 %v1956, %v2166
    %v2193 = vadd.f32 %v1959, %v2169
    %v2194 = vadd.f32 %v1964, %v2174
    %v2195 = vadd.f32 %v1967, %v2177
    %v2196 = vrot.slane %v1575, 1
    %v2197 = vrot.slane %v1577, 2
    %v2198 = vor.u32 %v2196, %v2197
    %v2199 = vshrl.u32 %v1551, 16
    %v2201 = vrot.slane %v2199, 1
    %v2202 = vrot.slane %v1581, 2
    %v2203 = vor.u32 %v2201, %v2202
    %v2204 = vsel %vm714, %v2198, %v2203
    %v2205 = vrot.slane %v1585, 1
    %v2206 = vrot.slane %v1587, 2
    %v2207 = vor.u32 %v2205, %v2206
    %v2208 = vshrl.u32 %v1552, 16
    %v2210 = vrot.slane %v2208, 1
    %v2211 = vrot.slane %v1591, 2
    %v2212 = vor.u32 %v2210, %v2211
    %v2213 = vsel %vm714, %v2207, %v2212
    %v2214 = vrot.slane %v1595, 1
    %v2215 = vrot.slane %v1597, 2
    %v2216 = vor.u32 %v2214, %v2215
    %v2217 = vshrl.u32 %v1553, 16
    %v2219 = vrot.slane %v2217, 1
    %v2220 = vrot.slane %v1601, 2
    %v2221 = vor.u32 %v2219, %v2220
    %v2222 = vsel %vm714, %v2216, %v2221
    %v2223 = vrot.slane %v1605, 1
    %v2224 = vrot.slane %v1607, 2
    %v2225 = vor.u32 %v2223, %v2224
    %v2226 = vshrl.u32 %v1554, 16
    %v2228 = vrot.slane %v2226, 1
    %v2229 = vrot.slane %v1611, 2
    %v2230 = vor.u32 %v2228, %v2229
    %v2231 = vsel %vm714, %v2225, %v2230
    %v2232 = vrot.slane %v1615, 1
    %v2233 = vrot.slane %v1617, 2
    %v2234 = vor.u32 %v2232, %v2233
    %v2235 = vshrl.u32 %v1555, 16
    %v2237 = vrot.slane %v2235, 1
    %v2238 = vrot.slane %v1621, 2
    %v2239 = vor.u32 %v2237, %v2238
    %v2240 = vsel %vm714, %v2234, %v2239
    %v2241 = vrot.slane %v1625, 1
    %v2242 = vrot.slane %v1627, 2
    %v2243 = vor.u32 %v2241, %v2242
    %v2244 = vshrl.u32 %v1556, 16
    %v2246 = vrot.slane %v2244, 1
    %v2247 = vrot.slane %v1631, 2
    %v2248 = vor.u32 %v2246, %v2247
    %v2249 = vsel %vm714, %v2243, %v2248
    %v2250 = vrot.slane %v1635, 1
    %v2251 = vrot.slane %v1637, 2
    %v2252 = vor.u32 %v2250, %v2251
    %v2253 = vshrl.u32 %v1557, 16
    %v2255 = vrot.slane %v2253, 1
    %v2256 = vrot.slane %v1641, 2
    %v2257 = vor.u32 %v2255, %v2256
    %v2258 = vsel %vm714, %v2252, %v2257
    %v2259 = vrot.slane %v1645, 1
    %v2260 = vrot.slane %v1647, 2
    %v2261 = vor.u32 %v2259, %v2260
    %v2262 = vshrl.u32 %v1558, 16
    %v2264 = vrot.slane %v2262, 1
    %v2265 = vrot.slane %v1651, 2
    %v2266 = vor.u32 %v2264, %v2265
    %v2267 = vsel %vm714, %v2261, %v2266
    %s2276 = scalar_lea.vmem %s3, 192
    %v2277 = vld [vmem:[%s2276] sm:$0xf]
    %v2278 = vld [vmem:[%s2276 + $0x4] sm:$0xf]
    %v2279 = vld [vmem:[%s2276 + $0x8] sm:$0xf]
    %v2280 = vld [vmem:[%s2276 + $0xc] sm:$0xf]
    %v2281 = vld [vmem:[%s2276 + $0x10] sm:$0xf]
    %v2282 = vld [vmem:[%s2276 + $0x14] sm:$0xf]
    %v2283 = vld [vmem:[%s2276 + $0x18] sm:$0xf]
    %v2284 = vld [vmem:[%s2276 + $0x1c] sm:$0xf]
    %v2285 = vld [vmem:[%s2276 + $0x20] sm:$0xf]
    %v2286 = vld [vmem:[%s2276 + $0x24] sm:$0xf]
    %v2287 = vld [vmem:[%s2276 + $0x28] sm:$0xf]
    %v2288 = vld [vmem:[%s2276 + $0x2c] sm:$0xf]
    %v2289 = vld [vmem:[%s2276 + $0x30] sm:$0xf]
    %v2290 = vld [vmem:[%s2276 + $0x34] sm:$0xf]
    %v2291 = vld [vmem:[%s2276 + $0x38] sm:$0xf]
    %v2292 = vld [vmem:[%s2276 + $0x3c] sm:$0xf]
    %v2309 = vunpack.c.l.b16 %v2277
    %v2310 = vunpack.c.l.b16 %v2278
    %v2311 = vunpack.c.l.b16 %v2279
    %v2312 = vunpack.c.l.b16 %v2280
    %v2313 = vunpack.c.l.b16 %v2281
    %v2314 = vunpack.c.l.b16 %v2282
    %v2315 = vunpack.c.l.b16 %v2283
    %v2316 = vunpack.c.l.b16 %v2284
    %v2317 = vunpack.c.l.b16 %v2285
    %v2318 = vunpack.c.l.b16 %v2286
    %v2319 = vunpack.c.l.b16 %v2287
    %v2320 = vunpack.c.l.b16 %v2288
    %v2321 = vunpack.c.l.b16 %v2289
    %v2322 = vunpack.c.l.b16 %v2290
    %v2323 = vunpack.c.l.b16 %v2291
    %v2324 = vunpack.c.l.b16 %v2292
    %v2325 = vpack.c.b16 %v2310, %v2309
    %v2326 = vpack.c.b16 %v2312, %v2311
    %v2327 = vpack.c.b16 %v2314, %v2313
    %v2328 = vpack.c.b16 %v2316, %v2315
    %v2329 = vpack.c.b16 %v2318, %v2317
    %v2330 = vpack.c.b16 %v2320, %v2319
    %v2331 = vpack.c.b16 %v2322, %v2321
    %v2332 = vpack.c.b16 %v2324, %v2323
    %2341 = vmatprep.subr.bf16.mxu0 0
    %2342 = vmatpush1.bf16.msra.mxu0 %v2325
    %2343 = vmatprep.subr.bf16.mxu0 0
    %2344 = vmatpush1.bf16.msra.mxu0 %v2326
    %2345 = vmatprep.subr.bf16.mxu0 0
    %2346 = vmatpush1.bf16.msra.mxu0 %v2327
    %2347 = vmatprep.subr.bf16.mxu0 0
    %2348 = vmatpush1.bf16.msra.mxu0 %v2328
    %2349 = vmatprep.subr.bf16.mxu0 0
    %2350 = vmatpush1.bf16.msra.mxu0 %v2329
    %2351 = vmatprep.subr.bf16.mxu0 0
    %2352 = vmatpush1.bf16.msra.mxu0 %v2330
    %2353 = vmatprep.subr.bf16.mxu0 0
    %2354 = vmatpush1.bf16.msra.mxu0 %v2331
    %2355 = vmatprep.subr.bf16.mxu0 0
    %2356 = vmatpush1.bf16.msra.mxu0 %v2332
    %2357 = vmatprep.subr.bf16.mxu0 0
    %2358 = vmatpush1.bf16.msra.mxu0 0
    %2359 = vmatprep.subr.bf16.mxu0 0
    %2360 = vmatpush1.bf16.msra.mxu0 0
    %2361 = vmatprep.subr.bf16.mxu0 0
    %2362 = vmatpush1.bf16.msra.mxu0 0
    %2363 = vmatprep.subr.bf16.mxu0 0
    %2364 = vmatpush1.bf16.msra.mxu0 0
    %2365 = vmatprep.subr.bf16.mxu0 0
    %2366 = vmatpush1.bf16.msra.mxu0 0
    %2367 = vmatprep.subr.bf16.mxu0 0
    %2368 = vmatpush1.bf16.msra.mxu0 0
    %2369 = vmatprep.subr.bf16.mxu0 0
    %2370 = vmatpush1.bf16.msra.mxu0 0
    %2371 = vmatprep.subr.bf16.mxu0 0
    %2372 = vmatpush1.bf16.msra.mxu0 0
    %2373 = vmatprep.mubr.bf16.mxu0 0
    %2374 = vmatmul.mubr.bf16.gmra.mrb[0].mxu0 %v2204
    %v2375 = vpop.f32.mrb[0].mxu0
    %v2376 = vadd.f32 0.0, %v2375
    %v2377 = vpop.f32.mrb[0].mxu0
    %v2378 = vpop.f32.mrb[0].mxu0
    %v2379 = vadd.f32 0.0, %v2378
    %v2380 = vpop.f32.mrb[0].mxu0
    %2381 = vmatprep.mubr.bf16.mxu0 0
    %2382 = vmatmul.mubr.bf16.gmra.mrb[0].mxu0 %v2213
    %v2383 = vpop.f32.mrb[0].mxu0
    %v2384 = vadd.f32 0.0, %v2383
    %v2385 = vpop.f32.mrb[0].mxu0
    %v2386 = vpop.f32.mrb[0].mxu0
    %v2387 = vadd.f32 0.0, %v2386
    %v2388 = vpop.f32.mrb[0].mxu0
    %2389 = vmatprep.mubr.bf16.mxu0 0
    %2390 = vmatmul.mubr.bf16.gmra.mrb[0].mxu0 %v2222
    %v2391 = vpop.f32.mrb[0].mxu0
    %v2392 = vadd.f32 0.0, %v2391
    %v2393 = vpop.f32.mrb[0].mxu0
    %v2394 = vpop.f32.mrb[0].mxu0
    %v2395 = vadd.f32 0.0, %v2394
    %v2396 = vpop.f32.mrb[0].mxu0
    %2397 = vmatprep.mubr.bf16.mxu0 0
    %2398 = vmatmul.mubr.bf16.gmra.mrb[0].mxu0 %v2231
    %v2399 = vpop.f32.mrb[0].mxu0
    %v2400 = vadd.f32 0.0, %v2399
    %v2401 = vpop.f32.mrb[0].mxu0
    %v2402 = vpop.f32.mrb[0].mxu0
    %v2403 = vadd.f32 0.0, %v2402
    %v2404 = vpop.f32.mrb[0].mxu0
    %2405 = vmatprep.mubr.bf16.mxu0 0
    %2406 = vmatmul.mubr.bf16.gmra.mrb[0].mxu0 %v2240
    %v2407 = vpop.f32.mrb[0].mxu0
    %v2408 = vadd.f32 0.0, %v2407
    %v2409 = vpop.f32.mrb[0].mxu0
    %v2410 = vpop.f32.mrb[0].mxu0
    %v2411 = vadd.f32 0.0, %v2410
    %v2412 = vpop.f32.mrb[0].mxu0
    %2413 = vmatprep.mubr.bf16.mxu0 0
    %2414 = vmatmul.mubr.bf16.gmra.mrb[0].mxu0 %v2249
    %v2415 = vpop.f32.mrb[0].mxu0
    %v2416 = vadd.f32 0.0, %v2415
    %v2417 = vpop.f32.mrb[0].mxu0
    %v2418 = vpop.f32.mrb[0].mxu0
    %v2419 = vadd.f32 0.0, %v2418
    %v2420 = vpop.f32.mrb[0].mxu0
    %2421 = vmatprep.mubr.bf16.mxu0 0
    %2422 = vmatmul.mubr.bf16.gmra.mrb[0].mxu0 %v2258
    %v2423 = vpop.f32.mrb[0].mxu0
    %v2424 = vadd.f32 0.0, %v2423
    %v2425 = vpop.f32.mrb[0].mxu0
    %v2426 = vpop.f32.mrb[0].mxu0
    %v2427 = vadd.f32 0.0, %v2426
    %v2428 = vpop.f32.mrb[0].mxu0
    %2429 = vmatprep.mubr.bf16.mxu0 0
    %2430 = vmatmul.mubr.bf16.gmra.mrb[0].mxu0 %v2267
    %v2431 = vpop.f32.mrb[0].mxu0
    %v2432 = vadd.f32 0.0, %v2431
    %v2433 = vpop.f32.mrb[0].mxu0
    %v2434 = vpop.f32.mrb[0].mxu0
    %v2435 = vadd.f32 0.0, %v2434
    %v2436 = vpop.f32.mrb[0].mxu0
    %2437 = vdwg.mxu0
    %v2438 = vadd.f32 %v2180, %v2376
    %v2439 = vadd.f32 %v2181, %v2379
    %v2440 = vadd.f32 %v2182, %v2384
    %v2441 = vadd.f32 %v2183, %v2387
    %v2442 = vadd.f32 %v2184, %v2392
    %v2443 = vadd.f32 %v2185, %v2395
    %v2444 = vadd.f32 %v2186, %v2400
    %v2445 = vadd.f32 %v2187, %v2403
    %v2446 = vadd.f32 %v2188, %v2408
    %v2447 = vadd.f32 %v2189, %v2411
    %v2448 = vadd.f32 %v2190, %v2416
    %v2449 = vadd.f32 %v2191, %v2419
    %v2450 = vadd.f32 %v2192, %v2424
    %v2451 = vadd.f32 %v2193, %v2427
    %v2452 = vadd.f32 %v2194, %v2432
    %v2453 = vadd.f32 %v2195, %v2435
    %v2454 = vrot.slane %v1528, 2
    %v2455 = vrot.slane %v1551, 2
    %v2456 = vsel %vm929, %v2454, %v2455
    %v2457 = vrot.slane %v1531, 2
    %v2458 = vrot.slane %v1552, 2
    %v2459 = vsel %vm929, %v2457, %v2458
    %v2460 = vrot.slane %v1534, 2
    %v2461 = vrot.slane %v1553, 2
    %v2462 = vsel %vm929, %v2460, %v2461
    %v2463 = vrot.slane %v1537, 2
    %v2464 = vrot.slane %v1554, 2
    %v2465 = vsel %vm929, %v2463, %v2464
    %v2466 = vrot.slane %v1540, 2
    %v2467 = vrot.slane %v1555, 2
    %v2468 = vsel %vm929, %v2466, %v2467
    %v2469 = vrot.slane %v1543, 2
    %v2470 = vrot.slane %v1556, 2
    %v2471 = vsel %vm929, %v2469, %v2470
    %v2472 = vrot.slane %v1546, 2
    %v2473 = vrot.slane %v1557, 2
    %v2474 = vsel %vm929, %v2472, %v2473
    %v2475 = vrot.slane %v1549, 2
    %v2476 = vrot.slane %v1558, 2
    %v2477 = vsel %vm929, %v2475, %v2476
    %s2486 = scalar_lea.vmem %s3, 256
    %v2487 = vld [vmem:[%s2486] sm:$0xf]
    %v2488 = vld [vmem:[%s2486 + $0x4] sm:$0xf]
    %v2489 = vld [vmem:[%s2486 + $0x8] sm:$0xf]
    %v2490 = vld [vmem:[%s2486 + $0xc] sm:$0xf]
    %v2491 = vld [vmem:[%s2486 + $0x10] sm:$0xf]
    %v2492 = vld [vmem:[%s2486 + $0x14] sm:$0xf]
    %v2493 = vld [vmem:[%s2486 + $0x18] sm:$0xf]
    %v2494 = vld [vmem:[%s2486 + $0x1c] sm:$0xf]
    %v2495 = vld [vmem:[%s2486 + $0x20] sm:$0xf]
    %v2496 = vld [vmem:[%s2486 + $0x24] sm:$0xf]
    %v2497 = vld [vmem:[%s2486 + $0x28] sm:$0xf]
    %v2498 = vld [vmem:[%s2486 + $0x2c] sm:$0xf]
    %v2499 = vld [vmem:[%s2486 + $0x30] sm:$0xf]
    %v2500 = vld [vmem:[%s2486 + $0x34] sm:$0xf]
    %v2501 = vld [vmem:[%s2486 + $0x38] sm:$0xf]
    %v2502 = vld [vmem:[%s2486 + $0x3c] sm:$0xf]
    %v2519 = vunpack.c.l.b16 %v2487
    %v2520 = vunpack.c.l.b16 %v2488
    %v2521 = vunpack.c.l.b16 %v2489
    %v2522 = vunpack.c.l.b16 %v2490
    %v2523 = vunpack.c.l.b16 %v2491
    %v2524 = vunpack.c.l.b16 %v2492
    %v2525 = vunpack.c.l.b16 %v2493
    %v2526 = vunpack.c.l.b16 %v2494
    %v2527 = vunpack.c.l.b16 %v2495
    %v2528 = vunpack.c.l.b16 %v2496
    %v2529 = vunpack.c.l.b16 %v2497
    %v2530 = vunpack.c.l.b16 %v2498
    %v2531 = vunpack.c.l.b16 %v2499
    %v2532 = vunpack.c.l.b16 %v2500
    %v2533 = vunpack.c.l.b16 %v2501
    %v2534 = vunpack.c.l.b16 %v2502
    %v2535 = vpack.c.b16 %v2520, %v2519
    %v2536 = vpack.c.b16 %v2522, %v2521
    %v2537 = vpack.c.b16 %v2524, %v2523
    %v2538 = vpack.c.b16 %v2526, %v2525
    %v2539 = vpack.c.b16 %v2528, %v2527
    %v2540 = vpack.c.b16 %v2530, %v2529
    %v2541 = vpack.c.b16 %v2532, %v2531
    %v2542 = vpack.c.b16 %v2534, %v2533
    %2551 = vmatprep.subr.bf16.mxu0 0
    %2552 = vmatpush1.bf16.msra.mxu0 %v2535
    %2553 = vmatprep.subr.bf16.mxu0 0
    %2554 = vmatpush1.bf16.msra.mxu0 %v2536
    %2555 = vmatprep.subr.bf16.mxu0 0
    %2556 = vmatpush1.bf16.msra.mxu0 %v2537
    %2557 = vmatprep.subr.bf16.mxu0 0
    %2558 = vmatpush1.bf16.msra.mxu0 %v2538
    %2559 = vmatprep.subr.bf16.mxu0 0
    %2560 = vmatpush1.bf16.msra.mxu0 %v2539
    %2561 = vmatprep.subr.bf16.mxu0 0
    %2562 = vmatpush1.bf16.msra.mxu0 %v2540
    %2563 = vmatprep.subr.bf16.mxu0 0
    %2564 = vmatpush1.bf16.msra.mxu0 %v2541
    %2565 = vmatprep.subr.bf16.mxu0 0
    %2566 = vmatpush1.bf16.msra.mxu0 %v2542
    %2567 = vmatprep.subr.bf16.mxu0 0
    %2568 = vmatpush1.bf16.msra.mxu0 0
    %2569 = vmatprep.subr.bf16.mxu0 0
    %2570 = vmatpush1.bf16.msra.mxu0 0
    %2571 = vmatprep.subr.bf16.mxu0 0
    %2572 = vmatpush1.bf16.msra.mxu0 0
    %2573 = vmatprep.subr.bf16.mxu0 0
    %2574 = vmatpush1.bf16.msra.mxu0 0
    %2575 = vmatprep.subr.bf16.mxu0 0
    %2576 = vmatpush1.bf16.msra.mxu0 0
    %2577 = vmatprep.subr.bf16.mxu0 0
    %2578 = vmatpush1.bf16.msra.mxu0 0
    %2579 = vmatprep.subr.bf16.mxu0 0
    %2580 = vmatpush1.bf16.msra.mxu0 0
    %2581 = vmatprep.subr.bf16.mxu0 0
    %2582 = vmatpush1.bf16.msra.mxu0 0
    %2583 = vmatprep.mubr.bf16.mxu0 0
    %2584 = vmatmul.mubr.bf16.gmra.mrb[0].mxu0 %v2456
    %v2585 = vpop.f32.mrb[0].mxu0
    %v2586 = vadd.f32 0.0, %v2585
    %v2587 = vpop.f32.mrb[0].mxu0
    %v2588 = vpop.f32.mrb[0].mxu0
    %v2589 = vadd.f32 0.0, %v2588
    %v2590 = vpop.f32.mrb[0].mxu0
    %2591 = vmatprep.mubr.bf16.mxu0 0
    %2592 = vmatmul.mubr.bf16.gmra.mrb[0].mxu0 %v2459
    %v2593 = vpop.f32.mrb[0].mxu0
    %v2594 = vadd.f32 0.0, %v2593
    %v2595 = vpop.f32.mrb[0].mxu0
    %v2596 = vpop.f32.mrb[0].mxu0
    %v2597 = vadd.f32 0.0, %v2596
    %v2598 = vpop.f32.mrb[0].mxu0
    %2599 = vmatprep.mubr.bf16.mxu0 0
    %2600 = vmatmul.mubr.bf16.gmra.mrb[0].mxu0 %v2462
    %v2601 = vpop.f32.mrb[0].mxu0
    %v2602 = vadd.f32 0.0, %v2601
    %v2603 = vpop.f32.mrb[0].mxu0
    %v2604 = vpop.f32.mrb[0].mxu0
    %v2605 = vadd.f32 0.0, %v2604
    %v2606 = vpop.f32.mrb[0].mxu0
    %2607 = vmatprep.mubr.bf16.mxu0 0
    %2608 = vmatmul.mubr.bf16.gmra.mrb[0].mxu0 %v2465
    %v2609 = vpop.f32.mrb[0].mxu0
    %v2610 = vadd.f32 0.0, %v2609
    %v2611 = vpop.f32.mrb[0].mxu0
    %v2612 = vpop.f32.mrb[0].mxu0
    %v2613 = vadd.f32 0.0, %v2612
    %v2614 = vpop.f32.mrb[0].mxu0
    %2615 = vmatprep.mubr.bf16.mxu0 0
    %2616 = vmatmul.mubr.bf16.gmra.mrb[0].mxu0 %v2468
    %v2617 = vpop.f32.mrb[0].mxu0
    %v2618 = vadd.f32 0.0, %v2617
    %v2619 = vpop.f32.mrb[0].mxu0
    %v2620 = vpop.f32.mrb[0].mxu0
    %v2621 = vadd.f32 0.0, %v2620
    %v2622 = vpop.f32.mrb[0].mxu0
    %2623 = vmatprep.mubr.bf16.mxu0 0
    %2624 = vmatmul.mubr.bf16.gmra.mrb[0].mxu0 %v2471
    %v2625 = vpop.f32.mrb[0].mxu0
    %v2626 = vadd.f32 0.0, %v2625
    %v2627 = vpop.f32.mrb[0].mxu0
    %v2628 = vpop.f32.mrb[0].mxu0
    %v2629 = vadd.f32 0.0, %v2628
    %v2630 = vpop.f32.mrb[0].mxu0
    %2631 = vmatprep.mubr.bf16.mxu0 0
    %2632 = vmatmul.mubr.bf16.gmra.mrb[0].mxu0 %v2474
    %v2633 = vpop.f32.mrb[0].mxu0
    %v2634 = vadd.f32 0.0, %v2633
    %v2635 = vpop.f32.mrb[0].mxu0
    %v2636 = vpop.f32.mrb[0].mxu0
    %v2637 = vadd.f32 0.0, %v2636
    %v2638 = vpop.f32.mrb[0].mxu0
    %2639 = vmatprep.mubr.bf16.mxu0 0
    %2640 = vmatmul.mubr.bf16.gmra.mrb[0].mxu0 %v2477
    %v2641 = vpop.f32.mrb[0].mxu0
    %v2642 = vadd.f32 0.0, %v2641
    %v2643 = vpop.f32.mrb[0].mxu0
    %v2644 = vpop.f32.mrb[0].mxu0
    %v2645 = vadd.f32 0.0, %v2644
    %v2646 = vpop.f32.mrb[0].mxu0
    %2647 = vdwg.mxu0
    %v2648 = vadd.f32 %v2438, %v2586
    %v2649 = vadd.f32 %v2439, %v2589
    %v2650 = vadd.f32 %v2440, %v2594
    %v2651 = vadd.f32 %v2441, %v2597
    %v2652 = vadd.f32 %v2442, %v2602
    %v2653 = vadd.f32 %v2443, %v2605
    %v2654 = vadd.f32 %v2444, %v2610
    %v2655 = vadd.f32 %v2445, %v2613
    %v2656 = vadd.f32 %v2446, %v2618
    %v2657 = vadd.f32 %v2447, %v2621
    %v2658 = vadd.f32 %v2448, %v2626
    %v2659 = vadd.f32 %v2449, %v2629
    %v2660 = vadd.f32 %v2450, %v2634
    %v2661 = vadd.f32 %v2451, %v2637
    %v2662 = vadd.f32 %v2452, %v2642
    %v2663 = vadd.f32 %v2453, %v2645
    %v2664 = vld [vmem:[%s4] sm:$0x1]
    %v2666 = vlaneseq
    %v2667 = vshrl.u32 %v2666, 7
    %v2668 = vsub.s32 0, %v2667
    %v2669 = vrot.slane %v2664, %v2668
    %v2671 = vadd.f32 %v2648, %v2669
    %v2672 = vadd.f32 %v2649, %v2669
    %v2673 = vadd.f32 %v2650, %v2669
    %v2674 = vadd.f32 %v2651, %v2669
    %v2675 = vadd.f32 %v2652, %v2669
    %v2676 = vadd.f32 %v2653, %v2669
    %v2677 = vadd.f32 %v2654, %v2669
    %v2678 = vadd.f32 %v2655, %v2669
    %v2679 = vadd.f32 %v2656, %v2669
    %v2680 = vadd.f32 %v2657, %v2669
    %v2681 = vadd.f32 %v2658, %v2669
    %v2682 = vadd.f32 %v2659, %v2669
    %v2683 = vadd.f32 %v2660, %v2669
    %v2684 = vadd.f32 %v2661, %v2669
    %v2685 = vadd.f32 %v2662, %v2669
    %v2686 = vadd.f32 %v2663, %v2669
    %v2687 = vmax.f32 %v2671, 0.0
    %v2688 = vmax.f32 %v2672, 0.0
    %v2689 = vmax.f32 %v2673, 0.0
    %v2690 = vmax.f32 %v2674, 0.0
    %v2691 = vmax.f32 %v2675, 0.0
    %v2692 = vmax.f32 %v2676, 0.0
    %v2693 = vmax.f32 %v2677, 0.0
    %v2694 = vmax.f32 %v2678, 0.0
    %v2695 = vmax.f32 %v2679, 0.0
    %v2696 = vmax.f32 %v2680, 0.0
    %v2697 = vmax.f32 %v2681, 0.0
    %v2698 = vmax.f32 %v2682, 0.0
    %v2699 = vmax.f32 %v2683, 0.0
    %v2700 = vmax.f32 %v2684, 0.0
    %v2701 = vmax.f32 %v2685, 0.0
    %v2702 = vmax.f32 %v2686, 0.0
    %v2703 = vpack.c.bf16 %v2688, %v2687
    %v2704 = vpack.c.bf16 %v2690, %v2689
    %v2705 = vpack.c.bf16 %v2692, %v2691
    %v2706 = vpack.c.bf16 %v2694, %v2693
    %v2707 = vpack.c.bf16 %v2696, %v2695
    %v2708 = vpack.c.bf16 %v2698, %v2697
    %v2709 = vpack.c.bf16 %v2700, %v2699
    %v2710 = vpack.c.bf16 %v2702, %v2701
    %v2712 = vshrl.u32 %v2703, 16
    %v2714 = vrot.slane %v2712, 7
    %v2715 = vshll.u32 %v2703, 16
    %v2717 = vor.u32 %v2714, %v2715
    %v2719 = vshrl.u32 %v2704, 16
    %v2721 = vrot.slane %v2719, 7
    %v2722 = vshll.u32 %v2704, 16
    %v2724 = vor.u32 %v2721, %v2722
    %v2726 = vshrl.u32 %v2705, 16
    %v2728 = vrot.slane %v2726, 7
    %v2729 = vshll.u32 %v2705, 16
    %v2731 = vor.u32 %v2728, %v2729
    %v2733 = vshrl.u32 %v2706, 16
    %v2735 = vrot.slane %v2733, 7
    %v2736 = vshll.u32 %v2706, 16
    %v2738 = vor.u32 %v2735, %v2736
    %v2740 = vshrl.u32 %v2707, 16
    %v2742 = vrot.slane %v2740, 7
    %v2743 = vshll.u32 %v2707, 16
    %v2745 = vor.u32 %v2742, %v2743
    %v2747 = vshrl.u32 %v2708, 16
    %v2749 = vrot.slane %v2747, 7
    %v2750 = vshll.u32 %v2708, 16
    %v2752 = vor.u32 %v2749, %v2750
    %v2754 = vshrl.u32 %v2709, 16
    %v2756 = vrot.slane %v2754, 7
    %v2757 = vshll.u32 %v2709, 16
    %v2759 = vor.u32 %v2756, %v2757
    %v2761 = vshrl.u32 %v2710, 16
    %v2763 = vrot.slane %v2761, 7
    %v2764 = vshll.u32 %v2710, 16
    %v2766 = vor.u32 %v2763, %v2764
    %vm2783 = vcmask 1040384
    %vm2784 = vsmask.f32 256
    %vm2785 = vmand %vm2783, %vm2784
    %v2786 = vsel %vm2785, 0, %v2717
    %v2787 = vsel %vm2785, 0, %v2724
    %v2788 = vsel %vm2785, 0, %v2731
    %v2789 = vsel %vm2785, 0, %v2738
    %v2790 = vsel %vm2785, 0, %v2745
    %v2791 = vsel %vm2785, 0, %v2752
    %v2792 = vsel %vm2785, 0, %v2759
    %v2793 = vsel %vm2785, 0, %v2766
    %v2794 = vsel %vm2785, %v2714, 0
    %v2795 = vsel %vm2785, %v2721, 0
    %v2796 = vsel %vm2785, %v2728, 0
    %v2797 = vsel %vm2785, %v2735, 0
    %v2798 = vsel %vm2785, %v2742, 0
    %v2799 = vsel %vm2785, %v2749, 0
    %v2800 = vsel %vm2785, %v2756, 0
    %v2801 = vsel %vm2785, %v2763, 0
    %v2802 = vld [vmem:[%s5] sm:$0xf]
    %v2803 = vld [vmem:[%s5 + $0x4] sm:$0xf]
    %v2804 = vld [vmem:[%s5 + $0x8] sm:$0xf]
    %v2805 = vld [vmem:[%s5 + $0xc] sm:$0xf]
    %v2806 = vld [vmem:[%s5 + $0x10] sm:$0xf]
    %v2807 = vld [vmem:[%s5 + $0x14] sm:$0xf]
    %v2808 = vld [vmem:[%s5 + $0x18] sm:$0xf]
    %v2809 = vld [vmem:[%s5 + $0x1c] sm:$0xf]
    %v2810 = vld [vmem:[%s5 + $0x20] sm:$0xf]
    %v2811 = vld [vmem:[%s5 + $0x24] sm:$0xf]
    %v2812 = vld [vmem:[%s5 + $0x28] sm:$0xf]
    %v2813 = vld [vmem:[%s5 + $0x2c] sm:$0xf]
    %v2814 = vld [vmem:[%s5 + $0x30] sm:$0xf]
    %v2815 = vld [vmem:[%s5 + $0x34] sm:$0xf]
    %v2816 = vld [vmem:[%s5 + $0x38] sm:$0xf]
    %v2817 = vld [vmem:[%s5 + $0x3c] sm:$0xf]
    %v2819 = vshrl.u32 %v2786, 16
    %v2821 = vshll.u32 %v2786, 16
    %v2823 = vrot.slane %v2821, 1
    %v2824 = vor.u32 %v2819, %v2823
    %v2826 = vshll.u32 %v2794, 16
    %v2828 = vrot.slane %v2826, 1
    %v2829 = vsel %vm190, %v2824, %v2828
    %v2831 = vshrl.u32 %v2787, 16
    %v2833 = vshll.u32 %v2787, 16
    %v2835 = vrot.slane %v2833, 1
    %v2836 = vor.u32 %v2831, %v2835
    %v2838 = vshll.u32 %v2795, 16
    %v2840 = vrot.slane %v2838, 1
    %v2841 = vsel %vm190, %v2836, %v2840
    %v2843 = vshrl.u32 %v2788, 16
    %v2845 = vshll.u32 %v2788, 16
    %v2847 = vrot.slane %v2845, 1
    %v2848 = vor.u32 %v2843, %v2847
    %v2850 = vshll.u32 %v2796, 16
    %v2852 = vrot.slane %v2850, 1
    %v2853 = vsel %vm190, %v2848, %v2852
    %v2855 = vshrl.u32 %v2789, 16
    %v2857 = vshll.u32 %v2789, 16
    %v2859 = vrot.slane %v2857, 1
    %v2860 = vor.u32 %v2855, %v2859
    %v2862 = vshll.u32 %v2797, 16
    %v2864 = vrot.slane %v2862, 1
    %v2865 = vsel %vm190, %v2860, %v2864
    %v2867 = vshrl.u32 %v2790, 16
    %v2869 = vshll.u32 %v2790, 16
    %v2871 = vrot.slane %v2869, 1
    %v2872 = vor.u32 %v2867, %v2871
    %v2874 = vshll.u32 %v2798, 16
    %v2876 = vrot.slane %v2874, 1
    %v2877 = vsel %vm190, %v2872, %v2876
    %v2879 = vshrl.u32 %v2791, 16
    %v2881 = vshll.u32 %v2791, 16
    %v2883 = vrot.slane %v2881, 1
    %v2884 = vor.u32 %v2879, %v2883
    %v2886 = vshll.u32 %v2799, 16
    %v2888 = vrot.slane %v2886, 1
    %v2889 = vsel %vm190, %v2884, %v2888
    %v2891 = vshrl.u32 %v2792, 16
    %v2893 = vshll.u32 %v2792, 16
    %v2895 = vrot.slane %v2893, 1
    %v2896 = vor.u32 %v2891, %v2895
    %v2898 = vshll.u32 %v2800, 16
    %v2900 = vrot.slane %v2898, 1
    %v2901 = vsel %vm190, %v2896, %v2900
    %v2903 = vshrl.u32 %v2793, 16
    %v2905 = vshll.u32 %v2793, 16
    %v2907 = vrot.slane %v2905, 1
    %v2908 = vor.u32 %v2903, %v2907
    %v2910 = vshll.u32 %v2801, 16
    %v2912 = vrot.slane %v2910, 1
    %v2913 = vsel %vm190, %v2908, %v2912
    %s2922 = scalar_lea.vmem %s5, 64
    %v2923 = vld [vmem:[%s2922] sm:$0xf]
    %v2924 = vld [vmem:[%s2922 + $0x4] sm:$0xf]
    %v2925 = vld [vmem:[%s2922 + $0x8] sm:$0xf]
    %v2926 = vld [vmem:[%s2922 + $0xc] sm:$0xf]
    %v2927 = vld [vmem:[%s2922 + $0x10] sm:$0xf]
    %v2928 = vld [vmem:[%s2922 + $0x14] sm:$0xf]
    %v2929 = vld [vmem:[%s2922 + $0x18] sm:$0xf]
    %v2930 = vld [vmem:[%s2922 + $0x1c] sm:$0xf]
    %v2931 = vld [vmem:[%s2922 + $0x20] sm:$0xf]
    %v2932 = vld [vmem:[%s2922 + $0x24] sm:$0xf]
    %v2933 = vld [vmem:[%s2922 + $0x28] sm:$0xf]
    %v2934 = vld [vmem:[%s2922 + $0x2c] sm:$0xf]
    %v2935 = vld [vmem:[%s2922 + $0x30] sm:$0xf]
    %v2936 = vld [vmem:[%s2922 + $0x34] sm:$0xf]
    %v2937 = vld [vmem:[%s2922 + $0x38] sm:$0xf]
    %v2938 = vld [vmem:[%s2922 + $0x3c] sm:$0xf]
    %v2955 = vunpack.c.l.b16 %v2923
    %v2956 = vunpack.c.l.b16 %v2924
    %v2957 = vunpack.c.l.b16 %v2925
    %v2958 = vunpack.c.l.b16 %v2926
    %v2959 = vunpack.c.l.b16 %v2927
    %v2960 = vunpack.c.l.b16 %v2928
    %v2961 = vunpack.c.l.b16 %v2929
    %v2962 = vunpack.c.l.b16 %v2930
    %v2963 = vunpack.c.l.b16 %v2931
    %v2964 = vunpack.c.l.b16 %v2932
    %v2965 = vunpack.c.l.b16 %v2933
    %v2966 = vunpack.c.l.b16 %v2934
    %v2967 = vunpack.c.l.b16 %v2935
    %v2968 = vunpack.c.l.b16 %v2936
    %v2969 = vunpack.c.l.b16 %v2937
    %v2970 = vunpack.c.l.b16 %v2938
    %v2971 = vpack.c.b16 %v2956, %v2955
    %v2972 = vpack.c.b16 %v2958, %v2957
    %v2973 = vpack.c.b16 %v2960, %v2959
    %v2974 = vpack.c.b16 %v2962, %v2961
    %v2975 = vpack.c.b16 %v2964, %v2963
    %v2976 = vpack.c.b16 %v2966, %v2965
    %v2977 = vpack.c.b16 %v2968, %v2967
    %v2978 = vpack.c.b16 %v2970, %v2969
    %2987 = vmatprep.subr.bf16.mxu0 0
    %2988 = vmatpush1.bf16.msra.mxu0 %v2971
    %2989 = vmatprep.subr.bf16.mxu0 0
    %2990 = vmatpush1.bf16.msra.mxu0 %v2972
    %2991 = vmatprep.subr.bf16.mxu0 0
    %2992 = vmatpush1.bf16.msra.mxu0 %v2973
    %2993 = vmatprep.subr.bf16.mxu0 0
    %2994 = vmatpush1.bf16.msra.mxu0 %v2974
    %2995 = vmatprep.subr.bf16.mxu0 0
    %2996 = vmatpush1.bf16.msra.mxu0 %v2975
    %2997 = vmatprep.subr.bf16.mxu0 0
    %2998 = vmatpush1.bf16.msra.mxu0 %v2976
    %2999 = vmatprep.subr.bf16.mxu0 0
    %3000 = vmatpush1.bf16.msra.mxu0 %v2977
    %3001 = vmatprep.subr.bf16.mxu0 0
    %3002 = vmatpush1.bf16.msra.mxu0 %v2978
    %3003 = vmatprep.subr.bf16.mxu0 0
    %3004 = vmatpush1.bf16.msra.mxu0 0
    %3005 = vmatprep.subr.bf16.mxu0 0
    %3006 = vmatpush1.bf16.msra.mxu0 0
    %3007 = vmatprep.subr.bf16.mxu0 0
    %3008 = vmatpush1.bf16.msra.mxu0 0
    %3009 = vmatprep.subr.bf16.mxu0 0
    %3010 = vmatpush1.bf16.msra.mxu0 0
    %3011 = vmatprep.subr.bf16.mxu0 0
    %3012 = vmatpush1.bf16.msra.mxu0 0
    %3013 = vmatprep.subr.bf16.mxu0 0
    %3014 = vmatpush1.bf16.msra.mxu0 0
    %3015 = vmatprep.subr.bf16.mxu0 0
    %3016 = vmatpush1.bf16.msra.mxu0 0
    %3017 = vmatprep.subr.bf16.mxu0 0
    %3018 = vmatpush1.bf16.msra.mxu0 0
    %3019 = vmatprep.mubr.bf16.mxu0 0
    %3020 = vmatmul.mubr.bf16.gmra.mrb[0].mxu0 %v2829
    %v3021 = vpop.f32.mrb[0].mxu0
    %v3022 = vadd.f32 0.0, %v3021
    %v3023 = vpop.f32.mrb[0].mxu0
    %v3024 = vpop.f32.mrb[0].mxu0
    %v3025 = vadd.f32 0.0, %v3024
    %v3026 = vpop.f32.mrb[0].mxu0
    %3027 = vmatprep.mubr.bf16.mxu0 0
    %3028 = vmatmul.mubr.bf16.gmra.mrb[0].mxu0 %v2841
    %v3029 = vpop.f32.mrb[0].mxu0
    %v3030 = vadd.f32 0.0, %v3029
    %v3031 = vpop.f32.mrb[0].mxu0
    %v3032 = vpop.f32.mrb[0].mxu0
    %v3033 = vadd.f32 0.0, %v3032
    %v3034 = vpop.f32.mrb[0].mxu0
    %3035 = vmatprep.mubr.bf16.mxu0 0
    %3036 = vmatmul.mubr.bf16.gmra.mrb[0].mxu0 %v2853
    %v3037 = vpop.f32.mrb[0].mxu0
    %v3038 = vadd.f32 0.0, %v3037
    %v3039 = vpop.f32.mrb[0].mxu0
    %v3040 = vpop.f32.mrb[0].mxu0
    %v3041 = vadd.f32 0.0, %v3040
    %v3042 = vpop.f32.mrb[0].mxu0
    %3043 = vmatprep.mubr.bf16.mxu0 0
    %3044 = vmatmul.mubr.bf16.gmra.mrb[0].mxu0 %v2865
    %v3045 = vpop.f32.mrb[0].mxu0
    %v3046 = vadd.f32 0.0, %v3045
    %v3047 = vpop.f32.mrb[0].mxu0
    %v3048 = vpop.f32.mrb[0].mxu0
    %v3049 = vadd.f32 0.0, %v3048
    %v3050 = vpop.f32.mrb[0].mxu0
    %3051 = vmatprep.mubr.bf16.mxu0 0
    %3052 = vmatmul.mubr.bf16.gmra.mrb[0].mxu0 %v2877
    %v3053 = vpop.f32.mrb[0].mxu0
    %v3054 = vadd.f32 0.0, %v3053
    %v3055 = vpop.f32.mrb[0].mxu0
    %v3056 = vpop.f32.mrb[0].mxu0
    %v3057 = vadd.f32 0.0, %v3056
    %v3058 = vpop.f32.mrb[0].mxu0
    %3059 = vmatprep.mubr.bf16.mxu0 0
    %3060 = vmatmul.mubr.bf16.gmra.mrb[0].mxu0 %v2889
    %v3061 = vpop.f32.mrb[0].mxu0
    %v3062 = vadd.f32 0.0, %v3061
    %v3063 = vpop.f32.mrb[0].mxu0
    %v3064 = vpop.f32.mrb[0].mxu0
    %v3065 = vadd.f32 0.0, %v3064
    %v3066 = vpop.f32.mrb[0].mxu0
    %3067 = vmatprep.mubr.bf16.mxu0 0
    %3068 = vmatmul.mubr.bf16.gmra.mrb[0].mxu0 %v2901
    %v3069 = vpop.f32.mrb[0].mxu0
    %v3070 = vadd.f32 0.0, %v3069
    %v3071 = vpop.f32.mrb[0].mxu0
    %v3072 = vpop.f32.mrb[0].mxu0
    %v3073 = vadd.f32 0.0, %v3072
    %v3074 = vpop.f32.mrb[0].mxu0
    %3075 = vmatprep.mubr.bf16.mxu0 0
    %3076 = vmatmul.mubr.bf16.gmra.mrb[0].mxu0 %v2913
    %v3077 = vpop.f32.mrb[0].mxu0
    %v3078 = vadd.f32 0.0, %v3077
    %v3079 = vpop.f32.mrb[0].mxu0
    %v3080 = vpop.f32.mrb[0].mxu0
    %v3081 = vadd.f32 0.0, %v3080
    %v3082 = vpop.f32.mrb[0].mxu0
    %3083 = vdwg.mxu0
    %v3100 = vunpack.c.l.b16 %v2802
    %v3101 = vunpack.c.l.b16 %v2803
    %v3102 = vunpack.c.l.b16 %v2804
    %v3103 = vunpack.c.l.b16 %v2805
    %v3104 = vunpack.c.l.b16 %v2806
    %v3105 = vunpack.c.l.b16 %v2807
    %v3106 = vunpack.c.l.b16 %v2808
    %v3107 = vunpack.c.l.b16 %v2809
    %v3108 = vunpack.c.l.b16 %v2810
    %v3109 = vunpack.c.l.b16 %v2811
    %v3110 = vunpack.c.l.b16 %v2812
    %v3111 = vunpack.c.l.b16 %v2813
    %v3112 = vunpack.c.l.b16 %v2814
    %v3113 = vunpack.c.l.b16 %v2815
    %v3114 = vunpack.c.l.b16 %v2816
    %v3115 = vunpack.c.l.b16 %v2817
    %v3116 = vpack.c.b16 %v3101, %v3100
    %v3117 = vpack.c.b16 %v3103, %v3102
    %v3118 = vpack.c.b16 %v3105, %v3104
    %v3119 = vpack.c.b16 %v3107, %v3106
    %v3120 = vpack.c.b16 %v3109, %v3108
    %v3121 = vpack.c.b16 %v3111, %v3110
    %v3122 = vpack.c.b16 %v3113, %v3112
    %v3123 = vpack.c.b16 %v3115, %v3114
    %3132 = vmatprep.subr.bf16.mxu0 0
    %3133 = vmatpush1.bf16.msra.mxu0 %v3116
    %3134 = vmatprep.subr.bf16.mxu0 0
    %3135 = vmatpush1.bf16.msra.mxu0 %v3117
    %3136 = vmatprep.subr.bf16.mxu0 0
    %3137 = vmatpush1.bf16.msra.mxu0 %v3118
    %3138 = vmatprep.subr.bf16.mxu0 0
    %3139 = vmatpush1.bf16.msra.mxu0 %v3119
    %3140 = vmatprep.subr.bf16.mxu0 0
    %3141 = vmatpush1.bf16.msra.mxu0 %v3120
    %3142 = vmatprep.subr.bf16.mxu0 0
    %3143 = vmatpush1.bf16.msra.mxu0 %v3121
    %3144 = vmatprep.subr.bf16.mxu0 0
    %3145 = vmatpush1.bf16.msra.mxu0 %v3122
    %3146 = vmatprep.subr.bf16.mxu0 0
    %3147 = vmatpush1.bf16.msra.mxu0 %v3123
    %3148 = vmatprep.subr.bf16.mxu0 0
    %3149 = vmatpush1.bf16.msra.mxu0 0
    %3150 = vmatprep.subr.bf16.mxu0 0
    %3151 = vmatpush1.bf16.msra.mxu0 0
    %3152 = vmatprep.subr.bf16.mxu0 0
    %3153 = vmatpush1.bf16.msra.mxu0 0
    %3154 = vmatprep.subr.bf16.mxu0 0
    %3155 = vmatpush1.bf16.msra.mxu0 0
    %3156 = vmatprep.subr.bf16.mxu0 0
    %3157 = vmatpush1.bf16.msra.mxu0 0
    %3158 = vmatprep.subr.bf16.mxu0 0
    %3159 = vmatpush1.bf16.msra.mxu0 0
    %3160 = vmatprep.subr.bf16.mxu0 0
    %3161 = vmatpush1.bf16.msra.mxu0 0
    %3162 = vmatprep.subr.bf16.mxu0 0
    %3163 = vmatpush1.bf16.msra.mxu0 0
    %3164 = vmatprep.mubr.bf16.mxu0 0
    %3165 = vmatmul.mubr.bf16.gmra.mrb[0].mxu0 %v2786
    %v3166 = vpop.f32.mrb[0].mxu0
    %v3167 = vadd.f32 %v3022, %v3166
    %v3168 = vpop.f32.mrb[0].mxu0
    %v3169 = vpop.f32.mrb[0].mxu0
    %v3170 = vadd.f32 %v3025, %v3169
    %v3171 = vpop.f32.mrb[0].mxu0
    %3172 = vmatprep.mubr.bf16.mxu0 0
    %3173 = vmatmul.mubr.bf16.gmra.mrb[0].mxu0 %v2787
    %v3174 = vpop.f32.mrb[0].mxu0
    %v3175 = vadd.f32 %v3030, %v3174
    %v3176 = vpop.f32.mrb[0].mxu0
    %v3177 = vpop.f32.mrb[0].mxu0
    %v3178 = vadd.f32 %v3033, %v3177
    %v3179 = vpop.f32.mrb[0].mxu0
    %3180 = vmatprep.mubr.bf16.mxu0 0
    %3181 = vmatmul.mubr.bf16.gmra.mrb[0].mxu0 %v2788
    %v3182 = vpop.f32.mrb[0].mxu0
    %v3183 = vadd.f32 %v3038, %v3182
    %v3184 = vpop.f32.mrb[0].mxu0
    %v3185 = vpop.f32.mrb[0].mxu0
    %v3186 = vadd.f32 %v3041, %v3185
    %v3187 = vpop.f32.mrb[0].mxu0
    %3188 = vmatprep.mubr.bf16.mxu0 0
    %3189 = vmatmul.mubr.bf16.gmra.mrb[0].mxu0 %v2789
    %v3190 = vpop.f32.mrb[0].mxu0
    %v3191 = vadd.f32 %v3046, %v3190
    %v3192 = vpop.f32.mrb[0].mxu0
    %v3193 = vpop.f32.mrb[0].mxu0
    %v3194 = vadd.f32 %v3049, %v3193
    %v3195 = vpop.f32.mrb[0].mxu0
    %3196 = vmatprep.mubr.bf16.mxu0 0
    %3197 = vmatmul.mubr.bf16.gmra.mrb[0].mxu0 %v2790
    %v3198 = vpop.f32.mrb[0].mxu0
    %v3199 = vadd.f32 %v3054, %v3198
    %v3200 = vpop.f32.mrb[0].mxu0
    %v3201 = vpop.f32.mrb[0].mxu0
    %v3202 = vadd.f32 %v3057, %v3201
    %v3203 = vpop.f32.mrb[0].mxu0
    %3204 = vmatprep.mubr.bf16.mxu0 0
    %3205 = vmatmul.mubr.bf16.gmra.mrb[0].mxu0 %v2791
    %v3206 = vpop.f32.mrb[0].mxu0
    %v3207 = vadd.f32 %v3062, %v3206
    %v3208 = vpop.f32.mrb[0].mxu0
    %v3209 = vpop.f32.mrb[0].mxu0
    %v3210 = vadd.f32 %v3065, %v3209
    %v3211 = vpop.f32.mrb[0].mxu0
    %3212 = vmatprep.mubr.bf16.mxu0 0
    %3213 = vmatmul.mubr.bf16.gmra.mrb[0].mxu0 %v2792
    %v3214 = vpop.f32.mrb[0].mxu0
    %v3215 = vadd.f32 %v3070, %v3214
    %v3216 = vpop.f32.mrb[0].mxu0
    %v3217 = vpop.f32.mrb[0].mxu0
    %v3218 = vadd.f32 %v3073, %v3217
    %v3219 = vpop.f32.mrb[0].mxu0
    %3220 = vmatprep.mubr.bf16.mxu0 0
    %3221 = vmatmul.mubr.bf16.gmra.mrb[0].mxu0 %v2793
    %v3222 = vpop.f32.mrb[0].mxu0
    %v3223 = vadd.f32 %v3078, %v3222
    %v3224 = vpop.f32.mrb[0].mxu0
    %v3225 = vpop.f32.mrb[0].mxu0
    %v3226 = vadd.f32 %v3081, %v3225
    %v3227 = vpop.f32.mrb[0].mxu0
    %3228 = vdwg.mxu0
    %v3245 = vrot.slane %v2786, 1
    %v3246 = vrot.slane %v2794, 1
    %v3247 = vsel %vm547, %v3245, %v3246
    %v3248 = vrot.slane %v2787, 1
    %v3249 = vrot.slane %v2795, 1
    %v3250 = vsel %vm547, %v3248, %v3249
    %v3251 = vrot.slane %v2788, 1
    %v3252 = vrot.slane %v2796, 1
    %v3253 = vsel %vm547, %v3251, %v3252
    %v3254 = vrot.slane %v2789, 1
    %v3255 = vrot.slane %v2797, 1
    %v3256 = vsel %vm547, %v3254, %v3255
    %v3257 = vrot.slane %v2790, 1
    %v3258 = vrot.slane %v2798, 1
    %v3259 = vsel %vm547, %v3257, %v3258
    %v3260 = vrot.slane %v2791, 1
    %v3261 = vrot.slane %v2799, 1
    %v3262 = vsel %vm547, %v3260, %v3261
    %v3263 = vrot.slane %v2792, 1
    %v3264 = vrot.slane %v2800, 1
    %v3265 = vsel %vm547, %v3263, %v3264
    %v3266 = vrot.slane %v2793, 1
    %v3267 = vrot.slane %v2801, 1
    %v3268 = vsel %vm547, %v3266, %v3267
    %s3277 = scalar_lea.vmem %s5, 128
    %v3278 = vld [vmem:[%s3277] sm:$0xf]
    %v3279 = vld [vmem:[%s3277 + $0x4] sm:$0xf]
    %v3280 = vld [vmem:[%s3277 + $0x8] sm:$0xf]
    %v3281 = vld [vmem:[%s3277 + $0xc] sm:$0xf]
    %v3282 = vld [vmem:[%s3277 + $0x10] sm:$0xf]
    %v3283 = vld [vmem:[%s3277 + $0x14] sm:$0xf]
    %v3284 = vld [vmem:[%s3277 + $0x18] sm:$0xf]
    %v3285 = vld [vmem:[%s3277 + $0x1c] sm:$0xf]
    %v3286 = vld [vmem:[%s3277 + $0x20] sm:$0xf]
    %v3287 = vld [vmem:[%s3277 + $0x24] sm:$0xf]
    %v3288 = vld [vmem:[%s3277 + $0x28] sm:$0xf]
    %v3289 = vld [vmem:[%s3277 + $0x2c] sm:$0xf]
    %v3290 = vld [vmem:[%s3277 + $0x30] sm:$0xf]
    %v3291 = vld [vmem:[%s3277 + $0x34] sm:$0xf]
    %v3292 = vld [vmem:[%s3277 + $0x38] sm:$0xf]
    %v3293 = vld [vmem:[%s3277 + $0x3c] sm:$0xf]
    %v3310 = vunpack.c.l.b16 %v3278
    %v3311 = vunpack.c.l.b16 %v3279
    %v3312 = vunpack.c.l.b16 %v3280
    %v3313 = vunpack.c.l.b16 %v3281
    %v3314 = vunpack.c.l.b16 %v3282
    %v3315 = vunpack.c.l.b16 %v3283
    %v3316 = vunpack.c.l.b16 %v3284
    %v3317 = vunpack.c.l.b16 %v3285
    %v3318 = vunpack.c.l.b16 %v3286
    %v3319 = vunpack.c.l.b16 %v3287
    %v3320 = vunpack.c.l.b16 %v3288
    %v3321 = vunpack.c.l.b16 %v3289
    %v3322 = vunpack.c.l.b16 %v3290
    %v3323 = vunpack.c.l.b16 %v3291
    %v3324 = vunpack.c.l.b16 %v3292
    %v3325 = vunpack.c.l.b16 %v3293
    %v3326 = vpack.c.b16 %v3311, %v3310
    %v3327 = vpack.c.b16 %v3313, %v3312
    %v3328 = vpack.c.b16 %v3315, %v3314
    %v3329 = vpack.c.b16 %v3317, %v3316
    %v3330 = vpack.c.b16 %v3319, %v3318
    %v3331 = vpack.c.b16 %v3321, %v3320
    %v3332 = vpack.c.b16 %v3323, %v3322
    %v3333 = vpack.c.b16 %v3325, %v3324
    %3342 = vmatprep.subr.bf16.mxu0 0
    %3343 = vmatpush1.bf16.msra.mxu0 %v3326
    %3344 = vmatprep.subr.bf16.mxu0 0
    %3345 = vmatpush1.bf16.msra.mxu0 %v3327
    %3346 = vmatprep.subr.bf16.mxu0 0
    %3347 = vmatpush1.bf16.msra.mxu0 %v3328
    %3348 = vmatprep.subr.bf16.mxu0 0
    %3349 = vmatpush1.bf16.msra.mxu0 %v3329
    %3350 = vmatprep.subr.bf16.mxu0 0
    %3351 = vmatpush1.bf16.msra.mxu0 %v3330
    %3352 = vmatprep.subr.bf16.mxu0 0
    %3353 = vmatpush1.bf16.msra.mxu0 %v3331
    %3354 = vmatprep.subr.bf16.mxu0 0
    %3355 = vmatpush1.bf16.msra.mxu0 %v3332
    %3356 = vmatprep.subr.bf16.mxu0 0
    %3357 = vmatpush1.bf16.msra.mxu0 %v3333
    %3358 = vmatprep.subr.bf16.mxu0 0
    %3359 = vmatpush1.bf16.msra.mxu0 0
    %3360 = vmatprep.subr.bf16.mxu0 0
    %3361 = vmatpush1.bf16.msra.mxu0 0
    %3362 = vmatprep.subr.bf16.mxu0 0
    %3363 = vmatpush1.bf16.msra.mxu0 0
    %3364 = vmatprep.subr.bf16.mxu0 0
    %3365 = vmatpush1.bf16.msra.mxu0 0
    %3366 = vmatprep.subr.bf16.mxu0 0
    %3367 = vmatpush1.bf16.msra.mxu0 0
    %3368 = vmatprep.subr.bf16.mxu0 0
    %3369 = vmatpush1.bf16.msra.mxu0 0
    %3370 = vmatprep.subr.bf16.mxu0 0
    %3371 = vmatpush1.bf16.msra.mxu0 0
    %3372 = vmatprep.subr.bf16.mxu0 0
    %3373 = vmatpush1.bf16.msra.mxu0 0
    %3374 = vmatprep.mubr.bf16.mxu0 0
    %3375 = vmatmul.mubr.bf16.gmra.mrb[0].mxu0 %v3247
    %v3376 = vpop.f32.mrb[0].mxu0
    %v3377 = vadd.f32 0.0, %v3376
    %v3378 = vpop.f32.mrb[0].mxu0
    %v3379 = vpop.f32.mrb[0].mxu0
    %v3380 = vadd.f32 0.0, %v3379
    %v3381 = vpop.f32.mrb[0].mxu0
    %3382 = vmatprep.mubr.bf16.mxu0 0
    %3383 = vmatmul.mubr.bf16.gmra.mrb[0].mxu0 %v3250
    %v3384 = vpop.f32.mrb[0].mxu0
    %v3385 = vadd.f32 0.0, %v3384
    %v3386 = vpop.f32.mrb[0].mxu0
    %v3387 = vpop.f32.mrb[0].mxu0
    %v3388 = vadd.f32 0.0, %v3387
    %v3389 = vpop.f32.mrb[0].mxu0
    %3390 = vmatprep.mubr.bf16.mxu0 0
    %3391 = vmatmul.mubr.bf16.gmra.mrb[0].mxu0 %v3253
    %v3392 = vpop.f32.mrb[0].mxu0
    %v3393 = vadd.f32 0.0, %v3392
    %v3394 = vpop.f32.mrb[0].mxu0
    %v3395 = vpop.f32.mrb[0].mxu0
    %v3396 = vadd.f32 0.0, %v3395
    %v3397 = vpop.f32.mrb[0].mxu0
    %3398 = vmatprep.mubr.bf16.mxu0 0
    %3399 = vmatmul.mubr.bf16.gmra.mrb[0].mxu0 %v3256
    %v3400 = vpop.f32.mrb[0].mxu0
    %v3401 = vadd.f32 0.0, %v3400
    %v3402 = vpop.f32.mrb[0].mxu0
    %v3403 = vpop.f32.mrb[0].mxu0
    %v3404 = vadd.f32 0.0, %v3403
    %v3405 = vpop.f32.mrb[0].mxu0
    %3406 = vmatprep.mubr.bf16.mxu0 0
    %3407 = vmatmul.mubr.bf16.gmra.mrb[0].mxu0 %v3259
    %v3408 = vpop.f32.mrb[0].mxu0
    %v3409 = vadd.f32 0.0, %v3408
    %v3410 = vpop.f32.mrb[0].mxu0
    %v3411 = vpop.f32.mrb[0].mxu0
    %v3412 = vadd.f32 0.0, %v3411
    %v3413 = vpop.f32.mrb[0].mxu0
    %3414 = vmatprep.mubr.bf16.mxu0 0
    %3415 = vmatmul.mubr.bf16.gmra.mrb[0].mxu0 %v3262
    %v3416 = vpop.f32.mrb[0].mxu0
    %v3417 = vadd.f32 0.0, %v3416
    %v3418 = vpop.f32.mrb[0].mxu0
    %v3419 = vpop.f32.mrb[0].mxu0
    %v3420 = vadd.f32 0.0, %v3419
    %v3421 = vpop.f32.mrb[0].mxu0
    %3422 = vmatprep.mubr.bf16.mxu0 0
    %3423 = vmatmul.mubr.bf16.gmra.mrb[0].mxu0 %v3265
    %v3424 = vpop.f32.mrb[0].mxu0
    %v3425 = vadd.f32 0.0, %v3424
    %v3426 = vpop.f32.mrb[0].mxu0
    %v3427 = vpop.f32.mrb[0].mxu0
    %v3428 = vadd.f32 0.0, %v3427
    %v3429 = vpop.f32.mrb[0].mxu0
    %3430 = vmatprep.mubr.bf16.mxu0 0
    %3431 = vmatmul.mubr.bf16.gmra.mrb[0].mxu0 %v3268
    %v3432 = vpop.f32.mrb[0].mxu0
    %v3433 = vadd.f32 0.0, %v3432
    %v3434 = vpop.f32.mrb[0].mxu0
    %v3435 = vpop.f32.mrb[0].mxu0
    %v3436 = vadd.f32 0.0, %v3435
    %v3437 = vpop.f32.mrb[0].mxu0
    %3438 = vdwg.mxu0
    %v3439 = vadd.f32 %v3167, %v3377
    %v3440 = vadd.f32 %v3170, %v3380
    %v3441 = vadd.f32 %v3175, %v3385
    %v3442 = vadd.f32 %v3178, %v3388
    %v3443 = vadd.f32 %v3183, %v3393
    %v3444 = vadd.f32 %v3186, %v3396
    %v3445 = vadd.f32 %v3191, %v3401
    %v3446 = vadd.f32 %v3194, %v3404
    %v3447 = vadd.f32 %v3199, %v3409
    %v3448 = vadd.f32 %v3202, %v3412
    %v3449 = vadd.f32 %v3207, %v3417
    %v3450 = vadd.f32 %v3210, %v3420
    %v3451 = vadd.f32 %v3215, %v3425
    %v3452 = vadd.f32 %v3218, %v3428
    %v3453 = vadd.f32 %v3223, %v3433
    %v3454 = vadd.f32 %v3226, %v3436
    %v3455 = vld [vmem:[%s6] sm:$0x1]
    %v3457 = vlaneseq
    %v3458 = vshrl.u32 %v3457, 7
    %v3459 = vsub.s32 0, %v3458
    %v3460 = vrot.slane %v3455, %v3459
    %v3462 = vadd.f32 %v3439, %v3460
    %v3463 = vadd.f32 %v3440, %v3460
    %v3464 = vadd.f32 %v3441, %v3460
    %v3465 = vadd.f32 %v3442, %v3460
    %v3466 = vadd.f32 %v3443, %v3460
    %v3467 = vadd.f32 %v3444, %v3460
    %v3468 = vadd.f32 %v3445, %v3460
    %v3469 = vadd.f32 %v3446, %v3460
    %v3470 = vadd.f32 %v3447, %v3460
    %v3471 = vadd.f32 %v3448, %v3460
    %v3472 = vadd.f32 %v3449, %v3460
    %v3473 = vadd.f32 %v3450, %v3460
    %v3474 = vadd.f32 %v3451, %v3460
    %v3475 = vadd.f32 %v3452, %v3460
    %v3476 = vadd.f32 %v3453, %v3460
    %v3477 = vadd.f32 %v3454, %v3460
    %v3478 = vmax.f32 %v3462, 0.0
    %v3479 = vmax.f32 %v3463, 0.0
    %v3480 = vmax.f32 %v3464, 0.0
    %v3481 = vmax.f32 %v3465, 0.0
    %v3482 = vmax.f32 %v3466, 0.0
    %v3483 = vmax.f32 %v3467, 0.0
    %v3484 = vmax.f32 %v3468, 0.0
    %v3485 = vmax.f32 %v3469, 0.0
    %v3486 = vmax.f32 %v3470, 0.0
    %v3487 = vmax.f32 %v3471, 0.0
    %v3488 = vmax.f32 %v3472, 0.0
    %v3489 = vmax.f32 %v3473, 0.0
    %v3490 = vmax.f32 %v3474, 0.0
    %v3491 = vmax.f32 %v3475, 0.0
    %v3492 = vmax.f32 %v3476, 0.0
    %v3493 = vmax.f32 %v3477, 0.0
    %v3494 = vpack.c.bf16 %v3479, %v3478
    %v3495 = vpack.c.bf16 %v3481, %v3480
    %v3496 = vpack.c.bf16 %v3483, %v3482
    %v3497 = vpack.c.bf16 %v3485, %v3484
    %v3498 = vpack.c.bf16 %v3487, %v3486
    %v3499 = vpack.c.bf16 %v3489, %v3488
    %v3500 = vpack.c.bf16 %v3491, %v3490
    %v3501 = vpack.c.bf16 %v3493, %v3492
    %v3502 = vunpack.i.l.bf16 %v3494
    %v3503 = vunpack.i.h.bf16 %v3494
    %v3504 = vmax.f32 %v3502, %v3503
    %v3505 = vrot.slane %v3504, 4
    %v3506 = vmax.f32 %v3504, %v3505
    %v3507 = vrot.slane %v3506, 2
    %v3508 = vmax.f32 %v3506, %v3507
    %v3509 = vrot.slane %v3508, 1
    %v3510 = vmax.f32 %v3508, %v3509
    %v3511 = vpack.i.bf16 %v3510, %v3510
    %v3512 = vunpack.i.l.bf16 %v3495
    %v3513 = vunpack.i.h.bf16 %v3495
    %v3514 = vmax.f32 %v3512, %v3513
    %v3515 = vrot.slane %v3514, 4
    %v3516 = vmax.f32 %v3514, %v3515
    %v3517 = vrot.slane %v3516, 2
    %v3518 = vmax.f32 %v3516, %v3517
    %v3519 = vrot.slane %v3518, 1
    %v3520 = vmax.f32 %v3518, %v3519
    %v3521 = vpack.i.bf16 %v3520, %v3520
    %v3522 = vunpack.i.l.bf16 %v3496
    %v3523 = vunpack.i.h.bf16 %v3496
    %v3524 = vmax.f32 %v3522, %v3523
    %v3525 = vrot.slane %v3524, 4
    %v3526 = vmax.f32 %v3524, %v3525
    %v3527 = vrot.slane %v3526, 2
    %v3528 = vmax.f32 %v3526, %v3527
    %v3529 = vrot.slane %v3528, 1
    %v3530 = vmax.f32 %v3528, %v3529
    %v3531 = vpack.i.bf16 %v3530, %v3530
    %v3532 = vunpack.i.l.bf16 %v3497
    %v3533 = vunpack.i.h.bf16 %v3497
    %v3534 = vmax.f32 %v3532, %v3533
    %v3535 = vrot.slane %v3534, 4
    %v3536 = vmax.f32 %v3534, %v3535
    %v3537 = vrot.slane %v3536, 2
    %v3538 = vmax.f32 %v3536, %v3537
    %v3539 = vrot.slane %v3538, 1
    %v3540 = vmax.f32 %v3538, %v3539
    %v3541 = vpack.i.bf16 %v3540, %v3540
    %v3542 = vunpack.i.l.bf16 %v3498
    %v3543 = vunpack.i.h.bf16 %v3498
    %v3544 = vmax.f32 %v3542, %v3543
    %v3545 = vrot.slane %v3544, 4
    %v3546 = vmax.f32 %v3544, %v3545
    %v3547 = vrot.slane %v3546, 2
    %v3548 = vmax.f32 %v3546, %v3547
    %v3549 = vrot.slane %v3548, 1
    %v3550 = vmax.f32 %v3548, %v3549
    %v3551 = vpack.i.bf16 %v3550, %v3550
    %v3552 = vunpack.i.l.bf16 %v3499
    %v3553 = vunpack.i.h.bf16 %v3499
    %v3554 = vmax.f32 %v3552, %v3553
    %v3555 = vrot.slane %v3554, 4
    %v3556 = vmax.f32 %v3554, %v3555
    %v3557 = vrot.slane %v3556, 2
    %v3558 = vmax.f32 %v3556, %v3557
    %v3559 = vrot.slane %v3558, 1
    %v3560 = vmax.f32 %v3558, %v3559
    %v3561 = vpack.i.bf16 %v3560, %v3560
    %v3562 = vunpack.i.l.bf16 %v3500
    %v3563 = vunpack.i.h.bf16 %v3500
    %v3564 = vmax.f32 %v3562, %v3563
    %v3565 = vrot.slane %v3564, 4
    %v3566 = vmax.f32 %v3564, %v3565
    %v3567 = vrot.slane %v3566, 2
    %v3568 = vmax.f32 %v3566, %v3567
    %v3569 = vrot.slane %v3568, 1
    %v3570 = vmax.f32 %v3568, %v3569
    %v3571 = vpack.i.bf16 %v3570, %v3570
    %v3572 = vunpack.i.l.bf16 %v3501
    %v3573 = vunpack.i.h.bf16 %v3501
    %v3574 = vmax.f32 %v3572, %v3573
    %v3575 = vrot.slane %v3574, 4
    %v3576 = vmax.f32 %v3574, %v3575
    %v3577 = vrot.slane %v3576, 2
    %v3578 = vmax.f32 %v3576, %v3577
    %v3579 = vrot.slane %v3578, 1
    %v3580 = vmax.f32 %v3578, %v3579
    %v3581 = vpack.i.bf16 %v3580, %v3580
    %v3582 = vld [vmem:[%s7] sm:$0xf]
    %v3583 = vld [vmem:[%s7 + $0x4] sm:$0xf]
    %v3584 = vld [vmem:[%s7 + $0x8] sm:$0xf]
    %v3585 = vld [vmem:[%s7 + $0xc] sm:$0xf]
    %v3586 = vld [vmem:[%s7 + $0x10] sm:$0xf]
    %v3587 = vld [vmem:[%s7 + $0x14] sm:$0xf]
    %v3588 = vld [vmem:[%s7 + $0x18] sm:$0xf]
    %v3589 = vld [vmem:[%s7 + $0x1c] sm:$0xf]
    %v3590 = vld [vmem:[%s7 + $0x20] sm:$0xf]
    %v3591 = vld [vmem:[%s7 + $0x24] sm:$0xf]
    %v3592 = vld [vmem:[%s7 + $0x28] sm:$0xf]
    %v3593 = vld [vmem:[%s7 + $0x2c] sm:$0xf]
    %v3594 = vld [vmem:[%s7 + $0x30] sm:$0xf]
    %v3595 = vld [vmem:[%s7 + $0x34] sm:$0xf]
    %v3596 = vld [vmem:[%s7 + $0x38] sm:$0xf]
    %v3597 = vld [vmem:[%s7 + $0x3c] sm:$0xf]
    %v3598 = vld [vmem:[%s8] sm:$0x1]
    %v3600 = vlaneseq
    %v3601 = vshrl.u32 %v3600, 7
    %v3602 = vsub.s32 0, %v3601
    %v3603 = vrot.slane %v3598, %v3602
    %v3613 = vunpack.c.l.b16 %v3511
    %v3614 = vunpack.c.l.b16 %v3521
    %v3615 = vunpack.c.l.b16 %v3531
    %v3616 = vunpack.c.l.b16 %v3541
    %v3617 = vunpack.c.l.b16 %v3551
    %v3618 = vunpack.c.l.b16 %v3561
    %v3619 = vunpack.c.l.b16 %v3571
    %v3620 = vunpack.c.l.b16 %v3581
    %vm3621 = vcmask 1041409
    %v3622 = vsel %vm3621, %v3614, %v3613
    %vm3623 = vcmask 1042434
    %v3624 = vsel %vm3623, %v3615, %v3622
    %vm3625 = vcmask 1043459
    %v3626 = vsel %vm3625, %v3616, %v3624
    %vm3627 = vcmask 1044484
    %v3628 = vsel %vm3627, %v3617, %v3626
    %vm3629 = vcmask 1045509
    %v3630 = vsel %vm3629, %v3618, %v3628
    %vm3631 = vcmask 1046534
    %v3632 = vsel %vm3631, %v3619, %v3630
    %vm3633 = vcmask 1047559
    %v3634 = vsel %vm3633, %v3620, %v3632
    %v3635 = vpack.c.b16 %v3634, %v3634
    %v3653 = vunpack.c.l.b16 %v3582
    %v3654 = vunpack.c.l.b16 %v3583
    %v3655 = vunpack.c.l.b16 %v3584
    %v3656 = vunpack.c.l.b16 %v3585
    %v3657 = vunpack.c.l.b16 %v3586
    %v3658 = vunpack.c.l.b16 %v3587
    %v3659 = vunpack.c.l.b16 %v3588
    %v3660 = vunpack.c.l.b16 %v3589
    %v3661 = vunpack.c.l.b16 %v3590
    %v3662 = vunpack.c.l.b16 %v3591
    %v3663 = vunpack.c.l.b16 %v3592
    %v3664 = vunpack.c.l.b16 %v3593
    %v3665 = vunpack.c.l.b16 %v3594
    %v3666 = vunpack.c.l.b16 %v3595
    %v3667 = vunpack.c.l.b16 %v3596
    %v3668 = vunpack.c.l.b16 %v3597
    %v3669 = vpack.c.b16 %v3654, %v3653
    %v3670 = vpack.c.b16 %v3656, %v3655
    %v3671 = vpack.c.b16 %v3658, %v3657
    %v3672 = vpack.c.b16 %v3660, %v3659
    %v3673 = vpack.c.b16 %v3662, %v3661
    %v3674 = vpack.c.b16 %v3664, %v3663
    %v3675 = vpack.c.b16 %v3666, %v3665
    %v3676 = vpack.c.b16 %v3668, %v3667
    %3685 = vmatprep.subr.bf16.mxu0 0
    %3686 = vmatpush1.bf16.msra.mxu0 %v3669
    %3687 = vmatprep.subr.bf16.mxu0 0
    %3688 = vmatpush1.bf16.msra.mxu0 %v3670
    %3689 = vmatprep.subr.bf16.mxu0 0
    %3690 = vmatpush1.bf16.msra.mxu0 %v3671
    %3691 = vmatprep.subr.bf16.mxu0 0
    %3692 = vmatpush1.bf16.msra.mxu0 %v3672
    %3693 = vmatprep.subr.bf16.mxu0 0
    %3694 = vmatpush1.bf16.msra.mxu0 %v3673
    %3695 = vmatprep.subr.bf16.mxu0 0
    %3696 = vmatpush1.bf16.msra.mxu0 %v3674
    %3697 = vmatprep.subr.bf16.mxu0 0
    %3698 = vmatpush1.bf16.msra.mxu0 %v3675
    %3699 = vmatprep.subr.bf16.mxu0 0
    %3700 = vmatpush1.bf16.msra.mxu0 %v3676
    %3701 = vmatprep.subr.bf16.mxu0 0
    %3702 = vmatpush1.bf16.msra.mxu0 0
    %3703 = vmatprep.subr.bf16.mxu0 0
    %3704 = vmatpush1.bf16.msra.mxu0 0
    %3705 = vmatprep.subr.bf16.mxu0 0
    %3706 = vmatpush1.bf16.msra.mxu0 0
    %3707 = vmatprep.subr.bf16.mxu0 0
    %3708 = vmatpush1.bf16.msra.mxu0 0
    %3709 = vmatprep.subr.bf16.mxu0 0
    %3710 = vmatpush1.bf16.msra.mxu0 0
    %3711 = vmatprep.subr.bf16.mxu0 0
    %3712 = vmatpush1.bf16.msra.mxu0 0
    %3713 = vmatprep.subr.bf16.mxu0 0
    %3714 = vmatpush1.bf16.msra.mxu0 0
    %3715 = vmatprep.subr.bf16.mxu0 0
    %3716 = vmatpush1.bf16.msra.mxu0 0
    %3717 = vmatprep.mubr.bf16.mxu0 0
    %3718 = vmatmul.mubr.bf16.gmra.mrb[0].mxu0 %v3635
    %v3719 = vpop.f32.mrb[0].mxu0
    %v3720 = vadd.f32 %v3603, %v3719
    %v3721 = vpop.f32.mrb[0].mxu0
    %v3722 = vpop.f32.mrb[0].mxu0
    %v3723 = vpop.f32.mrb[0].mxu0
    %3724 = vdwg.mxu0
    %v3725 = vmax.f32 %v3720, 0.0
    %3726 = vst [vmem:[#allocation2] sm:$0xff] %v3725
    %v3727 = vpack.c.bf16 %v3725, %v3725
    %v3728 = vld [vmem:[%s9] sm:$0xf]
    %v3729 = vld [vmem:[%s9 + $0x4] sm:$0xf]
    %v3730 = vld [vmem:[%s9 + $0x8] sm:$0xf]
    %v3731 = vld [vmem:[%s9 + $0xc] sm:$0xf]
    %v3732 = vld [vmem:[%s9 + $0x10] sm:$0xf]
    %v3733 = vld [vmem:[%s9 + $0x14] sm:$0xf]
    %v3734 = vld [vmem:[%s9 + $0x18] sm:$0xf]
    %v3735 = vld [vmem:[%s9 + $0x1c] sm:$0xf]
    %v3736 = vld [vmem:[%s9 + $0x20] sm:$0xf]
    %v3737 = vld [vmem:[%s9 + $0x24] sm:$0xf]
    %v3738 = vld [vmem:[%s9 + $0x28] sm:$0xf]
    %v3739 = vld [vmem:[%s9 + $0x2c] sm:$0xf]
    %v3740 = vld [vmem:[%s9 + $0x30] sm:$0xf]
    %v3741 = vld [vmem:[%s9 + $0x34] sm:$0xf]
    %v3742 = vld [vmem:[%s9 + $0x38] sm:$0xf]
    %v3743 = vld [vmem:[%s9 + $0x3c] sm:$0xf]
    %v3744 = vld [vmem:[%s10] sm:$0x1]
    %v3746 = vlaneseq
    %v3747 = vshrl.u32 %v3746, 7
    %v3748 = vsub.s32 0, %v3747
    %v3749 = vrot.slane %v3744, %v3748
    %v3767 = vunpack.c.l.b16 %v3728
    %v3768 = vunpack.c.l.b16 %v3729
    %v3769 = vunpack.c.l.b16 %v3730
    %v3770 = vunpack.c.l.b16 %v3731
    %v3771 = vunpack.c.l.b16 %v3732
    %v3772 = vunpack.c.l.b16 %v3733
    %v3773 = vunpack.c.l.b16 %v3734
    %v3774 = vunpack.c.l.b16 %v3735
    %v3775 = vunpack.c.l.b16 %v3736
    %v3776 = vunpack.c.l.b16 %v3737
    %v3777 = vunpack.c.l.b16 %v3738
    %v3778 = vunpack.c.l.b16 %v3739
    %v3779 = vunpack.c.l.b16 %v3740
    %v3780 = vunpack.c.l.b16 %v3741
    %v3781 = vunpack.c.l.b16 %v3742
    %v3782 = vunpack.c.l.b16 %v3743
    %v3783 = vpack.c.b16 %v3768, %v3767
    %v3784 = vpack.c.b16 %v3770, %v3769
    %v3785 = vpack.c.b16 %v3772, %v3771
    %v3786 = vpack.c.b16 %v3774, %v3773
    %v3787 = vpack.c.b16 %v3776, %v3775
    %v3788 = vpack.c.b16 %v3778, %v3777
    %v3789 = vpack.c.b16 %v3780, %v3779
    %v3790 = vpack.c.b16 %v3782, %v3781
    %3799 = vmatprep.subr.bf16.mxu0 0
    %3800 = vmatpush1.bf16.msra.mxu0 %v3783
    %3801 = vmatprep.subr.bf16.mxu0 0
    %3802 = vmatpush1.bf16.msra.mxu0 %v3784
    %3803 = vmatprep.subr.bf16.mxu0 0
    %3804 = vmatpush1.bf16.msra.mxu0 %v3785
    %3805 = vmatprep.subr.bf16.mxu0 0
    %3806 = vmatpush1.bf16.msra.mxu0 %v3786
    %3807 = vmatprep.subr.bf16.mxu0 0
    %3808 = vmatpush1.bf16.msra.mxu0 %v3787
    %3809 = vmatprep.subr.bf16.mxu0 0
    %3810 = vmatpush1.bf16.msra.mxu0 %v3788
    %3811 = vmatprep.subr.bf16.mxu0 0
    %3812 = vmatpush1.bf16.msra.mxu0 %v3789
    %3813 = vmatprep.subr.bf16.mxu0 0
    %3814 = vmatpush1.bf16.msra.mxu0 %v3790
    %3815 = vmatprep.subr.bf16.mxu0 0
    %3816 = vmatpush1.bf16.msra.mxu0 0
    %3817 = vmatprep.subr.bf16.mxu0 0
    %3818 = vmatpush1.bf16.msra.mxu0 0
    %3819 = vmatprep.subr.bf16.mxu0 0
    %3820 = vmatpush1.bf16.msra.mxu0 0
    %3821 = vmatprep.subr.bf16.mxu0 0
    %3822 = vmatpush1.bf16.msra.mxu0 0
    %3823 = vmatprep.subr.bf16.mxu0 0
    %3824 = vmatpush1.bf16.msra.mxu0 0
    %3825 = vmatprep.subr.bf16.mxu0 0
    %3826 = vmatpush1.bf16.msra.mxu0 0
    %3827 = vmatprep.subr.bf16.mxu0 0
    %3828 = vmatpush1.bf16.msra.mxu0 0
    %3829 = vmatprep.subr.bf16.mxu0 0
    %3830 = vmatpush1.bf16.msra.mxu0 0
    %3831 = vmatprep.mubr.bf16.mxu0 0
    %3832 = vmatmul.mubr.bf16.gmra.mrb[0].mxu0 %v3727
    %v3833 = vpop.f32.mrb[0].mxu0
    %v3834 = vadd.f32 %v3749, %v3833
    %v3835 = vpop.f32.mrb[0].mxu0
    %v3836 = vpop.f32.mrb[0].mxu0
    %v3837 = vpop.f32.mrb[0].mxu0
    %3838 = vdwg.mxu0
    %3839 = vst [vmem:[%s12] sm:$0xff] %v3834
    // Predicated region
    $region46: #{fcn_forward.1} parent=1 // pred_check
      _
    $region47: #{fcn_forward.1} parent=1 // pred_check_branch
      %3841 = sbr.rel (0) target = $region49
    $region48: #{fcn_forward.1} parent=1 // pred_region
      %s3843 = ssub.s32 128, 128
      %3844 = vsyncadd [#allocation3], %s3843
      %s3846 = sshll.u32 [#allocation2], 4
      %s3847 = int_to_ptr.vmem [resolvable:$true] %s3846
      %3849 = dma.vmem_to_hbm [thread:$0]  %s3847, 128, %s11, [#allocation3]
    $region49: #{fcn_forward.1} parent=1 // pred_fallthru
      _
    // Predicated region
    $region50: #{fcn_forward.1} parent=1 // pred_check
      _
    $region51: #{fcn_forward.1} parent=1 // pred_check_branch
      %3851 = sbr.rel (0) target = $region53
    $region52: #{fcn_forward.1} parent=1 // pred_region
      _
    $region53: #{fcn_forward.1} parent=1 // pred_fallthru
      _
    // Predicated region
    $region54: #{fcn_forward.1} parent=1 // pred_check
      _
    $region55: #{fcn_forward.1} parent=1 // pred_check_branch
      %3853 = sbr.rel (0) target = $region57
    $region56: #{fcn_forward.1} parent=1 // pred_region
      %3854 = dma.done [#allocation3], 128
    $region57: #{fcn_forward.1} parent=1 // pred_fallthru
      _
    // Predicated region
    $region58: #{fcn_forward.1} parent=1 // pred_check
      _
    $region59: #{fcn_forward.1} parent=1 // pred_check_branch
      %3856 = sbr.rel (0) target = $region61
    $region60: #{fcn_forward.1} parent=1 // pred_region
      _
    $region61: #{fcn_forward.1} parent=1 // pred_fallthru
      _
    %3857 = vsyncpa [#allocation3], 1

</llo_original>
